<compile_context>
chip_gen: v7x
topology: tpu7x:2x2x1
jax: 0.10.0
libtpu: 0.0.40
codegen_flags: <defaults>
</compile_context>

<pallas_src>
import jax
import jax.numpy as jnp
import numpy as np
from jax import lax
from jax.experimental import pallas as pl
from jax.experimental.pallas import tpu as pltpu

LANE = 128


def _rup(x, m):
    return ((x + m - 1) // m) * m


# ----------------------------- Pallas kernel ---------------------------------

def rnn_kernel(emb_ref,                  # (T, Bt, E)   f32 time-major, E unpadded
               w1x_ref, w1h_ref, b1_ref,  # (E,4H1p), (H1p,4H1p), (1,4H1p)
               w2x_ref, w2h_ref, b2_ref,  # (H1p,4H2p), (H2p,4H2p), (1,4H2p)
               wfc1_ref, bfc1_ref,        # (T*H2p, Fp), (1, Fp)
               wcls_ref, bcls_ref,        # (Fp, Cp), (1, Cp)
               out_ref,                   # (Bt, Cp)  lane-dense output slab
               xp1_ref,                   # scratch VMEM (T*Bt, 4*H1p)
               flat_ref):                 # scratch VMEM (Bt, T*H2p)
    T, Bt, E = emb_ref.shape
    H1p = w1h_ref.shape[0]
    H2p = w2h_ref.shape[0]

    def sigmoid(x):
        # Exact identity sigmoid(x) = 0.5*tanh(0.5*x) + 0.5 -> single EUP tanh.
        return 0.5 * jnp.tanh(0.5 * x) + 0.5

    # ---- Hoisted LSTM1 input projection: one big-M matmul, bias folded in -------
    x_all = emb_ref[...].reshape(T * Bt, E)
    xp1_ref[...] = (jnp.dot(x_all, w1x_ref[...],
                            preferred_element_type=jnp.float32)
                    + jnp.broadcast_to(b1_ref[...], (T * Bt, 4 * H1p)))

    # Loop-invariant weight loads / bias broadcast hoisted out of the time loop.
    w1h = w1h_ref[...]
    w2x = w2x_ref[...]
    w2h = w2h_ref[...]
    b2 = jnp.broadcast_to(b2_ref[...], (Bt, 4 * H2p))

    h1 = jnp.zeros((Bt, H1p), jnp.float32)
    c1 = jnp.zeros((Bt, H1p), jnp.float32)
    h2 = jnp.zeros((Bt, H2p), jnp.float32)
    c2 = jnp.zeros((Bt, H2p), jnp.float32)

    # Fully unrolled time loop (T is small & static) — static, lane-aligned offsets;
    # the scheduler interleaves LSTM1(t+1) with LSTM2(t).
    for t in range(T):
        # -- LSTM1: only the recurrent matmul is on the sequential path. ----------
        g1 = xp1_ref[t * Bt:(t + 1) * Bt, :] + jnp.dot(
            h1, w1h, preferred_element_type=jnp.float32)
        i1 = sigmoid(g1[:, 0 * H1p:1 * H1p])
        f1 = sigmoid(g1[:, 1 * H1p:2 * H1p])
        gg1 = jnp.tanh(g1[:, 2 * H1p:3 * H1p])
        o1 = sigmoid(g1[:, 3 * H1p:4 * H1p])
        c1 = f1 * c1 + i1 * gg1
        h1 = o1 * jnp.tanh(c1)
        l1 = jnp.maximum(h1, 0.0)                          # relu_1

        # -- LSTM2: two accumulating dots (no concat copy). -----------------------
        g2 = (jnp.dot(l1, w2x, preferred_element_type=jnp.float32)
              + jnp.dot(h2, w2h, preferred_element_type=jnp.float32) + b2)
        i2 = sigmoid(g2[:, 0 * H2p:1 * H2p])
        f2 = sigmoid(g2[:, 1 * H2p:2 * H2p])
        gg2 = jnp.tanh(g2[:, 2 * H2p:3 * H2p])
        o2 = sigmoid(g2[:, 3 * H2p:4 * H2p])
        c2 = f2 * c2 + i2 * gg2
        h2 = o2 * jnp.tanh(c2)
        # relu_2 -> lane-aligned store into the flatten slab (frees the vreg file).
        flat_ref[:, t * H2p:(t + 1) * H2p] = jnp.maximum(h2, 0.0)

    # ---- fc1 as a single long-K matmul from the VMEM slab, then classifier ------
    fc = jnp.maximum(
        jnp.dot(flat_ref[...], wfc1_ref[...], preferred_element_type=jnp.float32)
        + bfc1_ref[...], 0.0)                              # relu_3, (Bt, Fp)
    out_ref[...] = (jnp.dot(fc, wcls_ref[...], preferred_element_type=jnp.float32)
                    + bcls_ref[...])                       # (Bt, Cp) lane-dense store


# ------------------------------ wrapper ---------------------------------------

def _pick_batch_tile(B):
    """Batch tile heuristic: big tiles fill the MXU (v6e/v7x), >=2 tiles feed
    both v7x TensorCores for mid-size B, 128 is already a full pass on v5e."""
    B8 = _rup(B, 8)
    if B8 >= 512:
        return 256
    if B8 >= 256:
        return 128
    if B8 >= 16:
        return _rup(B8 // 2, 8)   # at least two tiles
    return B8


@jax.jit
def rnn_forward(x_ids, kp):
    """is_train=True forward.  x_ids: (B, T) int32 -> (B, Cp) f32 (caller slices C)."""
    emb_tab = kp["emb_tab"]                                # (V+1, E), E unpadded
    B, T = x_ids.shape
    E = emb_tab.shape[1]
    H1p = kp["w1h"].shape[0]
    H2p = kp["w2h"].shape[0]
    Cp = kp["bcls"].shape[1]

    # Time-major gather: transpose the cheap int32 ids, not the f32 activations.
    emb_tm = emb_tab[x_ids.T]                              # (T, B, E) glue gather

    Bt = _pick_batch_tile(B)
    B_pad = _rup(B, Bt)
    emb_tm = jnp.pad(emb_tm, ((0, 0), (0, B_pad - B), (0, 0)))

    full = lambda a: pl.BlockSpec(a.shape, lambda b: (0,) * a.ndim)

    grid_spec = pltpu.PrefetchScalarGridSpec(
        num_scalar_prefetch=0,
        grid=(B_pad // Bt,),
        in_specs=[
            pl.BlockSpec((T, Bt, E), lambda b: (0, b, 0)),     # activations per tile
            full(kp["w1x"]), full(kp["w1h"]), full(kp["b1"]),
            full(kp["w2x"]), full(kp["w2h"]), full(kp["b2"]),
            full(kp["wfc1"]), full(kp["bfc1"]),
            full(kp["wcls"]), full(kp["bcls"]),
        ],
        out_specs=pl.BlockSpec((Bt, Cp), lambda b: (b, 0)),
        scratch_shapes=[
            pltpu.VMEM((T * Bt, 4 * H1p), jnp.float32),        # hoisted x-projection
            pltpu.VMEM((Bt, T * H2p), jnp.float32),            # relu(LSTM2) slab
        ],
    )

    # Explicit VMEM budget (default scoped limit is 16/32 MiB; cap <= v7x physical).
    elt = 4
    w_bytes = sum(int(np.prod(kp[k].shape)) * elt
                  for k in ("w1x", "w1h", "b1", "w2x", "w2h", "b2",
                            "wfc1", "bfc1", "wcls", "bcls"))
    act_bytes = T * Bt * E * elt
    out_bytes = Bt * Cp * elt
    scr_bytes = (T * Bt * 4 * H1p + Bt * T * H2p) * elt
    need = 2 * w_bytes + 2 * act_bytes + 2 * out_bytes + scr_bytes
    vmem_limit = int(min(max(need * 5 // 4 + (2 << 20), 16 << 20), 64 << 20))

    out = pl.pallas_call(
        rnn_kernel,
        out_shape=jax.ShapeDtypeStruct((B_pad, Cp), jnp.float32),
        grid_spec=grid_spec,
        # Batch tiles are independent -> parallel (splits across v7x's 2 TCs).
        compiler_params=pltpu.CompilerParams(
            dimension_semantics=("parallel",),
            vmem_limit_bytes=vmem_limit),
    )(emb_tm,
      kp["w1x"], kp["w1h"], kp["b1"],
      kp["w2x"], kp["w2h"], kp["b2"],
      kp["wfc1"], kp["bfc1"], kp["wcls"], kp["bcls"])
    return out[:B]                                         # drop batch padding


# ------------------------ offline parameter preparation ------------------------

def prepare_params(raw, T):
    """Pad hidden/fc dims to lane multiples (E stays unpadded), split input vs
    recurrent gate weights, transpose to (K, 4*Hp) layout."""
    E = raw["embedding"].shape[1]
    H1 = raw["w_hh1"].shape[1]
    H2 = raw["w_hh2"].shape[1]
    F, fc_in = raw["w_fc1"].shape
    C = raw["w_cls"].shape[0]
    assert fc_in == T * H2

    H1p, H2p = _rup(H1, LANE), _rup(H2, LANE)
    Fp, Cp = _rup(F, LANE), _rup(C, LANE)

    def gate_pack(w, hid, hid_p, in_dim, in_p):
        # (4*hid, in_dim) PyTorch layout -> zero-padded, gate-blocked (in_p, 4*hid_p).
        a = w.reshape(4, hid, in_dim)
        a = jnp.pad(a, ((0, 0), (0, hid_p - hid), (0, in_p - in_dim)))
        return a.reshape(4 * hid_p, in_p).T

    def gate_bias(b_ih, b_hh, hid, hid_p):
        b = (b_ih + b_hh).reshape(4, hid)
        b = jnp.pad(b, ((0, 0), (0, hid_p - hid)))
        return b.reshape(1, 4 * hid_p)

    w1x = gate_pack(raw["w_ih1"], H1, H1p, E, E)           # (E, 4*H1p), E unpadded
    w1h = gate_pack(raw["w_hh1"], H1, H1p, H1, H1p)        # (H1p, 4*H1p)
    b1 = gate_bias(raw["b_ih1"], raw["b_hh1"], H1, H1p)

    w2x = gate_pack(raw["w_ih2"], H2, H2p, H1, H1p)        # (H1p, 4*H2p)
    w2h = gate_pack(raw["w_hh2"], H2, H2p, H2, H2p)        # (H2p, 4*H2p)
    b2 = gate_bias(raw["b_ih2"], raw["b_hh2"], H2, H2p)

    # fc1 (F, T*H2): time-major flatten, re-padded per timestep to H2p columns.
    wf = raw["w_fc1"].reshape(F, T, H2)
    wf = jnp.pad(wf, ((0, Fp - F), (0, 0), (0, H2p - H2)))
    wfc1 = wf.reshape(Fp, T * H2p).T                       # (T*H2p, Fp)
    bfc1 = jnp.pad(raw["b_fc1"], (0, Fp - F))[None, :]

    wcls = jnp.pad(raw["w_cls"], ((0, Cp - C), (0, Fp - F))).T  # (Fp, Cp)
    bcls = jnp.pad(raw["b_cls"], (0, Cp - C))[None, :]

    return {"emb_tab": raw["embedding"],
            "w1x": w1x, "w1h": w1h, "b1": b1,
            "w2x": w2x, "w2h": w2h, "b2": b2,
            "wfc1": wfc1, "bfc1": bfc1,
            "wcls": wcls, "bcls": bcls}


# --------------------------- pure-JAX reference --------------------------------

def _lstm_layer_ref(x, w_ih, w_hh, b_ih, b_hh):
    H = w_hh.shape[1]

    def step(carry, x_t):
        h, c = carry
        g = w_ih @ x_t + w_hh @ h + b_ih + b_hh
        i = jax.nn.sigmoid(g[0 * H:1 * H])
        f = jax.nn.sigmoid(g[1 * H:2 * H])
        gg = jnp.tanh(g[2 * H:3 * H])
        o = jax.nn.sigmoid(g[3 * H:4 * H])
        c = f * c + i * gg
        h = o * jnp.tanh(c)
        return (h, c), h

    (_, _), hs = lax.scan(step, (jnp.zeros(H), jnp.zeros(H)), x)
    return hs


def rnn_forward_ref(x_ids, raw):
    def one(ids):
        t = raw["embedding"][ids]                                       # (T, E)
        l1 = jnp.maximum(_lstm_layer_ref(t, raw["w_ih1"], raw["w_hh1"],
                                         raw["b_ih1"], raw["b_hh1"]), 0.0)
        l2 = jnp.maximum(_lstm_layer_ref(l1, raw["w_ih2"], raw["w_hh2"],
                                         raw["b_ih2"], raw["b_hh2"]), 0.0)
        flat = l2.reshape(-1)                                           # (T*H2,)
        fc = jnp.maximum(raw["w_fc1"] @ flat + raw["b_fc1"], 0.0)       # (F,)
        return raw["w_cls"] @ fc + raw["b_cls"]                         # (C,)
    return jnp.stack([one(x_ids[b]) for b in range(x_ids.shape[0])])


# --------------------------------- main ----------------------------------------

if __name__ == "__main__":
    # Small shapes consistent with the module's forward:
    B, T = 2, 8                 # batch, sequence length
    V = 16                      # len(vocabulary); table has V+1 rows, row 0 = pad
    E = 32                      # embedding_dim / in_dim
    H1, H2 = 32, 32             # hidden1_dim, hidden2_dim
    F = 100                     # fc1 out_features (as in module)
    C = 4                       # n_class
    FC_IN = T * H2              # analog of 8750 = seq * hidden2

    key = jax.random.PRNGKey(0)
    ks = jax.random.split(key, 16)
    sc = 0.1

    embedding = jax.random.normal(ks[0], (V + 1, E), jnp.float32)
    embedding = embedding.at[0].set(0.0)                    # embeddings[0] = 0

    raw = {
        "embedding": embedding,
        # LSTM1 / LSTM2 params in PyTorch layout (4H, in).
        "w_ih1": sc * jax.random.normal(ks[1], (4 * H1, E), jnp.float32),
        "w_hh1": sc * jax.random.normal(ks[2], (4 * H1, H1), jnp.float32),
        "b_ih1": sc * jax.random.normal(ks[3], (4 * H1,), jnp.float32),
        "b_hh1": sc * jax.random.normal(ks[4], (4 * H1,), jnp.float32),
        "w_ih2": sc * jax.random.normal(ks[5], (4 * H2, H1), jnp.float32),
        "w_hh2": sc * jax.random.normal(ks[6], (4 * H2, H2), jnp.float32),
        "b_ih2": sc * jax.random.normal(ks[7], (4 * H2,), jnp.float32),
        "b_hh2": sc * jax.random.normal(ks[8], (4 * H2,), jnp.float32),
        # fc1 / classifier (PyTorch layout (out, in)).
        "w_fc1": sc * jax.random.normal(ks[9], (F, FC_IN), jnp.float32),
        "b_fc1": sc * jax.random.normal(ks[10], (F,), jnp.float32),
        "w_cls": sc * jax.random.normal(ks[11], (C, F), jnp.float32),
        "b_cls": sc * jax.random.normal(ks[12], (C,), jnp.float32),
    }

    kp = prepare_params(raw, T)
    x_ids = jax.random.randint(ks[13], (B, T), 0, V + 1, dtype=jnp.int32)

    out = rnn_forward(x_ids, kp)[:, :C]
    out = jax.block_until_ready(out)

    ref = rnn_forward_ref(x_ids, raw)
    np.testing.assert_allclose(np.asarray(out), np.asarray(ref),
                               rtol=1e-2, atol=1e-3)

    print("KERNEL_OK")
</pallas_src>

<mosaic_0001>
module attributes {stable_mosaic.version = 11 : i64} {
  func.func @rnn_kernel(%arg0: i32, %arg1: memref<8x8x32xf32, #tpu.memory_space<vmem>>, %arg2: memref<32x512xf32, #tpu.memory_space<vmem>>, %arg3: memref<128x512xf32, #tpu.memory_space<vmem>>, %arg4: memref<1x512xf32, #tpu.memory_space<vmem>>, %arg5: memref<128x512xf32, #tpu.memory_space<vmem>>, %arg6: memref<128x512xf32, #tpu.memory_space<vmem>>, %arg7: memref<1x512xf32, #tpu.memory_space<vmem>>, %arg8: memref<1024x128xf32, #tpu.memory_space<vmem>>, %arg9: memref<1x128xf32, #tpu.memory_space<vmem>>, %arg10: memref<128x128xf32, #tpu.memory_space<vmem>>, %arg11: memref<1x128xf32, #tpu.memory_space<vmem>>, %arg12: memref<8x128xf32, #tpu.memory_space<vmem>>, %arg13: memref<64x512xf32, #tpu.memory_space<vmem>>, %arg14: memref<8x1024xf32, #tpu.memory_space<vmem>>) attributes {dimension_semantics = [#tpu.dimension_semantics<parallel>], iteration_bounds = array<i64: 1>, scalar_prefetch = 0 : i64, scratch_operands = 2 : i64, tpu.core_type = #tpu.core_type<tc>, window_params = [{transform_indices = @transform_0, window_bounds = array<i64: 8, 8, 32>}, {pipeline_mode = #tpu.pipeline_mode<synchronous>, transform_indices = @transform_1, window_bounds = array<i64: 32, 512>}, {pipeline_mode = #tpu.pipeline_mode<synchronous>, transform_indices = @transform_2, window_bounds = array<i64: 128, 512>}, {pipeline_mode = #tpu.pipeline_mode<synchronous>, transform_indices = @transform_3, window_bounds = array<i64: 1, 512>}, {pipeline_mode = #tpu.pipeline_mode<synchronous>, transform_indices = @transform_4, window_bounds = array<i64: 128, 512>}, {pipeline_mode = #tpu.pipeline_mode<synchronous>, transform_indices = @transform_5, window_bounds = array<i64: 128, 512>}, {pipeline_mode = #tpu.pipeline_mode<synchronous>, transform_indices = @transform_6, window_bounds = array<i64: 1, 512>}, {pipeline_mode = #tpu.pipeline_mode<synchronous>, transform_indices = @transform_7, window_bounds = array<i64: 1024, 128>}, {pipeline_mode = #tpu.pipeline_mode<synchronous>, transform_indices = @transform_8, window_bounds = array<i64: 1, 128>}, {pipeline_mode = #tpu.pipeline_mode<synchronous>, transform_indices = @transform_9, window_bounds = array<i64: 128, 128>}, {pipeline_mode = #tpu.pipeline_mode<synchronous>, transform_indices = @transform_10, window_bounds = array<i64: 1, 128>}, {transform_indices = @transform_11, window_bounds = array<i64: 8, 128>}]} {
    %c0 = arith.constant 0 : index
    %c0_0 = arith.constant 0 : index
    %c0_1 = arith.constant 0 : index
    %0 = vector.load %arg1[%c0, %c0_0, %c0_1] : memref<8x8x32xf32, #tpu.memory_space<vmem>>, vector<8x8x32xf32>
    %1 = vector.shape_cast %0 : vector<8x8x32xf32> to vector<64x32xf32>
    %c0_2 = arith.constant 0 : index
    %c0_3 = arith.constant 0 : index
    %2 = vector.load %arg2[%c0_2, %c0_3] : memref<32x512xf32, #tpu.memory_space<vmem>>, vector<32x512xf32>
    %cst = arith.constant dense<0.000000e+00> : vector<64x512xf32>
    %3 = tpu.matmul %1, %2, %cst {dimension_numbers = #tpu.dot_dimension_numbers<[1], [0], [0], [1], [0, 0, 1, 1], [], []>} : vector<64x32xf32>, vector<32x512xf32>, vector<64x512xf32> -> vector<64x512xf32>
    %c0_4 = arith.constant 0 : index
    %c0_5 = arith.constant 0 : index
    %4 = vector.load %arg4[%c0_4, %c0_5] : memref<1x512xf32, #tpu.memory_space<vmem>>, vector<1x512xf32>
    %5 = vector.shape_cast %4 : vector<1x512xf32> to vector<1x512xf32>
    %6 = vector.broadcast %5 : vector<1x512xf32> to vector<64x512xf32>
    %7 = arith.addf %3, %6 : vector<64x512xf32>
    %c0_6 = arith.constant 0 : index
    %c0_7 = arith.constant 0 : index
    %8 = vector.load %arg13[%c0_6, %c0_7] : memref<64x512xf32, #tpu.memory_space<vmem>>, vector<64x512xf32>
    tpu.vector_store %arg13[%c0_6, %c0_7], %7 {strides = array<i32>} : memref<64x512xf32, #tpu.memory_space<vmem>>, vector<64x512xf32>,
    %c0_8 = arith.constant 0 : index
    %c0_9 = arith.constant 0 : index
    %9 = vector.load %arg3[%c0_8, %c0_9] : memref<128x512xf32, #tpu.memory_space<vmem>>, vector<128x512xf32>
    %c0_10 = arith.constant 0 : index
    %c0_11 = arith.constant 0 : index
    %10 = vector.load %arg5[%c0_10, %c0_11] : memref<128x512xf32, #tpu.memory_space<vmem>>, vector<128x512xf32>
    %c0_12 = arith.constant 0 : index
    %c0_13 = arith.constant 0 : index
    %11 = vector.load %arg6[%c0_12, %c0_13] : memref<128x512xf32, #tpu.memory_space<vmem>>, vector<128x512xf32>
    %c0_14 = arith.constant 0 : index
    %c0_15 = arith.constant 0 : index
    %12 = vector.load %arg7[%c0_14, %c0_15] : memref<1x512xf32, #tpu.memory_space<vmem>>, vector<1x512xf32>
    %13 = vector.shape_cast %12 : vector<1x512xf32> to vector<1x512xf32>
    %14 = vector.broadcast %13 : vector<1x512xf32> to vector<8x512xf32>
    %cst_16 = arith.constant 0.000000e+00 : f32
    %15 = vector.broadcast %cst_16 : f32 to vector<8x128xf32>
    %cst_17 = arith.constant 0.000000e+00 : f32
    %16 = vector.broadcast %cst_17 : f32 to vector<8x128xf32>
    %cst_18 = arith.constant 0.000000e+00 : f32
    %17 = vector.broadcast %cst_18 : f32 to vector<8x128xf32>
    %cst_19 = arith.constant 0.000000e+00 : f32
    %18 = vector.broadcast %cst_19 : f32 to vector<8x128xf32>
    %c0_20 = arith.constant 0 : index
    %c0_21 = arith.constant 0 : index
    %19 = vector.load %arg13[%c0_20, %c0_21] : memref<64x512xf32, #tpu.memory_space<vmem>>, vector<8x512xf32>
    %cst_22 = arith.constant dense<0.000000e+00> : vector<8x512xf32>
    %20 = tpu.matmul %15, %9, %cst_22 {dimension_numbers = #tpu.dot_dimension_numbers<[1], [0], [0], [1], [0, 0, 1, 1], [], []>} : vector<8x128xf32>, vector<128x512xf32>, vector<8x512xf32> -> vector<8x512xf32>
    %21 = arith.addf %19, %20 : vector<8x512xf32>
    %22 = vector.extract_strided_slice %21 {offsets = [0, 0], sizes = [8, 128], strides = [1, 1]} : vector<8x512xf32> to vector<8x128xf32>
    %cst_23 = arith.constant 5.000000e-01 : f32
    %23 = vector.broadcast %cst_23 : f32 to vector<8x128xf32>
    %24 = arith.mulf %23, %22 : vector<8x128xf32>
    %25 = math.tanh %24 : vector<8x128xf32>
    %cst_24 = arith.constant 5.000000e-01 : f32
    %26 = vector.broadcast %cst_24 : f32 to vector<8x128xf32>
    %27 = arith.mulf %26, %25 : vector<8x128xf32>
    %cst_25 = arith.constant 5.000000e-01 : f32
    %28 = vector.broadcast %cst_25 : f32 to vector<8x128xf32>
    %29 = arith.addf %27, %28 : vector<8x128xf32>
    %30 = vector.extract_strided_slice %21 {offsets = [0, 128], sizes = [8, 128], strides = [1, 1]} : vector<8x512xf32> to vector<8x128xf32>
    %cst_26 = arith.constant 5.000000e-01 : f32
    %31 = vector.broadcast %cst_26 : f32 to vector<8x128xf32>
    %32 = arith.mulf %31, %30 : vector<8x128xf32>
    %33 = math.tanh %32 : vector<8x128xf32>
    %cst_27 = arith.constant 5.000000e-01 : f32
    %34 = vector.broadcast %cst_27 : f32 to vector<8x128xf32>
    %35 = arith.mulf %34, %33 : vector<8x128xf32>
    %cst_28 = arith.constant 5.000000e-01 : f32
    %36 = vector.broadcast %cst_28 : f32 to vector<8x128xf32>
    %37 = arith.addf %35, %36 : vector<8x128xf32>
    %38 = vector.extract_strided_slice %21 {offsets = [0, 256], sizes = [8, 128], strides = [1, 1]} : vector<8x512xf32> to vector<8x128xf32>
    %39 = math.tanh %38 : vector<8x128xf32>
    %40 = vector.extract_strided_slice %21 {offsets = [0, 384], sizes = [8, 128], strides = [1, 1]} : vector<8x512xf32> to vector<8x128xf32>
    %cst_29 = arith.constant 5.000000e-01 : f32
    %41 = vector.broadcast %cst_29 : f32 to vector<8x128xf32>
    %42 = arith.mulf %41, %40 : vector<8x128xf32>
    %43 = math.tanh %42 : vector<8x128xf32>
    %cst_30 = arith.constant 5.000000e-01 : f32
    %44 = vector.broadcast %cst_30 : f32 to vector<8x128xf32>
    %45 = arith.mulf %44, %43 : vector<8x128xf32>
    %cst_31 = arith.constant 5.000000e-01 : f32
    %46 = vector.broadcast %cst_31 : f32 to vector<8x128xf32>
    %47 = arith.addf %45, %46 : vector<8x128xf32>
    %48 = arith.mulf %37, %16 : vector<8x128xf32>
    %49 = arith.mulf %29, %39 : vector<8x128xf32>
    %50 = arith.addf %48, %49 : vector<8x128xf32>
    %51 = math.tanh %50 : vector<8x128xf32>
    %52 = arith.mulf %47, %51 : vector<8x128xf32>
    %cst_32 = arith.constant 0.000000e+00 : f32
    %53 = vector.broadcast %cst_32 : f32 to vector<8x128xf32>
    %54 = arith.maximumf %52, %53 : vector<8x128xf32>
    %cst_33 = arith.constant dense<0.000000e+00> : vector<8x512xf32>
    %55 = tpu.matmul %54, %10, %cst_33 {dimension_numbers = #tpu.dot_dimension_numbers<[1], [0], [0], [1], [0, 0, 1, 1], [], []>} : vector<8x128xf32>, vector<128x512xf32>, vector<8x512xf32> -> vector<8x512xf32>
    %cst_34 = arith.constant dense<0.000000e+00> : vector<8x512xf32>
    %56 = tpu.matmul %17, %11, %cst_34 {dimension_numbers = #tpu.dot_dimension_numbers<[1], [0], [0], [1], [0, 0, 1, 1], [], []>} : vector<8x128xf32>, vector<128x512xf32>, vector<8x512xf32> -> vector<8x512xf32>
    %57 = arith.addf %55, %56 : vector<8x512xf32>
    %58 = arith.addf %57, %14 : vector<8x512xf32>
    %59 = vector.extract_strided_slice %58 {offsets = [0, 0], sizes = [8, 128], strides = [1, 1]} : vector<8x512xf32> to vector<8x128xf32>
    %cst_35 = arith.constant 5.000000e-01 : f32
    %60 = vector.broadcast %cst_35 : f32 to vector<8x128xf32>
    %61 = arith.mulf %60, %59 : vector<8x128xf32>
    %62 = math.tanh %61 : vector<8x128xf32>
    %cst_36 = arith.constant 5.000000e-01 : f32
    %63 = vector.broadcast %cst_36 : f32 to vector<8x128xf32>
    %64 = arith.mulf %63, %62 : vector<8x128xf32>
    %cst_37 = arith.constant 5.000000e-01 : f32
    %65 = vector.broadcast %cst_37 : f32 to vector<8x128xf32>
    %66 = arith.addf %64, %65 : vector<8x128xf32>
    %67 = vector.extract_strided_slice %58 {offsets = [0, 128], sizes = [8, 128], strides = [1, 1]} : vector<8x512xf32> to vector<8x128xf32>
    %cst_38 = arith.constant 5.000000e-01 : f32
    %68 = vector.broadcast %cst_38 : f32 to vector<8x128xf32>
    %69 = arith.mulf %68, %67 : vector<8x128xf32>
    %70 = math.tanh %69 : vector<8x128xf32>
    %cst_39 = arith.constant 5.000000e-01 : f32
    %71 = vector.broadcast %cst_39 : f32 to vector<8x128xf32>
    %72 = arith.mulf %71, %70 : vector<8x128xf32>
    %cst_40 = arith.constant 5.000000e-01 : f32
    %73 = vector.broadcast %cst_40 : f32 to vector<8x128xf32>
    %74 = arith.addf %72, %73 : vector<8x128xf32>
    %75 = vector.extract_strided_slice %58 {offsets = [0, 256], sizes = [8, 128], strides = [1, 1]} : vector<8x512xf32> to vector<8x128xf32>
    %76 = math.tanh %75 : vector<8x128xf32>
    %77 = vector.extract_strided_slice %58 {offsets = [0, 384], sizes = [8, 128], strides = [1, 1]} : vector<8x512xf32> to vector<8x128xf32>
    %cst_41 = arith.constant 5.000000e-01 : f32
    %78 = vector.broadcast %cst_41 : f32 to vector<8x128xf32>
    %79 = arith.mulf %78, %77 : vector<8x128xf32>
    %80 = math.tanh %79 : vector<8x128xf32>
    %cst_42 = arith.constant 5.000000e-01 : f32
    %81 = vector.broadcast %cst_42 : f32 to vector<8x128xf32>
    %82 = arith.mulf %81, %80 : vector<8x128xf32>
    %cst_43 = arith.constant 5.000000e-01 : f32
    %83 = vector.broadcast %cst_43 : f32 to vector<8x128xf32>
    %84 = arith.addf %82, %83 : vector<8x128xf32>
    %85 = arith.mulf %74, %18 : vector<8x128xf32>
    %86 = arith.mulf %66, %76 : vector<8x128xf32>
    %87 = arith.addf %85, %86 : vector<8x128xf32>
    %88 = math.tanh %87 : vector<8x128xf32>
    %89 = arith.mulf %84, %88 : vector<8x128xf32>
    %cst_44 = arith.constant 0.000000e+00 : f32
    %90 = vector.broadcast %cst_44 : f32 to vector<8x128xf32>
    %91 = arith.maximumf %89, %90 : vector<8x128xf32>
    %c0_45 = arith.constant 0 : index
    %c0_46 = arith.constant 0 : index
    %92 = vector.load %arg14[%c0_45, %c0_46] : memref<8x1024xf32, #tpu.memory_space<vmem>>, vector<8x128xf32>
    tpu.vector_store %arg14[%c0_45, %c0_46], %91 {strides = array<i32>} : memref<8x1024xf32, #tpu.memory_space<vmem>>, vector<8x128xf32>,
    %c8 = arith.constant 8 : index
    %c0_47 = arith.constant 0 : index
    %93 = vector.load %arg13[%c8, %c0_47] : memref<64x512xf32, #tpu.memory_space<vmem>>, vector<8x512xf32>
    %cst_48 = arith.constant dense<0.000000e+00> : vector<8x512xf32>
    %94 = tpu.matmul %52, %9, %cst_48 {dimension_numbers = #tpu.dot_dimension_numbers<[1], [0], [0], [1], [0, 0, 1, 1], [], []>} : vector<8x128xf32>, vector<128x512xf32>, vector<8x512xf32> -> vector<8x512xf32>
    %95 = arith.addf %93, %94 : vector<8x512xf32>
    %96 = vector.extract_strided_slice %95 {offsets = [0, 0], sizes = [8, 128], strides = [1, 1]} : vector<8x512xf32> to vector<8x128xf32>
    %cst_49 = arith.constant 5.000000e-01 : f32
    %97 = vector.broadcast %cst_49 : f32 to vector<8x128xf32>
    %98 = arith.mulf %97, %96 : vector<8x128xf32>
    %99 = math.tanh %98 : vector<8x128xf32>
    %cst_50 = arith.constant 5.000000e-01 : f32
    %100 = vector.broadcast %cst_50 : f32 to vector<8x128xf32>
    %101 = arith.mulf %100, %99 : vector<8x128xf32>
    %cst_51 = arith.constant 5.000000e-01 : f32
    %102 = vector.broadcast %cst_51 : f32 to vector<8x128xf32>
    %103 = arith.addf %101, %102 : vector<8x128xf32>
    %104 = vector.extract_strided_slice %95 {offsets = [0, 128], sizes = [8, 128], strides = [1, 1]} : vector<8x512xf32> to vector<8x128xf32>
    %cst_52 = arith.constant 5.000000e-01 : f32
    %105 = vector.broadcast %cst_52 : f32 to vector<8x128xf32>
    %106 = arith.mulf %105, %104 : vector<8x128xf32>
    %107 = math.tanh %106 : vector<8x128xf32>
    %cst_53 = arith.constant 5.000000e-01 : f32
    %108 = vector.broadcast %cst_53 : f32 to vector<8x128xf32>
    %109 = arith.mulf %108, %107 : vector<8x128xf32>
    %cst_54 = arith.constant 5.000000e-01 : f32
    %110 = vector.broadcast %cst_54 : f32 to vector<8x128xf32>
    %111 = arith.addf %109, %110 : vector<8x128xf32>
    %112 = vector.extract_strided_slice %95 {offsets = [0, 256], sizes = [8, 128], strides = [1, 1]} : vector<8x512xf32> to vector<8x128xf32>
    %113 = math.tanh %112 : vector<8x128xf32>
    %114 = vector.extract_strided_slice %95 {offsets = [0, 384], sizes = [8, 128], strides = [1, 1]} : vector<8x512xf32> to vector<8x128xf32>
    %cst_55 = arith.constant 5.000000e-01 : f32
    %115 = vector.broadcast %cst_55 : f32 to vector<8x128xf32>
    %116 = arith.mulf %115, %114 : vector<8x128xf32>
    %117 = math.tanh %116 : vector<8x128xf32>
    %cst_56 = arith.constant 5.000000e-01 : f32
    %118 = vector.broadcast %cst_56 : f32 to vector<8x128xf32>
    %119 = arith.mulf %118, %117 : vector<8x128xf32>
    %cst_57 = arith.constant 5.000000e-01 : f32
    %120 = vector.broadcast %cst_57 : f32 to vector<8x128xf32>
    %121 = arith.addf %119, %120 : vector<8x128xf32>
    %122 = arith.mulf %111, %50 : vector<8x128xf32>
    %123 = arith.mulf %103, %113 : vector<8x128xf32>
    %124 = arith.addf %122, %123 : vector<8x128xf32>
    %125 = math.tanh %124 : vector<8x128xf32>
    %126 = arith.mulf %121, %125 : vector<8x128xf32>
    %cst_58 = arith.constant 0.000000e+00 : f32
    %127 = vector.broadcast %cst_58 : f32 to vector<8x128xf32>
    %128 = arith.maximumf %126, %127 : vector<8x128xf32>
    %cst_59 = arith.constant dense<0.000000e+00> : vector<8x512xf32>
    %129 = tpu.matmul %128, %10, %cst_59 {dimension_numbers = #tpu.dot_dimension_numbers<[1], [0], [0], [1], [0, 0, 1, 1], [], []>} : vector<8x128xf32>, vector<128x512xf32>, vector<8x512xf32> -> vector<8x512xf32>
    %cst_60 = arith.constant dense<0.000000e+00> : vector<8x512xf32>
    %130 = tpu.matmul %89, %11, %cst_60 {dimension_numbers = #tpu.dot_dimension_numbers<[1], [0], [0], [1], [0, 0, 1, 1], [], []>} : vector<8x128xf32>, vector<128x512xf32>, vector<8x512xf32> -> vector<8x512xf32>
    %131 = arith.addf %129, %130 : vector<8x512xf32>
    %132 = arith.addf %131, %14 : vector<8x512xf32>
    %133 = vector.extract_strided_slice %132 {offsets = [0, 0], sizes = [8, 128], strides = [1, 1]} : vector<8x512xf32> to vector<8x128xf32>
    %cst_61 = arith.constant 5.000000e-01 : f32
    %134 = vector.broadcast %cst_61 : f32 to vector<8x128xf32>
    %135 = arith.mulf %134, %133 : vector<8x128xf32>
    %136 = math.tanh %135 : vector<8x128xf32>
    %cst_62 = arith.constant 5.000000e-01 : f32
    %137 = vector.broadcast %cst_62 : f32 to vector<8x128xf32>
    %138 = arith.mulf %137, %136 : vector<8x128xf32>
    %cst_63 = arith.constant 5.000000e-01 : f32
    %139 = vector.broadcast %cst_63 : f32 to vector<8x128xf32>
    %140 = arith.addf %138, %139 : vector<8x128xf32>
    %141 = vector.extract_strided_slice %132 {offsets = [0, 128], sizes = [8, 128], strides = [1, 1]} : vector<8x512xf32> to vector<8x128xf32>
    %cst_64 = arith.constant 5.000000e-01 : f32
    %142 = vector.broadcast %cst_64 : f32 to vector<8x128xf32>
    %143 = arith.mulf %142, %141 : vector<8x128xf32>
    %144 = math.tanh %143 : vector<8x128xf32>
    %cst_65 = arith.constant 5.000000e-01 : f32
    %145 = vector.broadcast %cst_65 : f32 to vector<8x128xf32>
    %146 = arith.mulf %145, %144 : vector<8x128xf32>
    %cst_66 = arith.constant 5.000000e-01 : f32
    %147 = vector.broadcast %cst_66 : f32 to vector<8x128xf32>
    %148 = arith.addf %146, %147 : vector<8x128xf32>
    %149 = vector.extract_strided_slice %132 {offsets = [0, 256], sizes = [8, 128], strides = [1, 1]} : vector<8x512xf32> to vector<8x128xf32>
    %150 = math.tanh %149 : vector<8x128xf32>
    %151 = vector.extract_strided_slice %132 {offsets = [0, 384], sizes = [8, 128], strides = [1, 1]} : vector<8x512xf32> to vector<8x128xf32>
    %cst_67 = arith.constant 5.000000e-01 : f32
    %152 = vector.broadcast %cst_67 : f32 to vector<8x128xf32>
    %153 = arith.mulf %152, %151 : vector<8x128xf32>
    %154 = math.tanh %153 : vector<8x128xf32>
    %cst_68 = arith.constant 5.000000e-01 : f32
    %155 = vector.broadcast %cst_68 : f32 to vector<8x128xf32>
    %156 = arith.mulf %155, %154 : vector<8x128xf32>
    %cst_69 = arith.constant 5.000000e-01 : f32
    %157 = vector.broadcast %cst_69 : f32 to vector<8x128xf32>
    %158 = arith.addf %156, %157 : vector<8x128xf32>
    %159 = arith.mulf %148, %87 : vector<8x128xf32>
    %160 = arith.mulf %140, %150 : vector<8x128xf32>
    %161 = arith.addf %159, %160 : vector<8x128xf32>
    %162 = math.tanh %161 : vector<8x128xf32>
    %163 = arith.mulf %158, %162 : vector<8x128xf32>
    %cst_70 = arith.constant 0.000000e+00 : f32
    %164 = vector.broadcast %cst_70 : f32 to vector<8x128xf32>
    %165 = arith.maximumf %163, %164 : vector<8x128xf32>
    %c0_71 = arith.constant 0 : index
    %c128 = arith.constant 128 : index
    %166 = vector.load %arg14[%c0_71, %c128] : memref<8x1024xf32, #tpu.memory_space<vmem>>, vector<8x128xf32>
    tpu.vector_store %arg14[%c0_71, %c128], %165 {strides = array<i32>} : memref<8x1024xf32, #tpu.memory_space<vmem>>, vector<8x128xf32>,
    %c16 = arith.constant 16 : index
    %c0_72 = arith.constant 0 : index
    %167 = vector.load %arg13[%c16, %c0_72] : memref<64x512xf32, #tpu.memory_space<vmem>>, vector<8x512xf32>
    %cst_73 = arith.constant dense<0.000000e+00> : vector<8x512xf32>
    %168 = tpu.matmul %126, %9, %cst_73 {dimension_numbers = #tpu.dot_dimension_numbers<[1], [0], [0], [1], [0, 0, 1, 1], [], []>} : vector<8x128xf32>, vector<128x512xf32>, vector<8x512xf32> -> vector<8x512xf32>
    %169 = arith.addf %167, %168 : vector<8x512xf32>
    %170 = vector.extract_strided_slice %169 {offsets = [0, 0], sizes = [8, 128], strides = [1, 1]} : vector<8x512xf32> to vector<8x128xf32>
    %cst_74 = arith.constant 5.000000e-01 : f32
    %171 = vector.broadcast %cst_74 : f32 to vector<8x128xf32>
    %172 = arith.mulf %171, %170 : vector<8x128xf32>
    %173 = math.tanh %172 : vector<8x128xf32>
    %cst_75 = arith.constant 5.000000e-01 : f32
    %174 = vector.broadcast %cst_75 : f32 to vector<8x128xf32>
    %175 = arith.mulf %174, %173 : vector<8x128xf32>
    %cst_76 = arith.constant 5.000000e-01 : f32
    %176 = vector.broadcast %cst_76 : f32 to vector<8x128xf32>
    %177 = arith.addf %175, %176 : vector<8x128xf32>
    %178 = vector.extract_strided_slice %169 {offsets = [0, 128], sizes = [8, 128], strides = [1, 1]} : vector<8x512xf32> to vector<8x128xf32>
    %cst_77 = arith.constant 5.000000e-01 : f32
    %179 = vector.broadcast %cst_77 : f32 to vector<8x128xf32>
    %180 = arith.mulf %179, %178 : vector<8x128xf32>
    %181 = math.tanh %180 : vector<8x128xf32>
    %cst_78 = arith.constant 5.000000e-01 : f32
    %182 = vector.broadcast %cst_78 : f32 to vector<8x128xf32>
    %183 = arith.mulf %182, %181 : vector<8x128xf32>
    %cst_79 = arith.constant 5.000000e-01 : f32
    %184 = vector.broadcast %cst_79 : f32 to vector<8x128xf32>
    %185 = arith.addf %183, %184 : vector<8x128xf32>
    %186 = vector.extract_strided_slice %169 {offsets = [0, 256], sizes = [8, 128], strides = [1, 1]} : vector<8x512xf32> to vector<8x128xf32>
    %187 = math.tanh %186 : vector<8x128xf32>
    %188 = vector.extract_strided_slice %169 {offsets = [0, 384], sizes = [8, 128], strides = [1, 1]} : vector<8x512xf32> to vector<8x128xf32>
    %cst_80 = arith.constant 5.000000e-01 : f32
    %189 = vector.broadcast %cst_80 : f32 to vector<8x128xf32>
    %190 = arith.mulf %189, %188 : vector<8x128xf32>
    %191 = math.tanh %190 : vector<8x128xf32>
    %cst_81 = arith.constant 5.000000e-01 : f32
    %192 = vector.broadcast %cst_81 : f32 to vector<8x128xf32>
    %193 = arith.mulf %192, %191 : vector<8x128xf32>
    %cst_82 = arith.constant 5.000000e-01 : f32
    %194 = vector.broadcast %cst_82 : f32 to vector<8x128xf32>
    %195 = arith.addf %193, %194 : vector<8x128xf32>
    %196 = arith.mulf %185, %124 : vector<8x128xf32>
    %197 = arith.mulf %177, %187 : vector<8x128xf32>
    %198 = arith.addf %196, %197 : vector<8x128xf32>
    %199 = math.tanh %198 : vector<8x128xf32>
    %200 = arith.mulf %195, %199 : vector<8x128xf32>
    %cst_83 = arith.constant 0.000000e+00 : f32
    %201 = vector.broadcast %cst_83 : f32 to vector<8x128xf32>
    %202 = arith.maximumf %200, %201 : vector<8x128xf32>
    %cst_84 = arith.constant dense<0.000000e+00> : vector<8x512xf32>
    %203 = tpu.matmul %202, %10, %cst_84 {dimension_numbers = #tpu.dot_dimension_numbers<[1], [0], [0], [1], [0, 0, 1, 1], [], []>} : vector<8x128xf32>, vector<128x512xf32>, vector<8x512xf32> -> vector<8x512xf32>
    %cst_85 = arith.constant dense<0.000000e+00> : vector<8x512xf32>
    %204 = tpu.matmul %163, %11, %cst_85 {dimension_numbers = #tpu.dot_dimension_numbers<[1], [0], [0], [1], [0, 0, 1, 1], [], []>} : vector<8x128xf32>, vector<128x512xf32>, vector<8x512xf32> -> vector<8x512xf32>
    %205 = arith.addf %203, %204 : vector<8x512xf32>
    %206 = arith.addf %205, %14 : vector<8x512xf32>
    %207 = vector.extract_strided_slice %206 {offsets = [0, 0], sizes = [8, 128], strides = [1, 1]} : vector<8x512xf32> to vector<8x128xf32>
    %cst_86 = arith.constant 5.000000e-01 : f32
    %208 = vector.broadcast %cst_86 : f32 to vector<8x128xf32>
    %209 = arith.mulf %208, %207 : vector<8x128xf32>
    %210 = math.tanh %209 : vector<8x128xf32>
    %cst_87 = arith.constant 5.000000e-01 : f32
    %211 = vector.broadcast %cst_87 : f32 to vector<8x128xf32>
    %212 = arith.mulf %211, %210 : vector<8x128xf32>
    %cst_88 = arith.constant 5.000000e-01 : f32
    %213 = vector.broadcast %cst_88 : f32 to vector<8x128xf32>
    %214 = arith.addf %212, %213 : vector<8x128xf32>
    %215 = vector.extract_strided_slice %206 {offsets = [0, 128], sizes = [8, 128], strides = [1, 1]} : vector<8x512xf32> to vector<8x128xf32>
    %cst_89 = arith.constant 5.000000e-01 : f32
    %216 = vector.broadcast %cst_89 : f32 to vector<8x128xf32>
    %217 = arith.mulf %216, %215 : vector<8x128xf32>
    %218 = math.tanh %217 : vector<8x128xf32>
    %cst_90 = arith.constant 5.000000e-01 : f32
    %219 = vector.broadcast %cst_90 : f32 to vector<8x128xf32>
    %220 = arith.mulf %219, %218 : vector<8x128xf32>
    %cst_91 = arith.constant 5.000000e-01 : f32
    %221 = vector.broadcast %cst_91 : f32 to vector<8x128xf32>
    %222 = arith.addf %220, %221 : vector<8x128xf32>
    %223 = vector.extract_strided_slice %206 {offsets = [0, 256], sizes = [8, 128], strides = [1, 1]} : vector<8x512xf32> to vector<8x128xf32>
    %224 = math.tanh %223 : vector<8x128xf32>
    %225 = vector.extract_strided_slice %206 {offsets = [0, 384], sizes = [8, 128], strides = [1, 1]} : vector<8x512xf32> to vector<8x128xf32>
    %cst_92 = arith.constant 5.000000e-01 : f32
    %226 = vector.broadcast %cst_92 : f32 to vector<8x128xf32>
    %227 = arith.mulf %226, %225 : vector<8x128xf32>
    %228 = math.tanh %227 : vector<8x128xf32>
    %cst_93 = arith.constant 5.000000e-01 : f32
    %229 = vector.broadcast %cst_93 : f32 to vector<8x128xf32>
    %230 = arith.mulf %229, %228 : vector<8x128xf32>
    %cst_94 = arith.constant 5.000000e-01 : f32
    %231 = vector.broadcast %cst_94 : f32 to vector<8x128xf32>
    %232 = arith.addf %230, %231 : vector<8x128xf32>
    %233 = arith.mulf %222, %161 : vector<8x128xf32>
    %234 = arith.mulf %214, %224 : vector<8x128xf32>
    %235 = arith.addf %233, %234 : vector<8x128xf32>
    %236 = math.tanh %235 : vector<8x128xf32>
    %237 = arith.mulf %232, %236 : vector<8x128xf32>
    %cst_95 = arith.constant 0.000000e+00 : f32
    %238 = vector.broadcast %cst_95 : f32 to vector<8x128xf32>
    %239 = arith.maximumf %237, %238 : vector<8x128xf32>
    %c0_96 = arith.constant 0 : index
    %c256 = arith.constant 256 : index
    %240 = vector.load %arg14[%c0_96, %c256] : memref<8x1024xf32, #tpu.memory_space<vmem>>, vector<8x128xf32>
    tpu.vector_store %arg14[%c0_96, %c256], %239 {strides = array<i32>} : memref<8x1024xf32, #tpu.memory_space<vmem>>, vector<8x128xf32>,
    %c24 = arith.constant 24 : index
    %c0_97 = arith.constant 0 : index
    %241 = vector.load %arg13[%c24, %c0_97] : memref<64x512xf32, #tpu.memory_space<vmem>>, vector<8x512xf32>
    %cst_98 = arith.constant dense<0.000000e+00> : vector<8x512xf32>
    %242 = tpu.matmul %200, %9, %cst_98 {dimension_numbers = #tpu.dot_dimension_numbers<[1], [0], [0], [1], [0, 0, 1, 1], [], []>} : vector<8x128xf32>, vector<128x512xf32>, vector<8x512xf32> -> vector<8x512xf32>
    %243 = arith.addf %241, %242 : vector<8x512xf32>
    %244 = vector.extract_strided_slice %243 {offsets = [0, 0], sizes = [8, 128], strides = [1, 1]} : vector<8x512xf32> to vector<8x128xf32>
    %cst_99 = arith.constant 5.000000e-01 : f32
    %245 = vector.broadcast %cst_99 : f32 to vector<8x128xf32>
    %246 = arith.mulf %245, %244 : vector<8x128xf32>
    %247 = math.tanh %246 : vector<8x128xf32>
    %cst_100 = arith.constant 5.000000e-01 : f32
    %248 = vector.broadcast %cst_100 : f32 to vector<8x128xf32>
    %249 = arith.mulf %248, %247 : vector<8x128xf32>
    %cst_101 = arith.constant 5.000000e-01 : f32
    %250 = vector.broadcast %cst_101 : f32 to vector<8x128xf32>
    %251 = arith.addf %249, %250 : vector<8x128xf32>
    %252 = vector.extract_strided_slice %243 {offsets = [0, 128], sizes = [8, 128], strides = [1, 1]} : vector<8x512xf32> to vector<8x128xf32>
    %cst_102 = arith.constant 5.000000e-01 : f32
    %253 = vector.broadcast %cst_102 : f32 to vector<8x128xf32>
    %254 = arith.mulf %253, %252 : vector<8x128xf32>
    %255 = math.tanh %254 : vector<8x128xf32>
    %cst_103 = arith.constant 5.000000e-01 : f32
    %256 = vector.broadcast %cst_103 : f32 to vector<8x128xf32>
    %257 = arith.mulf %256, %255 : vector<8x128xf32>
    %cst_104 = arith.constant 5.000000e-01 : f32
    %258 = vector.broadcast %cst_104 : f32 to vector<8x128xf32>
    %259 = arith.addf %257, %258 : vector<8x128xf32>
    %260 = vector.extract_strided_slice %243 {offsets = [0, 256], sizes = [8, 128], strides = [1, 1]} : vector<8x512xf32> to vector<8x128xf32>
    %261 = math.tanh %260 : vector<8x128xf32>
    %262 = vector.extract_strided_slice %243 {offsets = [0, 384], sizes = [8, 128], strides = [1, 1]} : vector<8x512xf32> to vector<8x128xf32>
    %cst_105 = arith.constant 5.000000e-01 : f32
    %263 = vector.broadcast %cst_105 : f32 to vector<8x128xf32>
    %264 = arith.mulf %263, %262 : vector<8x128xf32>
    %265 = math.tanh %264 : vector<8x128xf32>
    %cst_106 = arith.constant 5.000000e-01 : f32
    %266 = vector.broadcast %cst_106 : f32 to vector<8x128xf32>
    %267 = arith.mulf %266, %265 : vector<8x128xf32>
    %cst_107 = arith.constant 5.000000e-01 : f32
    %268 = vector.broadcast %cst_107 : f32 to vector<8x128xf32>
    %269 = arith.addf %267, %268 : vector<8x128xf32>
    %270 = arith.mulf %259, %198 : vector<8x128xf32>
    %271 = arith.mulf %251, %261 : vector<8x128xf32>
    %272 = arith.addf %270, %271 : vector<8x128xf32>
    %273 = math.tanh %272 : vector<8x128xf32>
    %274 = arith.mulf %269, %273 : vector<8x128xf32>
    %cst_108 = arith.constant 0.000000e+00 : f32
    %275 = vector.broadcast %cst_108 : f32 to vector<8x128xf32>
    %276 = arith.maximumf %274, %275 : vector<8x128xf32>
    %cst_109 = arith.constant dense<0.000000e+00> : vector<8x512xf32>
    %277 = tpu.matmul %276, %10, %cst_109 {dimension_numbers = #tpu.dot_dimension_numbers<[1], [0], [0], [1], [0, 0, 1, 1], [], []>} : vector<8x128xf32>, vector<128x512xf32>, vector<8x512xf32> -> vector<8x512xf32>
    %cst_110 = arith.constant dense<0.000000e+00> : vector<8x512xf32>
    %278 = tpu.matmul %237, %11, %cst_110 {dimension_numbers = #tpu.dot_dimension_numbers<[1], [0], [0], [1], [0, 0, 1, 1], [], []>} : vector<8x128xf32>, vector<128x512xf32>, vector<8x512xf32> -> vector<8x512xf32>
    %279 = arith.addf %277, %278 : vector<8x512xf32>
    %280 = arith.addf %279, %14 : vector<8x512xf32>
    %281 = vector.extract_strided_slice %280 {offsets = [0, 0], sizes = [8, 128], strides = [1, 1]} : vector<8x512xf32> to vector<8x128xf32>
    %cst_111 = arith.constant 5.000000e-01 : f32
    %282 = vector.broadcast %cst_111 : f32 to vector<8x128xf32>
    %283 = arith.mulf %282, %281 : vector<8x128xf32>
    %284 = math.tanh %283 : vector<8x128xf32>
    %cst_112 = arith.constant 5.000000e-01 : f32
    %285 = vector.broadcast %cst_112 : f32 to vector<8x128xf32>
    %286 = arith.mulf %285, %284 : vector<8x128xf32>
    %cst_113 = arith.constant 5.000000e-01 : f32
    %287 = vector.broadcast %cst_113 : f32 to vector<8x128xf32>
    %288 = arith.addf %286, %287 : vector<8x128xf32>
    %289 = vector.extract_strided_slice %280 {offsets = [0, 128], sizes = [8, 128], strides = [1, 1]} : vector<8x512xf32> to vector<8x128xf32>
    %cst_114 = arith.constant 5.000000e-01 : f32
    %290 = vector.broadcast %cst_114 : f32 to vector<8x128xf32>
    %291 = arith.mulf %290, %289 : vector<8x128xf32>
    %292 = math.tanh %291 : vector<8x128xf32>
    %cst_115 = arith.constant 5.000000e-01 : f32
    %293 = vector.broadcast %cst_115 : f32 to vector<8x128xf32>
    %294 = arith.mulf %293, %292 : vector<8x128xf32>
    %cst_116 = arith.constant 5.000000e-01 : f32
    %295 = vector.broadcast %cst_116 : f32 to vector<8x128xf32>
    %296 = arith.addf %294, %295 : vector<8x128xf32>
    %297 = vector.extract_strided_slice %280 {offsets = [0, 256], sizes = [8, 128], strides = [1, 1]} : vector<8x512xf32> to vector<8x128xf32>
    %298 = math.tanh %297 : vector<8x128xf32>
    %299 = vector.extract_strided_slice %280 {offsets = [0, 384], sizes = [8, 128], strides = [1, 1]} : vector<8x512xf32> to vector<8x128xf32>
    %cst_117 = arith.constant 5.000000e-01 : f32
    %300 = vector.broadcast %cst_117 : f32 to vector<8x128xf32>
    %301 = arith.mulf %300, %299 : vector<8x128xf32>
    %302 = math.tanh %301 : vector<8x128xf32>
    %cst_118 = arith.constant 5.000000e-01 : f32
    %303 = vector.broadcast %cst_118 : f32 to vector<8x128xf32>
    %304 = arith.mulf %303, %302 : vector<8x128xf32>
    %cst_119 = arith.constant 5.000000e-01 : f32
    %305 = vector.broadcast %cst_119 : f32 to vector<8x128xf32>
    %306 = arith.addf %304, %305 : vector<8x128xf32>
    %307 = arith.mulf %296, %235 : vector<8x128xf32>
    %308 = arith.mulf %288, %298 : vector<8x128xf32>
    %309 = arith.addf %307, %308 : vector<8x128xf32>
    %310 = math.tanh %309 : vector<8x128xf32>
    %311 = arith.mulf %306, %310 : vector<8x128xf32>
    %cst_120 = arith.constant 0.000000e+00 : f32
    %312 = vector.broadcast %cst_120 : f32 to vector<8x128xf32>
    %313 = arith.maximumf %311, %312 : vector<8x128xf32>
    %c0_121 = arith.constant 0 : index
    %c384 = arith.constant 384 : index
    %314 = vector.load %arg14[%c0_121, %c384] : memref<8x1024xf32, #tpu.memory_space<vmem>>, vector<8x128xf32>
    tpu.vector_store %arg14[%c0_121, %c384], %313 {strides = array<i32>} : memref<8x1024xf32, #tpu.memory_space<vmem>>, vector<8x128xf32>,
    %c32 = arith.constant 32 : index
    %c0_122 = arith.constant 0 : index
    %315 = vector.load %arg13[%c32, %c0_122] : memref<64x512xf32, #tpu.memory_space<vmem>>, vector<8x512xf32>
    %cst_123 = arith.constant dense<0.000000e+00> : vector<8x512xf32>
    %316 = tpu.matmul %274, %9, %cst_123 {dimension_numbers = #tpu.dot_dimension_numbers<[1], [0], [0], [1], [0, 0, 1, 1], [], []>} : vector<8x128xf32>, vector<128x512xf32>, vector<8x512xf32> -> vector<8x512xf32>
    %317 = arith.addf %315, %316 : vector<8x512xf32>
    %318 = vector.extract_strided_slice %317 {offsets = [0, 0], sizes = [8, 128], strides = [1, 1]} : vector<8x512xf32> to vector<8x128xf32>
    %cst_124 = arith.constant 5.000000e-01 : f32
    %319 = vector.broadcast %cst_124 : f32 to vector<8x128xf32>
    %320 = arith.mulf %319, %318 : vector<8x128xf32>
    %321 = math.tanh %320 : vector<8x128xf32>
    %cst_125 = arith.constant 5.000000e-01 : f32
    %322 = vector.broadcast %cst_125 : f32 to vector<8x128xf32>
    %323 = arith.mulf %322, %321 : vector<8x128xf32>
    %cst_126 = arith.constant 5.000000e-01 : f32
    %324 = vector.broadcast %cst_126 : f32 to vector<8x128xf32>
    %325 = arith.addf %323, %324 : vector<8x128xf32>
    %326 = vector.extract_strided_slice %317 {offsets = [0, 128], sizes = [8, 128], strides = [1, 1]} : vector<8x512xf32> to vector<8x128xf32>
    %cst_127 = arith.constant 5.000000e-01 : f32
    %327 = vector.broadcast %cst_127 : f32 to vector<8x128xf32>
    %328 = arith.mulf %327, %326 : vector<8x128xf32>
    %329 = math.tanh %328 : vector<8x128xf32>
    %cst_128 = arith.constant 5.000000e-01 : f32
    %330 = vector.broadcast %cst_128 : f32 to vector<8x128xf32>
    %331 = arith.mulf %330, %329 : vector<8x128xf32>
    %cst_129 = arith.constant 5.000000e-01 : f32
    %332 = vector.broadcast %cst_129 : f32 to vector<8x128xf32>
    %333 = arith.addf %331, %332 : vector<8x128xf32>
    %334 = vector.extract_strided_slice %317 {offsets = [0, 256], sizes = [8, 128], strides = [1, 1]} : vector<8x512xf32> to vector<8x128xf32>
    %335 = math.tanh %334 : vector<8x128xf32>
    %336 = vector.extract_strided_slice %317 {offsets = [0, 384], sizes = [8, 128], strides = [1, 1]} : vector<8x512xf32> to vector<8x128xf32>
    %cst_130 = arith.constant 5.000000e-01 : f32
    %337 = vector.broadcast %cst_130 : f32 to vector<8x128xf32>
    %338 = arith.mulf %337, %336 : vector<8x128xf32>
    %339 = math.tanh %338 : vector<8x128xf32>
    %cst_131 = arith.constant 5.000000e-01 : f32
    %340 = vector.broadcast %cst_131 : f32 to vector<8x128xf32>
    %341 = arith.mulf %340, %339 : vector<8x128xf32>
    %cst_132 = arith.constant 5.000000e-01 : f32
    %342 = vector.broadcast %cst_132 : f32 to vector<8x128xf32>
    %343 = arith.addf %341, %342 : vector<8x128xf32>
    %344 = arith.mulf %333, %272 : vector<8x128xf32>
    %345 = arith.mulf %325, %335 : vector<8x128xf32>
    %346 = arith.addf %344, %345 : vector<8x128xf32>
    %347 = math.tanh %346 : vector<8x128xf32>
    %348 = arith.mulf %343, %347 : vector<8x128xf32>
    %cst_133 = arith.constant 0.000000e+00 : f32
    %349 = vector.broadcast %cst_133 : f32 to vector<8x128xf32>
    %350 = arith.maximumf %348, %349 : vector<8x128xf32>
    %cst_134 = arith.constant dense<0.000000e+00> : vector<8x512xf32>
    %351 = tpu.matmul %350, %10, %cst_134 {dimension_numbers = #tpu.dot_dimension_numbers<[1], [0], [0], [1], [0, 0, 1, 1], [], []>} : vector<8x128xf32>, vector<128x512xf32>, vector<8x512xf32> -> vector<8x512xf32>
    %cst_135 = arith.constant dense<0.000000e+00> : vector<8x512xf32>
    %352 = tpu.matmul %311, %11, %cst_135 {dimension_numbers = #tpu.dot_dimension_numbers<[1], [0], [0], [1], [0, 0, 1, 1], [], []>} : vector<8x128xf32>, vector<128x512xf32>, vector<8x512xf32> -> vector<8x512xf32>
    %353 = arith.addf %351, %352 : vector<8x512xf32>
    %354 = arith.addf %353, %14 : vector<8x512xf32>
    %355 = vector.extract_strided_slice %354 {offsets = [0, 0], sizes = [8, 128], strides = [1, 1]} : vector<8x512xf32> to vector<8x128xf32>
    %cst_136 = arith.constant 5.000000e-01 : f32
    %356 = vector.broadcast %cst_136 : f32 to vector<8x128xf32>
    %357 = arith.mulf %356, %355 : vector<8x128xf32>
    %358 = math.tanh %357 : vector<8x128xf32>
    %cst_137 = arith.constant 5.000000e-01 : f32
    %359 = vector.broadcast %cst_137 : f32 to vector<8x128xf32>
    %360 = arith.mulf %359, %358 : vector<8x128xf32>
    %cst_138 = arith.constant 5.000000e-01 : f32
    %361 = vector.broadcast %cst_138 : f32 to vector<8x128xf32>
    %362 = arith.addf %360, %361 : vector<8x128xf32>
    %363 = vector.extract_strided_slice %354 {offsets = [0, 128], sizes = [8, 128], strides = [1, 1]} : vector<8x512xf32> to vector<8x128xf32>
    %cst_139 = arith.constant 5.000000e-01 : f32
    %364 = vector.broadcast %cst_139 : f32 to vector<8x128xf32>
    %365 = arith.mulf %364, %363 : vector<8x128xf32>
    %366 = math.tanh %365 : vector<8x128xf32>
    %cst_140 = arith.constant 5.000000e-01 : f32
    %367 = vector.broadcast %cst_140 : f32 to vector<8x128xf32>
    %368 = arith.mulf %367, %366 : vector<8x128xf32>
    %cst_141 = arith.constant 5.000000e-01 : f32
    %369 = vector.broadcast %cst_141 : f32 to vector<8x128xf32>
    %370 = arith.addf %368, %369 : vector<8x128xf32>
    %371 = vector.extract_strided_slice %354 {offsets = [0, 256], sizes = [8, 128], strides = [1, 1]} : vector<8x512xf32> to vector<8x128xf32>
    %372 = math.tanh %371 : vector<8x128xf32>
    %373 = vector.extract_strided_slice %354 {offsets = [0, 384], sizes = [8, 128], strides = [1, 1]} : vector<8x512xf32> to vector<8x128xf32>
    %cst_142 = arith.constant 5.000000e-01 : f32
    %374 = vector.broadcast %cst_142 : f32 to vector<8x128xf32>
    %375 = arith.mulf %374, %373 : vector<8x128xf32>
    %376 = math.tanh %375 : vector<8x128xf32>
    %cst_143 = arith.constant 5.000000e-01 : f32
    %377 = vector.broadcast %cst_143 : f32 to vector<8x128xf32>
    %378 = arith.mulf %377, %376 : vector<8x128xf32>
    %cst_144 = arith.constant 5.000000e-01 : f32
    %379 = vector.broadcast %cst_144 : f32 to vector<8x128xf32>
    %380 = arith.addf %378, %379 : vector<8x128xf32>
    %381 = arith.mulf %370, %309 : vector<8x128xf32>
    %382 = arith.mulf %362, %372 : vector<8x128xf32>
    %383 = arith.addf %381, %382 : vector<8x128xf32>
    %384 = math.tanh %383 : vector<8x128xf32>
    %385 = arith.mulf %380, %384 : vector<8x128xf32>
    %cst_145 = arith.constant 0.000000e+00 : f32
    %386 = vector.broadcast %cst_145 : f32 to vector<8x128xf32>
    %387 = arith.maximumf %385, %386 : vector<8x128xf32>
    %c0_146 = arith.constant 0 : index
    %c512 = arith.constant 512 : index
    %388 = vector.load %arg14[%c0_146, %c512] : memref<8x1024xf32, #tpu.memory_space<vmem>>, vector<8x128xf32>
    tpu.vector_store %arg14[%c0_146, %c512], %387 {strides = array<i32>} : memref<8x1024xf32, #tpu.memory_space<vmem>>, vector<8x128xf32>,
    %c40 = arith.constant 40 : index
    %c0_147 = arith.constant 0 : index
    %389 = vector.load %arg13[%c40, %c0_147] : memref<64x512xf32, #tpu.memory_space<vmem>>, vector<8x512xf32>
    %cst_148 = arith.constant dense<0.000000e+00> : vector<8x512xf32>
    %390 = tpu.matmul %348, %9, %cst_148 {dimension_numbers = #tpu.dot_dimension_numbers<[1], [0], [0], [1], [0, 0, 1, 1], [], []>} : vector<8x128xf32>, vector<128x512xf32>, vector<8x512xf32> -> vector<8x512xf32>
    %391 = arith.addf %389, %390 : vector<8x512xf32>
    %392 = vector.extract_strided_slice %391 {offsets = [0, 0], sizes = [8, 128], strides = [1, 1]} : vector<8x512xf32> to vector<8x128xf32>
    %cst_149 = arith.constant 5.000000e-01 : f32
    %393 = vector.broadcast %cst_149 : f32 to vector<8x128xf32>
    %394 = arith.mulf %393, %392 : vector<8x128xf32>
    %395 = math.tanh %394 : vector<8x128xf32>
    %cst_150 = arith.constant 5.000000e-01 : f32
    %396 = vector.broadcast %cst_150 : f32 to vector<8x128xf32>
    %397 = arith.mulf %396, %395 : vector<8x128xf32>
    %cst_151 = arith.constant 5.000000e-01 : f32
    %398 = vector.broadcast %cst_151 : f32 to vector<8x128xf32>
    %399 = arith.addf %397, %398 : vector<8x128xf32>
    %400 = vector.extract_strided_slice %391 {offsets = [0, 128], sizes = [8, 128], strides = [1, 1]} : vector<8x512xf32> to vector<8x128xf32>
    %cst_152 = arith.constant 5.000000e-01 : f32
    %401 = vector.broadcast %cst_152 : f32 to vector<8x128xf32>
    %402 = arith.mulf %401, %400 : vector<8x128xf32>
    %403 = math.tanh %402 : vector<8x128xf32>
    %cst_153 = arith.constant 5.000000e-01 : f32
    %404 = vector.broadcast %cst_153 : f32 to vector<8x128xf32>
    %405 = arith.mulf %404, %403 : vector<8x128xf32>
    %cst_154 = arith.constant 5.000000e-01 : f32
    %406 = vector.broadcast %cst_154 : f32 to vector<8x128xf32>
    %407 = arith.addf %405, %406 : vector<8x128xf32>
    %408 = vector.extract_strided_slice %391 {offsets = [0, 256], sizes = [8, 128], strides = [1, 1]} : vector<8x512xf32> to vector<8x128xf32>
    %409 = math.tanh %408 : vector<8x128xf32>
    %410 = vector.extract_strided_slice %391 {offsets = [0, 384], sizes = [8, 128], strides = [1, 1]} : vector<8x512xf32> to vector<8x128xf32>
    %cst_155 = arith.constant 5.000000e-01 : f32
    %411 = vector.broadcast %cst_155 : f32 to vector<8x128xf32>
    %412 = arith.mulf %411, %410 : vector<8x128xf32>
    %413 = math.tanh %412 : vector<8x128xf32>
    %cst_156 = arith.constant 5.000000e-01 : f32
    %414 = vector.broadcast %cst_156 : f32 to vector<8x128xf32>
    %415 = arith.mulf %414, %413 : vector<8x128xf32>
    %cst_157 = arith.constant 5.000000e-01 : f32
    %416 = vector.broadcast %cst_157 : f32 to vector<8x128xf32>
    %417 = arith.addf %415, %416 : vector<8x128xf32>
    %418 = arith.mulf %407, %346 : vector<8x128xf32>
    %419 = arith.mulf %399, %409 : vector<8x128xf32>
    %420 = arith.addf %418, %419 : vector<8x128xf32>
    %421 = math.tanh %420 : vector<8x128xf32>
    %422 = arith.mulf %417, %421 : vector<8x128xf32>
    %cst_158 = arith.constant 0.000000e+00 : f32
    %423 = vector.broadcast %cst_158 : f32 to vector<8x128xf32>
    %424 = arith.maximumf %422, %423 : vector<8x128xf32>
    %cst_159 = arith.constant dense<0.000000e+00> : vector<8x512xf32>
    %425 = tpu.matmul %424, %10, %cst_159 {dimension_numbers = #tpu.dot_dimension_numbers<[1], [0], [0], [1], [0, 0, 1, 1], [], []>} : vector<8x128xf32>, vector<128x512xf32>, vector<8x512xf32> -> vector<8x512xf32>
    %cst_160 = arith.constant dense<0.000000e+00> : vector<8x512xf32>
    %426 = tpu.matmul %385, %11, %cst_160 {dimension_numbers = #tpu.dot_dimension_numbers<[1], [0], [0], [1], [0, 0, 1, 1], [], []>} : vector<8x128xf32>, vector<128x512xf32>, vector<8x512xf32> -> vector<8x512xf32>
    %427 = arith.addf %425, %426 : vector<8x512xf32>
    %428 = arith.addf %427, %14 : vector<8x512xf32>
    %429 = vector.extract_strided_slice %428 {offsets = [0, 0], sizes = [8, 128], strides = [1, 1]} : vector<8x512xf32> to vector<8x128xf32>
    %cst_161 = arith.constant 5.000000e-01 : f32
    %430 = vector.broadcast %cst_161 : f32 to vector<8x128xf32>
    %431 = arith.mulf %430, %429 : vector<8x128xf32>
    %432 = math.tanh %431 : vector<8x128xf32>
    %cst_162 = arith.constant 5.000000e-01 : f32
    %433 = vector.broadcast %cst_162 : f32 to vector<8x128xf32>
    %434 = arith.mulf %433, %432 : vector<8x128xf32>
    %cst_163 = arith.constant 5.000000e-01 : f32
    %435 = vector.broadcast %cst_163 : f32 to vector<8x128xf32>
    %436 = arith.addf %434, %435 : vector<8x128xf32>
    %437 = vector.extract_strided_slice %428 {offsets = [0, 128], sizes = [8, 128], strides = [1, 1]} : vector<8x512xf32> to vector<8x128xf32>
    %cst_164 = arith.constant 5.000000e-01 : f32
    %438 = vector.broadcast %cst_164 : f32 to vector<8x128xf32>
    %439 = arith.mulf %438, %437 : vector<8x128xf32>
    %440 = math.tanh %439 : vector<8x128xf32>
    %cst_165 = arith.constant 5.000000e-01 : f32
    %441 = vector.broadcast %cst_165 : f32 to vector<8x128xf32>
    %442 = arith.mulf %441, %440 : vector<8x128xf32>
    %cst_166 = arith.constant 5.000000e-01 : f32
    %443 = vector.broadcast %cst_166 : f32 to vector<8x128xf32>
    %444 = arith.addf %442, %443 : vector<8x128xf32>
    %445 = vector.extract_strided_slice %428 {offsets = [0, 256], sizes = [8, 128], strides = [1, 1]} : vector<8x512xf32> to vector<8x128xf32>
    %446 = math.tanh %445 : vector<8x128xf32>
    %447 = vector.extract_strided_slice %428 {offsets = [0, 384], sizes = [8, 128], strides = [1, 1]} : vector<8x512xf32> to vector<8x128xf32>
    %cst_167 = arith.constant 5.000000e-01 : f32
    %448 = vector.broadcast %cst_167 : f32 to vector<8x128xf32>
    %449 = arith.mulf %448, %447 : vector<8x128xf32>
    %450 = math.tanh %449 : vector<8x128xf32>
    %cst_168 = arith.constant 5.000000e-01 : f32
    %451 = vector.broadcast %cst_168 : f32 to vector<8x128xf32>
    %452 = arith.mulf %451, %450 : vector<8x128xf32>
    %cst_169 = arith.constant 5.000000e-01 : f32
    %453 = vector.broadcast %cst_169 : f32 to vector<8x128xf32>
    %454 = arith.addf %452, %453 : vector<8x128xf32>
    %455 = arith.mulf %444, %383 : vector<8x128xf32>
    %456 = arith.mulf %436, %446 : vector<8x128xf32>
    %457 = arith.addf %455, %456 : vector<8x128xf32>
    %458 = math.tanh %457 : vector<8x128xf32>
    %459 = arith.mulf %454, %458 : vector<8x128xf32>
    %cst_170 = arith.constant 0.000000e+00 : f32
    %460 = vector.broadcast %cst_170 : f32 to vector<8x128xf32>
    %461 = arith.maximumf %459, %460 : vector<8x128xf32>
    %c0_171 = arith.constant 0 : index
    %c640 = arith.constant 640 : index
    %462 = vector.load %arg14[%c0_171, %c640] : memref<8x1024xf32, #tpu.memory_space<vmem>>, vector<8x128xf32>
    tpu.vector_store %arg14[%c0_171, %c640], %461 {strides = array<i32>} : memref<8x1024xf32, #tpu.memory_space<vmem>>, vector<8x128xf32>,
    %c48 = arith.constant 48 : index
    %c0_172 = arith.constant 0 : index
    %463 = vector.load %arg13[%c48, %c0_172] : memref<64x512xf32, #tpu.memory_space<vmem>>, vector<8x512xf32>
    %cst_173 = arith.constant dense<0.000000e+00> : vector<8x512xf32>
    %464 = tpu.matmul %422, %9, %cst_173 {dimension_numbers = #tpu.dot_dimension_numbers<[1], [0], [0], [1], [0, 0, 1, 1], [], []>} : vector<8x128xf32>, vector<128x512xf32>, vector<8x512xf32> -> vector<8x512xf32>
    %465 = arith.addf %463, %464 : vector<8x512xf32>
    %466 = vector.extract_strided_slice %465 {offsets = [0, 0], sizes = [8, 128], strides = [1, 1]} : vector<8x512xf32> to vector<8x128xf32>
    %cst_174 = arith.constant 5.000000e-01 : f32
    %467 = vector.broadcast %cst_174 : f32 to vector<8x128xf32>
    %468 = arith.mulf %467, %466 : vector<8x128xf32>
    %469 = math.tanh %468 : vector<8x128xf32>
    %cst_175 = arith.constant 5.000000e-01 : f32
    %470 = vector.broadcast %cst_175 : f32 to vector<8x128xf32>
    %471 = arith.mulf %470, %469 : vector<8x128xf32>
    %cst_176 = arith.constant 5.000000e-01 : f32
    %472 = vector.broadcast %cst_176 : f32 to vector<8x128xf32>
    %473 = arith.addf %471, %472 : vector<8x128xf32>
    %474 = vector.extract_strided_slice %465 {offsets = [0, 128], sizes = [8, 128], strides = [1, 1]} : vector<8x512xf32> to vector<8x128xf32>
    %cst_177 = arith.constant 5.000000e-01 : f32
    %475 = vector.broadcast %cst_177 : f32 to vector<8x128xf32>
    %476 = arith.mulf %475, %474 : vector<8x128xf32>
    %477 = math.tanh %476 : vector<8x128xf32>
    %cst_178 = arith.constant 5.000000e-01 : f32
    %478 = vector.broadcast %cst_178 : f32 to vector<8x128xf32>
    %479 = arith.mulf %478, %477 : vector<8x128xf32>
    %cst_179 = arith.constant 5.000000e-01 : f32
    %480 = vector.broadcast %cst_179 : f32 to vector<8x128xf32>
    %481 = arith.addf %479, %480 : vector<8x128xf32>
    %482 = vector.extract_strided_slice %465 {offsets = [0, 256], sizes = [8, 128], strides = [1, 1]} : vector<8x512xf32> to vector<8x128xf32>
    %483 = math.tanh %482 : vector<8x128xf32>
    %484 = vector.extract_strided_slice %465 {offsets = [0, 384], sizes = [8, 128], strides = [1, 1]} : vector<8x512xf32> to vector<8x128xf32>
    %cst_180 = arith.constant 5.000000e-01 : f32
    %485 = vector.broadcast %cst_180 : f32 to vector<8x128xf32>
    %486 = arith.mulf %485, %484 : vector<8x128xf32>
    %487 = math.tanh %486 : vector<8x128xf32>
    %cst_181 = arith.constant 5.000000e-01 : f32
    %488 = vector.broadcast %cst_181 : f32 to vector<8x128xf32>
    %489 = arith.mulf %488, %487 : vector<8x128xf32>
    %cst_182 = arith.constant 5.000000e-01 : f32
    %490 = vector.broadcast %cst_182 : f32 to vector<8x128xf32>
    %491 = arith.addf %489, %490 : vector<8x128xf32>
    %492 = arith.mulf %481, %420 : vector<8x128xf32>
    %493 = arith.mulf %473, %483 : vector<8x128xf32>
    %494 = arith.addf %492, %493 : vector<8x128xf32>
    %495 = math.tanh %494 : vector<8x128xf32>
    %496 = arith.mulf %491, %495 : vector<8x128xf32>
    %cst_183 = arith.constant 0.000000e+00 : f32
    %497 = vector.broadcast %cst_183 : f32 to vector<8x128xf32>
    %498 = arith.maximumf %496, %497 : vector<8x128xf32>
    %cst_184 = arith.constant dense<0.000000e+00> : vector<8x512xf32>
    %499 = tpu.matmul %498, %10, %cst_184 {dimension_numbers = #tpu.dot_dimension_numbers<[1], [0], [0], [1], [0, 0, 1, 1], [], []>} : vector<8x128xf32>, vector<128x512xf32>, vector<8x512xf32> -> vector<8x512xf32>
    %cst_185 = arith.constant dense<0.000000e+00> : vector<8x512xf32>
    %500 = tpu.matmul %459, %11, %cst_185 {dimension_numbers = #tpu.dot_dimension_numbers<[1], [0], [0], [1], [0, 0, 1, 1], [], []>} : vector<8x128xf32>, vector<128x512xf32>, vector<8x512xf32> -> vector<8x512xf32>
    %501 = arith.addf %499, %500 : vector<8x512xf32>
    %502 = arith.addf %501, %14 : vector<8x512xf32>
    %503 = vector.extract_strided_slice %502 {offsets = [0, 0], sizes = [8, 128], strides = [1, 1]} : vector<8x512xf32> to vector<8x128xf32>
    %cst_186 = arith.constant 5.000000e-01 : f32
    %504 = vector.broadcast %cst_186 : f32 to vector<8x128xf32>
    %505 = arith.mulf %504, %503 : vector<8x128xf32>
    %506 = math.tanh %505 : vector<8x128xf32>
    %cst_187 = arith.constant 5.000000e-01 : f32
    %507 = vector.broadcast %cst_187 : f32 to vector<8x128xf32>
    %508 = arith.mulf %507, %506 : vector<8x128xf32>
    %cst_188 = arith.constant 5.000000e-01 : f32
    %509 = vector.broadcast %cst_188 : f32 to vector<8x128xf32>
    %510 = arith.addf %508, %509 : vector<8x128xf32>
    %511 = vector.extract_strided_slice %502 {offsets = [0, 128], sizes = [8, 128], strides = [1, 1]} : vector<8x512xf32> to vector<8x128xf32>
    %cst_189 = arith.constant 5.000000e-01 : f32
    %512 = vector.broadcast %cst_189 : f32 to vector<8x128xf32>
    %513 = arith.mulf %512, %511 : vector<8x128xf32>
    %514 = math.tanh %513 : vector<8x128xf32>
    %cst_190 = arith.constant 5.000000e-01 : f32
    %515 = vector.broadcast %cst_190 : f32 to vector<8x128xf32>
    %516 = arith.mulf %515, %514 : vector<8x128xf32>
    %cst_191 = arith.constant 5.000000e-01 : f32
    %517 = vector.broadcast %cst_191 : f32 to vector<8x128xf32>
    %518 = arith.addf %516, %517 : vector<8x128xf32>
    %519 = vector.extract_strided_slice %502 {offsets = [0, 256], sizes = [8, 128], strides = [1, 1]} : vector<8x512xf32> to vector<8x128xf32>
    %520 = math.tanh %519 : vector<8x128xf32>
    %521 = vector.extract_strided_slice %502 {offsets = [0, 384], sizes = [8, 128], strides = [1, 1]} : vector<8x512xf32> to vector<8x128xf32>
    %cst_192 = arith.constant 5.000000e-01 : f32
    %522 = vector.broadcast %cst_192 : f32 to vector<8x128xf32>
    %523 = arith.mulf %522, %521 : vector<8x128xf32>
    %524 = math.tanh %523 : vector<8x128xf32>
    %cst_193 = arith.constant 5.000000e-01 : f32
    %525 = vector.broadcast %cst_193 : f32 to vector<8x128xf32>
    %526 = arith.mulf %525, %524 : vector<8x128xf32>
    %cst_194 = arith.constant 5.000000e-01 : f32
    %527 = vector.broadcast %cst_194 : f32 to vector<8x128xf32>
    %528 = arith.addf %526, %527 : vector<8x128xf32>
    %529 = arith.mulf %518, %457 : vector<8x128xf32>
    %530 = arith.mulf %510, %520 : vector<8x128xf32>
    %531 = arith.addf %529, %530 : vector<8x128xf32>
    %532 = math.tanh %531 : vector<8x128xf32>
    %533 = arith.mulf %528, %532 : vector<8x128xf32>
    %cst_195 = arith.constant 0.000000e+00 : f32
    %534 = vector.broadcast %cst_195 : f32 to vector<8x128xf32>
    %535 = arith.maximumf %533, %534 : vector<8x128xf32>
    %c0_196 = arith.constant 0 : index
    %c768 = arith.constant 768 : index
    %536 = vector.load %arg14[%c0_196, %c768] : memref<8x1024xf32, #tpu.memory_space<vmem>>, vector<8x128xf32>
    tpu.vector_store %arg14[%c0_196, %c768], %535 {strides = array<i32>} : memref<8x1024xf32, #tpu.memory_space<vmem>>, vector<8x128xf32>,
    %c56 = arith.constant 56 : index
    %c0_197 = arith.constant 0 : index
    %537 = vector.load %arg13[%c56, %c0_197] : memref<64x512xf32, #tpu.memory_space<vmem>>, vector<8x512xf32>
    %cst_198 = arith.constant dense<0.000000e+00> : vector<8x512xf32>
    %538 = tpu.matmul %496, %9, %cst_198 {dimension_numbers = #tpu.dot_dimension_numbers<[1], [0], [0], [1], [0, 0, 1, 1], [], []>} : vector<8x128xf32>, vector<128x512xf32>, vector<8x512xf32> -> vector<8x512xf32>
    %539 = arith.addf %537, %538 : vector<8x512xf32>
    %540 = vector.extract_strided_slice %539 {offsets = [0, 0], sizes = [8, 128], strides = [1, 1]} : vector<8x512xf32> to vector<8x128xf32>
    %cst_199 = arith.constant 5.000000e-01 : f32
    %541 = vector.broadcast %cst_199 : f32 to vector<8x128xf32>
    %542 = arith.mulf %541, %540 : vector<8x128xf32>
    %543 = math.tanh %542 : vector<8x128xf32>
    %cst_200 = arith.constant 5.000000e-01 : f32
    %544 = vector.broadcast %cst_200 : f32 to vector<8x128xf32>
    %545 = arith.mulf %544, %543 : vector<8x128xf32>
    %cst_201 = arith.constant 5.000000e-01 : f32
    %546 = vector.broadcast %cst_201 : f32 to vector<8x128xf32>
    %547 = arith.addf %545, %546 : vector<8x128xf32>
    %548 = vector.extract_strided_slice %539 {offsets = [0, 128], sizes = [8, 128], strides = [1, 1]} : vector<8x512xf32> to vector<8x128xf32>
    %cst_202 = arith.constant 5.000000e-01 : f32
    %549 = vector.broadcast %cst_202 : f32 to vector<8x128xf32>
    %550 = arith.mulf %549, %548 : vector<8x128xf32>
    %551 = math.tanh %550 : vector<8x128xf32>
    %cst_203 = arith.constant 5.000000e-01 : f32
    %552 = vector.broadcast %cst_203 : f32 to vector<8x128xf32>
    %553 = arith.mulf %552, %551 : vector<8x128xf32>
    %cst_204 = arith.constant 5.000000e-01 : f32
    %554 = vector.broadcast %cst_204 : f32 to vector<8x128xf32>
    %555 = arith.addf %553, %554 : vector<8x128xf32>
    %556 = vector.extract_strided_slice %539 {offsets = [0, 256], sizes = [8, 128], strides = [1, 1]} : vector<8x512xf32> to vector<8x128xf32>
    %557 = math.tanh %556 : vector<8x128xf32>
    %558 = vector.extract_strided_slice %539 {offsets = [0, 384], sizes = [8, 128], strides = [1, 1]} : vector<8x512xf32> to vector<8x128xf32>
    %cst_205 = arith.constant 5.000000e-01 : f32
    %559 = vector.broadcast %cst_205 : f32 to vector<8x128xf32>
    %560 = arith.mulf %559, %558 : vector<8x128xf32>
    %561 = math.tanh %560 : vector<8x128xf32>
    %cst_206 = arith.constant 5.000000e-01 : f32
    %562 = vector.broadcast %cst_206 : f32 to vector<8x128xf32>
    %563 = arith.mulf %562, %561 : vector<8x128xf32>
    %cst_207 = arith.constant 5.000000e-01 : f32
    %564 = vector.broadcast %cst_207 : f32 to vector<8x128xf32>
    %565 = arith.addf %563, %564 : vector<8x128xf32>
    %566 = arith.mulf %555, %494 : vector<8x128xf32>
    %567 = arith.mulf %547, %557 : vector<8x128xf32>
    %568 = arith.addf %566, %567 : vector<8x128xf32>
    %569 = math.tanh %568 : vector<8x128xf32>
    %570 = arith.mulf %565, %569 : vector<8x128xf32>
    %cst_208 = arith.constant 0.000000e+00 : f32
    %571 = vector.broadcast %cst_208 : f32 to vector<8x128xf32>
    %572 = arith.maximumf %570, %571 : vector<8x128xf32>
    %cst_209 = arith.constant dense<0.000000e+00> : vector<8x512xf32>
    %573 = tpu.matmul %572, %10, %cst_209 {dimension_numbers = #tpu.dot_dimension_numbers<[1], [0], [0], [1], [0, 0, 1, 1], [], []>} : vector<8x128xf32>, vector<128x512xf32>, vector<8x512xf32> -> vector<8x512xf32>
    %cst_210 = arith.constant dense<0.000000e+00> : vector<8x512xf32>
    %574 = tpu.matmul %533, %11, %cst_210 {dimension_numbers = #tpu.dot_dimension_numbers<[1], [0], [0], [1], [0, 0, 1, 1], [], []>} : vector<8x128xf32>, vector<128x512xf32>, vector<8x512xf32> -> vector<8x512xf32>
    %575 = arith.addf %573, %574 : vector<8x512xf32>
    %576 = arith.addf %575, %14 : vector<8x512xf32>
    %577 = vector.extract_strided_slice %576 {offsets = [0, 0], sizes = [8, 128], strides = [1, 1]} : vector<8x512xf32> to vector<8x128xf32>
    %cst_211 = arith.constant 5.000000e-01 : f32
    %578 = vector.broadcast %cst_211 : f32 to vector<8x128xf32>
    %579 = arith.mulf %578, %577 : vector<8x128xf32>
    %580 = math.tanh %579 : vector<8x128xf32>
    %cst_212 = arith.constant 5.000000e-01 : f32
    %581 = vector.broadcast %cst_212 : f32 to vector<8x128xf32>
    %582 = arith.mulf %581, %580 : vector<8x128xf32>
    %cst_213 = arith.constant 5.000000e-01 : f32
    %583 = vector.broadcast %cst_213 : f32 to vector<8x128xf32>
    %584 = arith.addf %582, %583 : vector<8x128xf32>
    %585 = vector.extract_strided_slice %576 {offsets = [0, 128], sizes = [8, 128], strides = [1, 1]} : vector<8x512xf32> to vector<8x128xf32>
    %cst_214 = arith.constant 5.000000e-01 : f32
    %586 = vector.broadcast %cst_214 : f32 to vector<8x128xf32>
    %587 = arith.mulf %586, %585 : vector<8x128xf32>
    %588 = math.tanh %587 : vector<8x128xf32>
    %cst_215 = arith.constant 5.000000e-01 : f32
    %589 = vector.broadcast %cst_215 : f32 to vector<8x128xf32>
    %590 = arith.mulf %589, %588 : vector<8x128xf32>
    %cst_216 = arith.constant 5.000000e-01 : f32
    %591 = vector.broadcast %cst_216 : f32 to vector<8x128xf32>
    %592 = arith.addf %590, %591 : vector<8x128xf32>
    %593 = vector.extract_strided_slice %576 {offsets = [0, 256], sizes = [8, 128], strides = [1, 1]} : vector<8x512xf32> to vector<8x128xf32>
    %594 = math.tanh %593 : vector<8x128xf32>
    %595 = vector.extract_strided_slice %576 {offsets = [0, 384], sizes = [8, 128], strides = [1, 1]} : vector<8x512xf32> to vector<8x128xf32>
    %cst_217 = arith.constant 5.000000e-01 : f32
    %596 = vector.broadcast %cst_217 : f32 to vector<8x128xf32>
    %597 = arith.mulf %596, %595 : vector<8x128xf32>
    %598 = math.tanh %597 : vector<8x128xf32>
    %cst_218 = arith.constant 5.000000e-01 : f32
    %599 = vector.broadcast %cst_218 : f32 to vector<8x128xf32>
    %600 = arith.mulf %599, %598 : vector<8x128xf32>
    %cst_219 = arith.constant 5.000000e-01 : f32
    %601 = vector.broadcast %cst_219 : f32 to vector<8x128xf32>
    %602 = arith.addf %600, %601 : vector<8x128xf32>
    %603 = arith.mulf %592, %531 : vector<8x128xf32>
    %604 = arith.mulf %584, %594 : vector<8x128xf32>
    %605 = arith.addf %603, %604 : vector<8x128xf32>
    %606 = math.tanh %605 : vector<8x128xf32>
    %607 = arith.mulf %602, %606 : vector<8x128xf32>
    %cst_220 = arith.constant 0.000000e+00 : f32
    %608 = vector.broadcast %cst_220 : f32 to vector<8x128xf32>
    %609 = arith.maximumf %607, %608 : vector<8x128xf32>
    %c0_221 = arith.constant 0 : index
    %c896 = arith.constant 896 : index
    %610 = vector.load %arg14[%c0_221, %c896] : memref<8x1024xf32, #tpu.memory_space<vmem>>, vector<8x128xf32>
    tpu.vector_store %arg14[%c0_221, %c896], %609 {strides = array<i32>} : memref<8x1024xf32, #tpu.memory_space<vmem>>, vector<8x128xf32>,
    %c0_222 = arith.constant 0 : index
    %c0_223 = arith.constant 0 : index
    %611 = vector.load %arg14[%c0_222, %c0_223] : memref<8x1024xf32, #tpu.memory_space<vmem>>, vector<8x1024xf32>
    %c0_224 = arith.constant 0 : index
    %c0_225 = arith.constant 0 : index
    %612 = vector.load %arg8[%c0_224, %c0_225] : memref<1024x128xf32, #tpu.memory_space<vmem>>, vector<1024x128xf32>
    %cst_226 = arith.constant dense<0.000000e+00> : vector<8x128xf32>
    %613 = tpu.matmul %611, %612, %cst_226 {dimension_numbers = #tpu.dot_dimension_numbers<[1], [0], [0], [1], [0, 0, 1, 1], [], []>} : vector<8x1024xf32>, vector<1024x128xf32>, vector<8x128xf32> -> vector<8x128xf32>
    %c0_227 = arith.constant 0 : index
    %c0_228 = arith.constant 0 : index
    %614 = vector.load %arg9[%c0_227, %c0_228] : memref<1x128xf32, #tpu.memory_space<vmem>>, vector<1x128xf32>
    %615 = vector.broadcast %614 : vector<1x128xf32> to vector<8x128xf32>
    %616 = arith.addf %613, %615 : vector<8x128xf32>
    %cst_229 = arith.constant 0.000000e+00 : f32
    %617 = vector.broadcast %cst_229 : f32 to vector<8x128xf32>
    %618 = arith.maximumf %616, %617 : vector<8x128xf32>
    %c0_230 = arith.constant 0 : index
    %c0_231 = arith.constant 0 : index
    %619 = vector.load %arg10[%c0_230, %c0_231] : memref<128x128xf32, #tpu.memory_space<vmem>>, vector<128x128xf32>
    %cst_232 = arith.constant dense<0.000000e+00> : vector<8x128xf32>
    %620 = tpu.matmul %618, %619, %cst_232 {dimension_numbers = #tpu.dot_dimension_numbers<[1], [0], [0], [1], [0, 0, 1, 1], [], []>} : vector<8x128xf32>, vector<128x128xf32>, vector<8x128xf32> -> vector<8x128xf32>
    %c0_233 = arith.constant 0 : index
    %c0_234 = arith.constant 0 : index
    %621 = vector.load %arg11[%c0_233, %c0_234] : memref<1x128xf32, #tpu.memory_space<vmem>>, vector<1x128xf32>
    %622 = vector.broadcast %621 : vector<1x128xf32> to vector<8x128xf32>
    %623 = arith.addf %620, %622 : vector<8x128xf32>
    %c0_235 = arith.constant 0 : index
    %c0_236 = arith.constant 0 : index
    %624 = vector.load %arg12[%c0_235, %c0_236] : memref<8x128xf32, #tpu.memory_space<vmem>>, vector<8x128xf32>
    tpu.vector_store %arg12[%c0_235, %c0_236], %623 {strides = array<i32>} : memref<8x128xf32, #tpu.memory_space<vmem>>, vector<8x128xf32>,
    return
  }
  func.func @transform_0(%arg0: i32) -> (i32, i32, i32) {
    %c0_i32 = arith.constant 0 : i32
    %c0_i32_0 = arith.constant 0 : i32
    %c0_i32_1 = arith.constant 0 : i32
    return %c0_i32, %arg0, %c0_i32_0 : i32, i32, i32
  }
  func.func @transform_1(%arg0: i32) -> (i32, i32) {
    %c0_i32 = arith.constant 0 : i32
    %c0_i32_0 = arith.constant 0 : i32
    %c0_i32_1 = arith.constant 0 : i32
    return %c0_i32, %c0_i32_0 : i32, i32
  }
  func.func @transform_2(%arg0: i32) -> (i32, i32) {
    %c0_i32 = arith.constant 0 : i32
    %c0_i32_0 = arith.constant 0 : i32
    %c0_i32_1 = arith.constant 0 : i32
    return %c0_i32, %c0_i32_0 : i32, i32
  }
  func.func @transform_3(%arg0: i32) -> (i32, i32) {
    %c0_i32 = arith.constant 0 : i32
    %c0_i32_0 = arith.constant 0 : i32
    %c0_i32_1 = arith.constant 0 : i32
    return %c0_i32, %c0_i32_0 : i32, i32
  }
  func.func @transform_4(%arg0: i32) -> (i32, i32) {
    %c0_i32 = arith.constant 0 : i32
    %c0_i32_0 = arith.constant 0 : i32
    %c0_i32_1 = arith.constant 0 : i32
    return %c0_i32, %c0_i32_0 : i32, i32
  }
  func.func @transform_5(%arg0: i32) -> (i32, i32) {
    %c0_i32 = arith.constant 0 : i32
    %c0_i32_0 = arith.constant 0 : i32
    %c0_i32_1 = arith.constant 0 : i32
    return %c0_i32, %c0_i32_0 : i32, i32
  }
  func.func @transform_6(%arg0: i32) -> (i32, i32) {
    %c0_i32 = arith.constant 0 : i32
    %c0_i32_0 = arith.constant 0 : i32
    %c0_i32_1 = arith.constant 0 : i32
    return %c0_i32, %c0_i32_0 : i32, i32
  }
  func.func @transform_7(%arg0: i32) -> (i32, i32) {
    %c0_i32 = arith.constant 0 : i32
    %c0_i32_0 = arith.constant 0 : i32
    %c0_i32_1 = arith.constant 0 : i32
    return %c0_i32, %c0_i32_0 : i32, i32
  }
  func.func @transform_8(%arg0: i32) -> (i32, i32) {
    %c0_i32 = arith.constant 0 : i32
    %c0_i32_0 = arith.constant 0 : i32
    %c0_i32_1 = arith.constant 0 : i32
    return %c0_i32, %c0_i32_0 : i32, i32
  }
  func.func @transform_9(%arg0: i32) -> (i32, i32) {
    %c0_i32 = arith.constant 0 : i32
    %c0_i32_0 = arith.constant 0 : i32
    %c0_i32_1 = arith.constant 0 : i32
    return %c0_i32, %c0_i32_0 : i32, i32
  }
  func.func @transform_10(%arg0: i32) -> (i32, i32) {
    %c0_i32 = arith.constant 0 : i32
    %c0_i32_0 = arith.constant 0 : i32
    %c0_i32_1 = arith.constant 0 : i32
    return %c0_i32, %c0_i32_0 : i32, i32
  }
  func.func @transform_11(%arg0: i32) -> (i32, i32) {
    %c0_i32 = arith.constant 0 : i32
    %c0_i32_0 = arith.constant 0 : i32
    return %arg0, %c0_i32 : i32, i32
  }
}

</mosaic_0001>

<llo_original>
// kernel: rnn_forward.1
$region0: #{rnn_forward.1}
  #allocation0 [shape = 'u32[]', space=smem, size = 0x4, offset = 0x4, fixed_abs, tag = 'smem constant byte address 0x4 - core index']
  #allocation1 [shape = 'u32[144,128]{1,0:T(1,128)}', space=vmem, size = 0x12000, scoped, tag = 'internal scratch']
  #allocation2 [shape = 'f32[64,512]{1,0:T(8,128)}', space=vmem, size = 0x20000, scoped, tag = 'scratch operand']
  #allocation3 [shape = 'f32[8,1024]{1,0:T(8,128)}', space=vmem, size = 0x8000, scoped, tag = 'scratch operand']
  %s0 = inlined_call_operand.vmem [shape: f32[8,8,32], index: 0, kind: input, shape index: {}]
  %s1 = inlined_call_operand.vmem [shape: f32[32,512], index: 1, kind: input, shape index: {}]
  %s2 = inlined_call_operand.hbm [shape: f32[128,512], index: 2, kind: input, shape index: {}]
  %s3 = inlined_call_operand.vmem [shape: f32[1,512], index: 3, kind: input, shape index: {}]
  %s4 = inlined_call_operand.hbm [shape: f32[128,512], index: 4, kind: input, shape index: {}]
  %s5 = inlined_call_operand.hbm [shape: f32[128,512], index: 5, kind: input, shape index: {}]
  %s6 = inlined_call_operand.vmem [shape: f32[1,512], index: 6, kind: input, shape index: {}]
  %s7 = inlined_call_operand.hbm [shape: f32[1024,128], index: 7, kind: input, shape index: {}]
  %s8 = inlined_call_operand.vmem [shape: f32[1,128], index: 8, kind: input, shape index: {}]
  %s9 = inlined_call_operand.vmem [shape: f32[128,128], index: 9, kind: input, shape index: {}]
  %s10 = inlined_call_operand.vmem [shape: f32[1,128], index: 10, kind: input, shape index: {}]
  %s11 = inlined_call_operand.vmem [shape: f32[8,128], index: 11, kind: output, shape index: {}]
  %s12 = sld [smem:[#allocation0]]
  $region70: #{rnn_forward.1} parent=0
    _
  %s14 = ssub.s32 1, %s12
  %s15 = scalar_select 0, %s14, %s12
  $region1: #{rnn_forward.1} parent=0
    #allocation4 [shape = 'u8[262144]{0}', space=vmem, size = 0x40000, scoped, tag = 'input window, operand 2, single buffered']
    #allocation5 [shape = 's32[1]{0}', space=sflag, size = 0x4, scoped, tag = 'scoped memory for rnn_forward.1']
    #allocation6 [shape = 'u8[262144]{0}', space=vmem, size = 0x40000, scoped, tag = 'input window, operand 4, single buffered']
    #allocation7 [shape = 's32[1]{0}', space=sflag, size = 0x4, scoped, tag = 'scoped memory for rnn_forward.1']
    #allocation8 [shape = 'u8[262144]{0}', space=vmem, size = 0x40000, scoped, tag = 'input window, operand 5, single buffered']
    #allocation9 [shape = 'u8[524288]{0}', space=vmem, size = 0x80000, scoped, tag = 'input window, operand 7, single buffered']
    #allocation10 [shape = 's32[1]{0}', space=sflag, size = 0x4, scoped, tag = 'scoped memory for rnn_forward.1']
    %16 = vsyncpa [#allocation5], 0
    %17 = vsyncpa [#allocation7], 0
    %18 = vsyncpa [#allocation10], 0
    // Predicated region
    $region2: #{rnn_forward.1} parent=1 // pred_check
      _
    $region3: #{rnn_forward.1} parent=1 // pred_check_branch
      %20 = sbr.rel (0) target = $region5
    $region4: #{rnn_forward.1} parent=1 // pred_region
      _
    $region5: #{rnn_forward.1} parent=1 // pred_fallthru
      _
    // Predicated region
    $region6: #{rnn_forward.1} parent=1 // pred_check
      _
    $region7: #{rnn_forward.1} parent=1 // pred_check_branch
      %22 = sbr.rel (0) target = $region9
    $region8: #{rnn_forward.1} parent=1 // pred_region
      _
    $region9: #{rnn_forward.1} parent=1 // pred_fallthru
      _
    // Predicated region
    $region10: #{rnn_forward.1} parent=1 // pred_check
      _
    $region11: #{rnn_forward.1} parent=1 // pred_check_branch
      %24 = sbr.rel (0) target = $region13
    $region12: #{rnn_forward.1} parent=1 // pred_region
      %s26 = ssub.s32 8192, 8192
      %27 = vsyncadd [#allocation5], %s26
      %s28 = sshll.u32 [#allocation4], 4
      %s29 = int_to_ptr.vmem [resolvable:$true] %s28
      %34 = dma.hbm_to_vmem [thread:$0]  %s2, 8192, %s29, [#allocation5], 512, 512, 32
    $region13: #{rnn_forward.1} parent=1 // pred_fallthru
      _
    // Predicated region
    $region14: #{rnn_forward.1} parent=1 // pred_check
      _
    $region15: #{rnn_forward.1} parent=1 // pred_check_branch
      %36 = sbr.rel (0) target = $region17
    $region16: #{rnn_forward.1} parent=1 // pred_region
      _
    $region17: #{rnn_forward.1} parent=1 // pred_fallthru
      _
    // Predicated region
    $region18: #{rnn_forward.1} parent=1 // pred_check
      _
    $region19: #{rnn_forward.1} parent=1 // pred_check_branch
      %38 = sbr.rel (0) target = $region21
    $region20: #{rnn_forward.1} parent=1 // pred_region
      %s40 = ssub.s32 8192, 8192
      %41 = vsyncadd [#allocation7], %s40
      %s42 = sshll.u32 [#allocation6], 4
      %s43 = int_to_ptr.vmem [resolvable:$true] %s42
      %48 = dma.hbm_to_vmem [thread:$0]  %s4, 8192, %s43, [#allocation7], 512, 512, 32
    $region21: #{rnn_forward.1} parent=1 // pred_fallthru
      _
    // Predicated region
    $region22: #{rnn_forward.1} parent=1 // pred_check
      _
    $region23: #{rnn_forward.1} parent=1 // pred_check_branch
      %50 = sbr.rel (0) target = $region25
    $region24: #{rnn_forward.1} parent=1 // pred_region
      %s52 = ssub.s32 8192, 8192
      %53 = vsyncadd [#allocation7], %s52
      %s54 = sshll.u32 [#allocation8], 4
      %s55 = int_to_ptr.vmem [resolvable:$true] %s54
      %60 = dma.hbm_to_vmem [thread:$0]  %s5, 8192, %s55, [#allocation7], 512, 512, 32
    $region25: #{rnn_forward.1} parent=1 // pred_fallthru
      _
    // Predicated region
    $region26: #{rnn_forward.1} parent=1 // pred_check
      _
    $region27: #{rnn_forward.1} parent=1 // pred_check_branch
      %62 = sbr.rel (0) target = $region29
    $region28: #{rnn_forward.1} parent=1 // pred_region
      _
    $region29: #{rnn_forward.1} parent=1 // pred_fallthru
      _
    // Predicated region
    $region30: #{rnn_forward.1} parent=1 // pred_check
      _
    $region31: #{rnn_forward.1} parent=1 // pred_check_branch
      %64 = sbr.rel (0) target = $region33
    $region32: #{rnn_forward.1} parent=1 // pred_region
      %s66 = ssub.s32 16384, 16384
      %67 = vsyncadd [#allocation10], %s66
      %s68 = sshll.u32 [#allocation9], 4
      %s69 = int_to_ptr.vmem [resolvable:$true] %s68
      %74 = dma.hbm_to_vmem [thread:$0]  %s7, 16384, %s69, [#allocation10], 128, 128, 8
    $region33: #{rnn_forward.1} parent=1 // pred_fallthru
      _
    // Predicated region
    $region34: #{rnn_forward.1} parent=1 // pred_check
      _
    $region35: #{rnn_forward.1} parent=1 // pred_check_branch
      %76 = sbr.rel (0) target = $region37
    $region36: #{rnn_forward.1} parent=1 // pred_region
      _
    $region37: #{rnn_forward.1} parent=1 // pred_fallthru
      _
    // Predicated region
    $region38: #{rnn_forward.1} parent=1 // pred_check
      _
    $region39: #{rnn_forward.1} parent=1 // pred_check_branch
      %78 = sbr.rel (0) target = $region41
    $region40: #{rnn_forward.1} parent=1 // pred_region
      _
    $region41: #{rnn_forward.1} parent=1 // pred_fallthru
      _
    // Predicated region
    $region42: #{rnn_forward.1} parent=1 // pred_check
      _
    $region43: #{rnn_forward.1} parent=1 // pred_check_branch
      %80 = sbr.rel (0) target = $region45
    $region44: #{rnn_forward.1} parent=1 // pred_region
      _
    $region45: #{rnn_forward.1} parent=1 // pred_fallthru
      _
    // Predicated region
    $region46: #{rnn_forward.1} parent=1 // pred_check
      _
    $region47: #{rnn_forward.1} parent=1 // pred_check_branch
      %82 = sbr.rel (0) target = $region49
    $region48: #{rnn_forward.1} parent=1 // pred_region
      %83 = dma.done [#allocation5], 8192
    $region49: #{rnn_forward.1} parent=1 // pred_fallthru
      _
    // Predicated region
    $region50: #{rnn_forward.1} parent=1 // pred_check
      _
    $region51: #{rnn_forward.1} parent=1 // pred_check_branch
      %85 = sbr.rel (0) target = $region53
    $region52: #{rnn_forward.1} parent=1 // pred_region
      %86 = dma.done [#allocation7], 8192
    $region53: #{rnn_forward.1} parent=1 // pred_fallthru
      _
    // Predicated region
    $region54: #{rnn_forward.1} parent=1 // pred_check
      _
    $region55: #{rnn_forward.1} parent=1 // pred_check_branch
      %88 = sbr.rel (0) target = $region57
    $region56: #{rnn_forward.1} parent=1 // pred_region
      %89 = dma.done [#allocation7], 8192
    $region57: #{rnn_forward.1} parent=1 // pred_fallthru
      _
    // Predicated region
    $region58: #{rnn_forward.1} parent=1 // pred_check
      _
    $region59: #{rnn_forward.1} parent=1 // pred_check_branch
      %91 = sbr.rel (0) target = $region61
    $region60: #{rnn_forward.1} parent=1 // pred_region
      %92 = dma.done [#allocation10], 16384
    $region61: #{rnn_forward.1} parent=1 // pred_fallthru
      _
    %v93 = vld [vmem:[%s0] sm:$0xff]
    %v94 = vld [vmem:[%s0 + $0x8] sm:$0xff]
    %v95 = vld [vmem:[%s0 + $0x10] sm:$0xff]
    %v96 = vld [vmem:[%s0 + $0x18] sm:$0xff]
    %v97 = vld [vmem:[%s0 + $0x20] sm:$0xff]
    %v98 = vld [vmem:[%s0 + $0x28] sm:$0xff]
    %v99 = vld [vmem:[%s0 + $0x30] sm:$0xff]
    %v100 = vld [vmem:[%s0 + $0x38] sm:$0xff]
    %v101 = vld [vmem:[%s1] sm:$0xff]
    %v102 = vld [vmem:[%s1 + $0x8] sm:$0xff]
    %v103 = vld [vmem:[%s1 + $0x10] sm:$0xff]
    %v104 = vld [vmem:[%s1 + $0x18] sm:$0xff]
    %v105 = vld [vmem:[%s1 + $0x20] sm:$0xff]
    %v106 = vld [vmem:[%s1 + $0x28] sm:$0xff]
    %v107 = vld [vmem:[%s1 + $0x30] sm:$0xff]
    %v108 = vld [vmem:[%s1 + $0x38] sm:$0xff]
    %v109 = vld [vmem:[%s1 + $0x40] sm:$0xff]
    %v110 = vld [vmem:[%s1 + $0x48] sm:$0xff]
    %v111 = vld [vmem:[%s1 + $0x50] sm:$0xff]
    %v112 = vld [vmem:[%s1 + $0x58] sm:$0xff]
    %v113 = vld [vmem:[%s1 + $0x60] sm:$0xff]
    %v114 = vld [vmem:[%s1 + $0x68] sm:$0xff]
    %v115 = vld [vmem:[%s1 + $0x70] sm:$0xff]
    %v116 = vld [vmem:[%s1 + $0x78] sm:$0xff]
    %v117 = vld [vmem:[%s3] sm:$0xf]
    %v119 = vlaneseq
    %v120 = vshrl.u32 %v119, 7
    %v121 = vsub.s32 0, %v120
    %v122 = vrot.slane %v117, %v121
    %v123 = vlaneseq
    %v124 = vshrl.u32 %v123, 7
    %v125 = vsub.s32 1, %v124
    %v126 = vrot.slane %v117, %v125
    %v127 = vlaneseq
    %v128 = vshrl.u32 %v127, 7
    %v129 = vsub.s32 2, %v128
    %v130 = vrot.slane %v117, %v129
    %v131 = vlaneseq
    %v132 = vshrl.u32 %v131, 7
    %v133 = vsub.s32 3, %v132
    %v134 = vrot.slane %v117, %v133
    %vm139 = vcmask 261120
    %v141 = vsel %vm139, %v93, 0
    %v144 = vsel %vm139, %v94, 0
    %v147 = vsel %vm139, %v95, 0
    %v150 = vsel %vm139, %v96, 0
    %v153 = vsel %vm139, %v97, 0
    %v156 = vsel %vm139, %v98, 0
    %v159 = vsel %vm139, %v99, 0
    %v162 = vsel %vm139, %v100, 0
    %164 = vmatprep.subr.mxu0 %v102
    %165 = vmatpush1.msra.mxu0 %v101
    %166 = vmatprep.subr.mxu0 %v106
    %167 = vmatpush1.msra.mxu0 %v105
    %168 = vmatprep.subr.mxu0 %v110
    %169 = vmatpush1.msra.mxu0 %v109
    %170 = vmatprep.subr.mxu0 %v114
    %171 = vmatpush1.msra.mxu0 %v113
    %172 = vmatprep.subr.mxu0 0.0
    %173 = vmatpush1.msra.mxu0 0.0
    %174 = vmatprep.subr.mxu0 0.0
    %175 = vmatpush1.msra.mxu0 0.0
    %176 = vmatprep.subr.mxu0 0.0
    %177 = vmatpush1.msra.mxu0 0.0
    %178 = vmatprep.subr.mxu0 0.0
    %179 = vmatpush1.msra.mxu0 0.0
    %180 = vmatprep.subr.mxu0 0.0
    %181 = vmatpush1.msra.mxu0 0.0
    %182 = vmatprep.subr.mxu0 0.0
    %183 = vmatpush1.msra.mxu0 0.0
    %184 = vmatprep.subr.mxu0 0.0
    %185 = vmatpush1.msra.mxu0 0.0
    %186 = vmatprep.subr.mxu0 0.0
    %187 = vmatpush1.msra.mxu0 0.0
    %188 = vmatprep.subr.mxu0 0.0
    %189 = vmatpush1.msra.mxu0 0.0
    %190 = vmatprep.subr.mxu0 0.0
    %191 = vmatpush1.msra.mxu0 0.0
    %192 = vmatprep.subr.mxu0 0.0
    %193 = vmatpush1.msra.mxu0 0.0
    %194 = vmatprep.subr.mxu0 0.0
    %195 = vmatpush1.msra.mxu0 0.0
    %196 = vmatprep.subr.mxu0 0.0
    %197 = vmatpush1.msra.mxu0 0.0
    %198 = vmatprep.subr.mxu0 0.0
    %199 = vmatpush1.msra.mxu0 0.0
    %200 = vmatprep.subr.mxu0 0.0
    %201 = vmatpush1.msra.mxu0 0.0
    %202 = vmatprep.subr.mxu0 0.0
    %203 = vmatpush1.msra.mxu0 0.0
    %204 = vmatprep.subr.mxu0 0.0
    %205 = vmatpush1.msra.mxu0 0.0
    %206 = vmatprep.subr.mxu0 0.0
    %207 = vmatpush1.msra.mxu0 0.0
    %208 = vmatprep.subr.mxu0 0.0
    %209 = vmatpush1.msra.mxu0 0.0
    %210 = vmatprep.subr.mxu0 0.0
    %211 = vmatpush1.msra.mxu0 0.0
    %212 = vmatprep.subr.mxu0 0.0
    %213 = vmatpush1.msra.mxu0 0.0
    %214 = vmatprep.subr.mxu0 0.0
    %215 = vmatpush1.msra.mxu0 0.0
    %216 = vmatprep.subr.mxu0 0.0
    %217 = vmatpush1.msra.mxu0 0.0
    %218 = vmatprep.subr.mxu0 0.0
    %219 = vmatpush1.msra.mxu0 0.0
    %220 = vmatprep.subr.mxu0 0.0
    %221 = vmatpush1.msra.mxu0 0.0
    %222 = vmatprep.subr.mxu0 0.0
    %223 = vmatpush1.msra.mxu0 0.0
    %224 = vmatprep.subr.mxu0 0.0
    %225 = vmatpush1.msra.mxu0 0.0
    %226 = vmatprep.subr.mxu0 0.0
    %227 = vmatpush1.msra.mxu0 0.0
    %228 = vmatprep.mubr.f32.mxu0 0.0
    %229 = vmatmul.mubr.f32.gmra.mrb[0].mxu0 %v141
    %v230 = vpop.f32.mrb[0].mxu0
    %v231 = vadd.f32 %v122, %v230
    %v232 = vpop.f32.mrb[0].mxu0
    %v233 = vadd.f32 %v126, %v232
    %234 = vmatprep.mubr.f32.mxu0 0.0
    %235 = vmatmul.mubr.f32.gmra.mrb[0].mxu0 %v144
    %v236 = vpop.f32.mrb[0].mxu0
    %v237 = vadd.f32 %v122, %v236
    %v238 = vpop.f32.mrb[0].mxu0
    %v239 = vadd.f32 %v126, %v238
    %240 = vmatprep.mubr.f32.mxu0 0.0
    %241 = vmatmul.mubr.f32.gmra.mrb[0].mxu0 %v147
    %v242 = vpop.f32.mrb[0].mxu0
    %v243 = vadd.f32 %v122, %v242
    %v244 = vpop.f32.mrb[0].mxu0
    %v245 = vadd.f32 %v126, %v244
    %246 = vmatprep.mubr.f32.mxu0 0.0
    %247 = vmatmul.mubr.f32.gmra.mrb[0].mxu0 %v150
    %v248 = vpop.f32.mrb[0].mxu0
    %v249 = vadd.f32 %v122, %v248
    %v250 = vpop.f32.mrb[0].mxu0
    %v251 = vadd.f32 %v126, %v250
    %252 = vmatprep.mubr.f32.mxu0 0.0
    %253 = vmatmul.mubr.f32.gmra.mrb[0].mxu0 %v153
    %v254 = vpop.f32.mrb[0].mxu0
    %v255 = vadd.f32 %v122, %v254
    %v256 = vpop.f32.mrb[0].mxu0
    %v257 = vadd.f32 %v126, %v256
    %258 = vmatprep.mubr.f32.mxu0 0.0
    %259 = vmatmul.mubr.f32.gmra.mrb[0].mxu0 %v156
    %v260 = vpop.f32.mrb[0].mxu0
    %v261 = vadd.f32 %v122, %v260
    %v262 = vpop.f32.mrb[0].mxu0
    %v263 = vadd.f32 %v126, %v262
    %264 = vmatprep.mubr.f32.mxu0 0.0
    %265 = vmatmul.mubr.f32.gmra.mrb[0].mxu0 %v159
    %v266 = vpop.f32.mrb[0].mxu0
    %v267 = vadd.f32 %v122, %v266
    %v268 = vpop.f32.mrb[0].mxu0
    %v269 = vadd.f32 %v126, %v268
    %270 = vmatprep.mubr.f32.mxu0 0.0
    %271 = vmatmul.mubr.f32.gmra.mrb[0].mxu0 %v162
    %v272 = vpop.f32.mrb[0].mxu0
    %v273 = vadd.f32 %v122, %v272
    %v274 = vpop.f32.mrb[0].mxu0
    %v275 = vadd.f32 %v126, %v274
    %276 = vdwg.mxu0
    %277 = vmatprep.subr.mxu0 %v104
    %278 = vmatpush1.msra.mxu0 %v103
    %279 = vmatprep.subr.mxu0 %v108
    %280 = vmatpush1.msra.mxu0 %v107
    %281 = vmatprep.subr.mxu0 %v112
    %282 = vmatpush1.msra.mxu0 %v111
    %283 = vmatprep.subr.mxu0 %v116
    %284 = vmatpush1.msra.mxu0 %v115
    %285 = vmatprep.subr.mxu0 0.0
    %286 = vmatpush1.msra.mxu0 0.0
    %287 = vmatprep.subr.mxu0 0.0
    %288 = vmatpush1.msra.mxu0 0.0
    %289 = vmatprep.subr.mxu0 0.0
    %290 = vmatpush1.msra.mxu0 0.0
    %291 = vmatprep.subr.mxu0 0.0
    %292 = vmatpush1.msra.mxu0 0.0
    %293 = vmatprep.subr.mxu0 0.0
    %294 = vmatpush1.msra.mxu0 0.0
    %295 = vmatprep.subr.mxu0 0.0
    %296 = vmatpush1.msra.mxu0 0.0
    %297 = vmatprep.subr.mxu0 0.0
    %298 = vmatpush1.msra.mxu0 0.0
    %299 = vmatprep.subr.mxu0 0.0
    %300 = vmatpush1.msra.mxu0 0.0
    %301 = vmatprep.subr.mxu0 0.0
    %302 = vmatpush1.msra.mxu0 0.0
    %303 = vmatprep.subr.mxu0 0.0
    %304 = vmatpush1.msra.mxu0 0.0
    %305 = vmatprep.subr.mxu0 0.0
    %306 = vmatpush1.msra.mxu0 0.0
    %307 = vmatprep.subr.mxu0 0.0
    %308 = vmatpush1.msra.mxu0 0.0
    %309 = vmatprep.subr.mxu0 0.0
    %310 = vmatpush1.msra.mxu0 0.0
    %311 = vmatprep.subr.mxu0 0.0
    %312 = vmatpush1.msra.mxu0 0.0
    %313 = vmatprep.subr.mxu0 0.0
    %314 = vmatpush1.msra.mxu0 0.0
    %315 = vmatprep.subr.mxu0 0.0
    %316 = vmatpush1.msra.mxu0 0.0
    %317 = vmatprep.subr.mxu0 0.0
    %318 = vmatpush1.msra.mxu0 0.0
    %319 = vmatprep.subr.mxu0 0.0
    %320 = vmatpush1.msra.mxu0 0.0
    %321 = vmatprep.subr.mxu0 0.0
    %322 = vmatpush1.msra.mxu0 0.0
    %323 = vmatprep.subr.mxu0 0.0
    %324 = vmatpush1.msra.mxu0 0.0
    %325 = vmatprep.subr.mxu0 0.0
    %326 = vmatpush1.msra.mxu0 0.0
    %327 = vmatprep.subr.mxu0 0.0
    %328 = vmatpush1.msra.mxu0 0.0
    %329 = vmatprep.subr.mxu0 0.0
    %330 = vmatpush1.msra.mxu0 0.0
    %331 = vmatprep.subr.mxu0 0.0
    %332 = vmatpush1.msra.mxu0 0.0
    %333 = vmatprep.subr.mxu0 0.0
    %334 = vmatpush1.msra.mxu0 0.0
    %335 = vmatprep.subr.mxu0 0.0
    %336 = vmatpush1.msra.mxu0 0.0
    %337 = vmatprep.subr.mxu0 0.0
    %338 = vmatpush1.msra.mxu0 0.0
    %339 = vmatprep.subr.mxu0 0.0
    %340 = vmatpush1.msra.mxu0 0.0
    %341 = vmatprep.mubr.f32.mxu0 0.0
    %342 = vmatmul.mubr.f32.gmra.mrb[0].mxu0 %v141
    %v343 = vpop.f32.mrb[0].mxu0
    %v344 = vadd.f32 %v130, %v343
    %v345 = vpop.f32.mrb[0].mxu0
    %v346 = vadd.f32 %v134, %v345
    %347 = vmatprep.mubr.f32.mxu0 0.0
    %348 = vmatmul.mubr.f32.gmra.mrb[0].mxu0 %v144
    %v349 = vpop.f32.mrb[0].mxu0
    %v350 = vadd.f32 %v130, %v349
    %v351 = vpop.f32.mrb[0].mxu0
    %v352 = vadd.f32 %v134, %v351
    %353 = vmatprep.mubr.f32.mxu0 0.0
    %354 = vmatmul.mubr.f32.gmra.mrb[0].mxu0 %v147
    %v355 = vpop.f32.mrb[0].mxu0
    %v356 = vadd.f32 %v130, %v355
    %v357 = vpop.f32.mrb[0].mxu0
    %v358 = vadd.f32 %v134, %v357
    %359 = vmatprep.mubr.f32.mxu0 0.0
    %360 = vmatmul.mubr.f32.gmra.mrb[0].mxu0 %v150
    %v361 = vpop.f32.mrb[0].mxu0
    %v362 = vadd.f32 %v130, %v361
    %v363 = vpop.f32.mrb[0].mxu0
    %v364 = vadd.f32 %v134, %v363
    %365 = vmatprep.mubr.f32.mxu0 0.0
    %366 = vmatmul.mubr.f32.gmra.mrb[0].mxu0 %v153
    %v367 = vpop.f32.mrb[0].mxu0
    %v368 = vadd.f32 %v130, %v367
    %v369 = vpop.f32.mrb[0].mxu0
    %v370 = vadd.f32 %v134, %v369
    %371 = vmatprep.mubr.f32.mxu0 0.0
    %372 = vmatmul.mubr.f32.gmra.mrb[0].mxu0 %v156
    %v373 = vpop.f32.mrb[0].mxu0
    %v374 = vadd.f32 %v130, %v373
    %v375 = vpop.f32.mrb[0].mxu0
    %v376 = vadd.f32 %v134, %v375
    %377 = vmatprep.mubr.f32.mxu0 0.0
    %378 = vmatmul.mubr.f32.gmra.mrb[0].mxu0 %v159
    %v379 = vpop.f32.mrb[0].mxu0
    %v380 = vadd.f32 %v130, %v379
    %v381 = vpop.f32.mrb[0].mxu0
    %v382 = vadd.f32 %v134, %v381
    %383 = vmatprep.mubr.f32.mxu0 0.0
    %384 = vmatmul.mubr.f32.gmra.mrb[0].mxu0 %v162
    %v385 = vpop.f32.mrb[0].mxu0
    %v386 = vadd.f32 %v130, %v385
    %v387 = vpop.f32.mrb[0].mxu0
    %v388 = vadd.f32 %v134, %v387
    %389 = vdwg.mxu0
    %390 = vst [vmem:[#allocation2] sm:$0xff] %v231
    %391 = vst [vmem:[#allocation2 + $0x8] sm:$0xff] %v233
    %392 = vst [vmem:[#allocation2 + $0x10] sm:$0xff] %v344
    %393 = vst [vmem:[#allocation2 + $0x18] sm:$0xff] %v346
    %394 = vst [vmem:[#allocation2 + $0x20] sm:$0xff] %v237
    %395 = vst [vmem:[#allocation2 + $0x28] sm:$0xff] %v239
    %396 = vst [vmem:[#allocation2 + $0x30] sm:$0xff] %v350
    %397 = vst [vmem:[#allocation2 + $0x38] sm:$0xff] %v352
    %398 = vst [vmem:[#allocation2 + $0x40] sm:$0xff] %v243
    %399 = vst [vmem:[#allocation2 + $0x48] sm:$0xff] %v245
    %400 = vst [vmem:[#allocation2 + $0x50] sm:$0xff] %v356
    %401 = vst [vmem:[#allocation2 + $0x58] sm:$0xff] %v358
    %402 = vst [vmem:[#allocation2 + $0x60] sm:$0xff] %v249
    %403 = vst [vmem:[#allocation2 + $0x68] sm:$0xff] %v251
    %404 = vst [vmem:[#allocation2 + $0x70] sm:$0xff] %v362
    %405 = vst [vmem:[#allocation2 + $0x78] sm:$0xff] %v364
    %406 = vst [vmem:[#allocation2 + $0x80] sm:$0xff] %v255
    %407 = vst [vmem:[#allocation2 + $0x88] sm:$0xff] %v257
    %408 = vst [vmem:[#allocation2 + $0x90] sm:$0xff] %v368
    %409 = vst [vmem:[#allocation2 + $0x98] sm:$0xff] %v370
    %410 = vst [vmem:[#allocation2 + $0xa0] sm:$0xff] %v261
    %411 = vst [vmem:[#allocation2 + $0xa8] sm:$0xff] %v263
    %412 = vst [vmem:[#allocation2 + $0xb0] sm:$0xff] %v374
    %413 = vst [vmem:[#allocation2 + $0xb8] sm:$0xff] %v376
    %414 = vst [vmem:[#allocation2 + $0xc0] sm:$0xff] %v267
    %415 = vst [vmem:[#allocation2 + $0xc8] sm:$0xff] %v269
    %416 = vst [vmem:[#allocation2 + $0xd0] sm:$0xff] %v380
    %417 = vst [vmem:[#allocation2 + $0xd8] sm:$0xff] %v382
    %418 = vst [vmem:[#allocation2 + $0xe0] sm:$0xff] %v273
    %419 = vst [vmem:[#allocation2 + $0xe8] sm:$0xff] %v275
    %420 = vst [vmem:[#allocation2 + $0xf0] sm:$0xff] %v386
    %421 = vst [vmem:[#allocation2 + $0xf8] sm:$0xff] %v388
    %v422 = vld [vmem:[#allocation4] sm:$0xff]
    %v423 = vld [vmem:[#allocation4 + $0x8] sm:$0xff]
    %v424 = vld [vmem:[#allocation4 + $0x10] sm:$0xff]
    %v425 = vld [vmem:[#allocation4 + $0x18] sm:$0xff]
    %v426 = vld [vmem:[#allocation4 + $0x20] sm:$0xff]
    %v427 = vld [vmem:[#allocation4 + $0x28] sm:$0xff]
    %v428 = vld [vmem:[#allocation4 + $0x30] sm:$0xff]
    %v429 = vld [vmem:[#allocation4 + $0x38] sm:$0xff]
    %v430 = vld [vmem:[#allocation4 + $0x40] sm:$0xff]
    %v431 = vld [vmem:[#allocation4 + $0x48] sm:$0xff]
    %v432 = vld [vmem:[#allocation4 + $0x50] sm:$0xff]
    %v433 = vld [vmem:[#allocation4 + $0x58] sm:$0xff]
    %v434 = vld [vmem:[#allocation4 + $0x60] sm:$0xff]
    %v435 = vld [vmem:[#allocation4 + $0x68] sm:$0xff]
    %v436 = vld [vmem:[#allocation4 + $0x70] sm:$0xff]
    %v437 = vld [vmem:[#allocation4 + $0x78] sm:$0xff]
    %v438 = vld [vmem:[#allocation4 + $0x80] sm:$0xff]
    %v439 = vld [vmem:[#allocation4 + $0x88] sm:$0xff]
    %v440 = vld [vmem:[#allocation4 + $0x90] sm:$0xff]
    %v441 = vld [vmem:[#allocation4 + $0x98] sm:$0xff]
    %v442 = vld [vmem:[#allocation4 + $0xa0] sm:$0xff]
    %v443 = vld [vmem:[#allocation4 + $0xa8] sm:$0xff]
    %v444 = vld [vmem:[#allocation4 + $0xb0] sm:$0xff]
    %v445 = vld [vmem:[#allocation4 + $0xb8] sm:$0xff]
    %v446 = vld [vmem:[#allocation4 + $0xc0] sm:$0xff]
    %v447 = vld [vmem:[#allocation4 + $0xc8] sm:$0xff]
    %v448 = vld [vmem:[#allocation4 + $0xd0] sm:$0xff]
    %v449 = vld [vmem:[#allocation4 + $0xd8] sm:$0xff]
    %v450 = vld [vmem:[#allocation4 + $0xe0] sm:$0xff]
    %v451 = vld [vmem:[#allocation4 + $0xe8] sm:$0xff]
    %v452 = vld [vmem:[#allocation4 + $0xf0] sm:$0xff]
    %v453 = vld [vmem:[#allocation4 + $0xf8] sm:$0xff]
    %v454 = vld [vmem:[#allocation4 + $0x100] sm:$0xff]
    %v455 = vld [vmem:[#allocation4 + $0x108] sm:$0xff]
    %v456 = vld [vmem:[#allocation4 + $0x110] sm:$0xff]
    %v457 = vld [vmem:[#allocation4 + $0x118] sm:$0xff]
    %v458 = vld [vmem:[#allocation4 + $0x120] sm:$0xff]
    %v459 = vld [vmem:[#allocation4 + $0x128] sm:$0xff]
    %v460 = vld [vmem:[#allocation4 + $0x130] sm:$0xff]
    %v461 = vld [vmem:[#allocation4 + $0x138] sm:$0xff]
    %v462 = vld [vmem:[#allocation4 + $0x140] sm:$0xff]
    %v463 = vld [vmem:[#allocation4 + $0x148] sm:$0xff]
    %v464 = vld [vmem:[#allocation4 + $0x150] sm:$0xff]
    %v465 = vld [vmem:[#allocation4 + $0x158] sm:$0xff]
    %v466 = vld [vmem:[#allocation4 + $0x160] sm:$0xff]
    %v467 = vld [vmem:[#allocation4 + $0x168] sm:$0xff]
    %v468 = vld [vmem:[#allocation4 + $0x170] sm:$0xff]
    %v469 = vld [vmem:[#allocation4 + $0x178] sm:$0xff]
    %v470 = vld [vmem:[#allocation4 + $0x180] sm:$0xff]
    %v471 = vld [vmem:[#allocation4 + $0x188] sm:$0xff]
    %v472 = vld [vmem:[#allocation4 + $0x190] sm:$0xff]
    %v473 = vld [vmem:[#allocation4 + $0x198] sm:$0xff]
    %v474 = vld [vmem:[#allocation4 + $0x1a0] sm:$0xff]
    %v475 = vld [vmem:[#allocation4 + $0x1a8] sm:$0xff]
    %v476 = vld [vmem:[#allocation4 + $0x1b0] sm:$0xff]
    %v477 = vld [vmem:[#allocation4 + $0x1b8] sm:$0xff]
    %v478 = vld [vmem:[#allocation4 + $0x1c0] sm:$0xff]
    %v479 = vld [vmem:[#allocation4 + $0x1c8] sm:$0xff]
    %v480 = vld [vmem:[#allocation4 + $0x1d0] sm:$0xff]
    %v481 = vld [vmem:[#allocation4 + $0x1d8] sm:$0xff]
    %v482 = vld [vmem:[#allocation4 + $0x1e0] sm:$0xff]
    %v483 = vld [vmem:[#allocation4 + $0x1e8] sm:$0xff]
    %v484 = vld [vmem:[#allocation4 + $0x1f0] sm:$0xff]
    %v485 = vld [vmem:[#allocation4 + $0x1f8] sm:$0xff]
    %v486 = vld [vmem:[#allocation6] sm:$0xff]
    %v487 = vld [vmem:[#allocation6 + $0x8] sm:$0xff]
    %v488 = vld [vmem:[#allocation6 + $0x10] sm:$0xff]
    %v489 = vld [vmem:[#allocation6 + $0x18] sm:$0xff]
    %v490 = vld [vmem:[#allocation6 + $0x20] sm:$0xff]
    %v491 = vld [vmem:[#allocation6 + $0x28] sm:$0xff]
    %v492 = vld [vmem:[#allocation6 + $0x30] sm:$0xff]
    %v493 = vld [vmem:[#allocation6 + $0x38] sm:$0xff]
    %v494 = vld [vmem:[#allocation6 + $0x40] sm:$0xff]
    %v495 = vld [vmem:[#allocation6 + $0x48] sm:$0xff]
    %v496 = vld [vmem:[#allocation6 + $0x50] sm:$0xff]
    %v497 = vld [vmem:[#allocation6 + $0x58] sm:$0xff]
    %v498 = vld [vmem:[#allocation6 + $0x60] sm:$0xff]
    %v499 = vld [vmem:[#allocation6 + $0x68] sm:$0xff]
    %v500 = vld [vmem:[#allocation6 + $0x70] sm:$0xff]
    %v501 = vld [vmem:[#allocation6 + $0x78] sm:$0xff]
    %v502 = vld [vmem:[#allocation6 + $0x80] sm:$0xff]
    %v503 = vld [vmem:[#allocation6 + $0x88] sm:$0xff]
    %v504 = vld [vmem:[#allocation6 + $0x90] sm:$0xff]
    %v505 = vld [vmem:[#allocation6 + $0x98] sm:$0xff]
    %v506 = vld [vmem:[#allocation6 + $0xa0] sm:$0xff]
    %v507 = vld [vmem:[#allocation6 + $0xa8] sm:$0xff]
    %v508 = vld [vmem:[#allocation6 + $0xb0] sm:$0xff]
    %v509 = vld [vmem:[#allocation6 + $0xb8] sm:$0xff]
    %v510 = vld [vmem:[#allocation6 + $0xc0] sm:$0xff]
    %v511 = vld [vmem:[#allocation6 + $0xc8] sm:$0xff]
    %v512 = vld [vmem:[#allocation6 + $0xd0] sm:$0xff]
    %v513 = vld [vmem:[#allocation6 + $0xd8] sm:$0xff]
    %v514 = vld [vmem:[#allocation6 + $0xe0] sm:$0xff]
    %v515 = vld [vmem:[#allocation6 + $0xe8] sm:$0xff]
    %v516 = vld [vmem:[#allocation6 + $0xf0] sm:$0xff]
    %v517 = vld [vmem:[#allocation6 + $0xf8] sm:$0xff]
    %v518 = vld [vmem:[#allocation6 + $0x100] sm:$0xff]
    %v519 = vld [vmem:[#allocation6 + $0x108] sm:$0xff]
    %v520 = vld [vmem:[#allocation6 + $0x110] sm:$0xff]
    %v521 = vld [vmem:[#allocation6 + $0x118] sm:$0xff]
    %v522 = vld [vmem:[#allocation6 + $0x120] sm:$0xff]
    %v523 = vld [vmem:[#allocation6 + $0x128] sm:$0xff]
    %v524 = vld [vmem:[#allocation6 + $0x130] sm:$0xff]
    %v525 = vld [vmem:[#allocation6 + $0x138] sm:$0xff]
    %v526 = vld [vmem:[#allocation6 + $0x140] sm:$0xff]
    %v527 = vld [vmem:[#allocation6 + $0x148] sm:$0xff]
    %v528 = vld [vmem:[#allocation6 + $0x150] sm:$0xff]
    %v529 = vld [vmem:[#allocation6 + $0x158] sm:$0xff]
    %v530 = vld [vmem:[#allocation6 + $0x160] sm:$0xff]
    %v531 = vld [vmem:[#allocation6 + $0x168] sm:$0xff]
    %v532 = vld [vmem:[#allocation6 + $0x170] sm:$0xff]
    %v533 = vld [vmem:[#allocation6 + $0x178] sm:$0xff]
    %v534 = vld [vmem:[#allocation6 + $0x180] sm:$0xff]
    %v535 = vld [vmem:[#allocation6 + $0x188] sm:$0xff]
    %v536 = vld [vmem:[#allocation6 + $0x190] sm:$0xff]
    %v537 = vld [vmem:[#allocation6 + $0x198] sm:$0xff]
    %v538 = vld [vmem:[#allocation6 + $0x1a0] sm:$0xff]
    %v539 = vld [vmem:[#allocation6 + $0x1a8] sm:$0xff]
    %v540 = vld [vmem:[#allocation6 + $0x1b0] sm:$0xff]
    %v541 = vld [vmem:[#allocation6 + $0x1b8] sm:$0xff]
    %v542 = vld [vmem:[#allocation6 + $0x1c0] sm:$0xff]
    %v543 = vld [vmem:[#allocation6 + $0x1c8] sm:$0xff]
    %v544 = vld [vmem:[#allocation6 + $0x1d0] sm:$0xff]
    %v545 = vld [vmem:[#allocation6 + $0x1d8] sm:$0xff]
    %v546 = vld [vmem:[#allocation6 + $0x1e0] sm:$0xff]
    %v547 = vld [vmem:[#allocation6 + $0x1e8] sm:$0xff]
    %v548 = vld [vmem:[#allocation6 + $0x1f0] sm:$0xff]
    %v549 = vld [vmem:[#allocation6 + $0x1f8] sm:$0xff]
    %v550 = vld [vmem:[#allocation8] sm:$0xff]
    %v551 = vld [vmem:[#allocation8 + $0x8] sm:$0xff]
    %v552 = vld [vmem:[#allocation8 + $0x10] sm:$0xff]
    %v553 = vld [vmem:[#allocation8 + $0x18] sm:$0xff]
    %v554 = vld [vmem:[#allocation8 + $0x20] sm:$0xff]
    %v555 = vld [vmem:[#allocation8 + $0x28] sm:$0xff]
    %v556 = vld [vmem:[#allocation8 + $0x30] sm:$0xff]
    %v557 = vld [vmem:[#allocation8 + $0x38] sm:$0xff]
    %v558 = vld [vmem:[#allocation8 + $0x40] sm:$0xff]
    %v559 = vld [vmem:[#allocation8 + $0x48] sm:$0xff]
    %v560 = vld [vmem:[#allocation8 + $0x50] sm:$0xff]
    %v561 = vld [vmem:[#allocation8 + $0x58] sm:$0xff]
    %v562 = vld [vmem:[#allocation8 + $0x60] sm:$0xff]
    %v563 = vld [vmem:[#allocation8 + $0x68] sm:$0xff]
    %v564 = vld [vmem:[#allocation8 + $0x70] sm:$0xff]
    %v565 = vld [vmem:[#allocation8 + $0x78] sm:$0xff]
    %v566 = vld [vmem:[#allocation8 + $0x80] sm:$0xff]
    %v567 = vld [vmem:[#allocation8 + $0x88] sm:$0xff]
    %v568 = vld [vmem:[#allocation8 + $0x90] sm:$0xff]
    %v569 = vld [vmem:[#allocation8 + $0x98] sm:$0xff]
    %v570 = vld [vmem:[#allocation8 + $0xa0] sm:$0xff]
    %v571 = vld [vmem:[#allocation8 + $0xa8] sm:$0xff]
    %v572 = vld [vmem:[#allocation8 + $0xb0] sm:$0xff]
    %v573 = vld [vmem:[#allocation8 + $0xb8] sm:$0xff]
    %v574 = vld [vmem:[#allocation8 + $0xc0] sm:$0xff]
    %v575 = vld [vmem:[#allocation8 + $0xc8] sm:$0xff]
    %v576 = vld [vmem:[#allocation8 + $0xd0] sm:$0xff]
    %v577 = vld [vmem:[#allocation8 + $0xd8] sm:$0xff]
    %v578 = vld [vmem:[#allocation8 + $0xe0] sm:$0xff]
    %v579 = vld [vmem:[#allocation8 + $0xe8] sm:$0xff]
    %v580 = vld [vmem:[#allocation8 + $0xf0] sm:$0xff]
    %v581 = vld [vmem:[#allocation8 + $0xf8] sm:$0xff]
    %v582 = vld [vmem:[#allocation8 + $0x100] sm:$0xff]
    %v583 = vld [vmem:[#allocation8 + $0x108] sm:$0xff]
    %v584 = vld [vmem:[#allocation8 + $0x110] sm:$0xff]
    %v585 = vld [vmem:[#allocation8 + $0x118] sm:$0xff]
    %v586 = vld [vmem:[#allocation8 + $0x120] sm:$0xff]
    %v587 = vld [vmem:[#allocation8 + $0x128] sm:$0xff]
    %v588 = vld [vmem:[#allocation8 + $0x130] sm:$0xff]
    %v589 = vld [vmem:[#allocation8 + $0x138] sm:$0xff]
    %v590 = vld [vmem:[#allocation8 + $0x140] sm:$0xff]
    %v591 = vld [vmem:[#allocation8 + $0x148] sm:$0xff]
    %v592 = vld [vmem:[#allocation8 + $0x150] sm:$0xff]
    %v593 = vld [vmem:[#allocation8 + $0x158] sm:$0xff]
    %v594 = vld [vmem:[#allocation8 + $0x160] sm:$0xff]
    %v595 = vld [vmem:[#allocation8 + $0x168] sm:$0xff]
    %v596 = vld [vmem:[#allocation8 + $0x170] sm:$0xff]
    %v597 = vld [vmem:[#allocation8 + $0x178] sm:$0xff]
    %v598 = vld [vmem:[#allocation8 + $0x180] sm:$0xff]
    %v599 = vld [vmem:[#allocation8 + $0x188] sm:$0xff]
    %v600 = vld [vmem:[#allocation8 + $0x190] sm:$0xff]
    %v601 = vld [vmem:[#allocation8 + $0x198] sm:$0xff]
    %v602 = vld [vmem:[#allocation8 + $0x1a0] sm:$0xff]
    %v603 = vld [vmem:[#allocation8 + $0x1a8] sm:$0xff]
    %v604 = vld [vmem:[#allocation8 + $0x1b0] sm:$0xff]
    %v605 = vld [vmem:[#allocation8 + $0x1b8] sm:$0xff]
    %v606 = vld [vmem:[#allocation8 + $0x1c0] sm:$0xff]
    %v607 = vld [vmem:[#allocation8 + $0x1c8] sm:$0xff]
    %v608 = vld [vmem:[#allocation8 + $0x1d0] sm:$0xff]
    %v609 = vld [vmem:[#allocation8 + $0x1d8] sm:$0xff]
    %v610 = vld [vmem:[#allocation8 + $0x1e0] sm:$0xff]
    %v611 = vld [vmem:[#allocation8 + $0x1e8] sm:$0xff]
    %v612 = vld [vmem:[#allocation8 + $0x1f0] sm:$0xff]
    %v613 = vld [vmem:[#allocation8 + $0x1f8] sm:$0xff]
    %v614 = vld [vmem:[%s6] sm:$0xf]
    %v616 = vlaneseq
    %v617 = vshrl.u32 %v616, 7
    %v618 = vsub.s32 0, %v617
    %v619 = vrot.slane %v614, %v618
    %v620 = vlaneseq
    %v621 = vshrl.u32 %v620, 7
    %v622 = vsub.s32 1, %v621
    %v623 = vrot.slane %v614, %v622
    %v624 = vlaneseq
    %v625 = vshrl.u32 %v624, 7
    %v626 = vsub.s32 2, %v625
    %v627 = vrot.slane %v614, %v626
    %v628 = vlaneseq
    %v629 = vshrl.u32 %v628, 7
    %v630 = vsub.s32 3, %v629
    %v631 = vrot.slane %v614, %v630
    %v636 = vld [vmem:[#allocation2] sm:$0xff]
    %v637 = vld [vmem:[#allocation2 + $0x8] sm:$0xff]
    %v638 = vld [vmem:[#allocation2 + $0x10] sm:$0xff]
    %v639 = vld [vmem:[#allocation2 + $0x18] sm:$0xff]
    %640 = vmatprep.subr.mxu0 %v423
    %641 = vmatpush1.msra.mxu0 %v422
    %642 = vmatprep.subr.mxu0 %v427
    %643 = vmatpush1.msra.mxu0 %v426
    %644 = vmatprep.subr.mxu0 %v431
    %645 = vmatpush1.msra.mxu0 %v430
    %646 = vmatprep.subr.mxu0 %v435
    %647 = vmatpush1.msra.mxu0 %v434
    %648 = vmatprep.subr.mxu0 %v439
    %649 = vmatpush1.msra.mxu0 %v438
    %650 = vmatprep.subr.mxu0 %v443
    %651 = vmatpush1.msra.mxu0 %v442
    %652 = vmatprep.subr.mxu0 %v447
    %653 = vmatpush1.msra.mxu0 %v446
    %654 = vmatprep.subr.mxu0 %v451
    %655 = vmatpush1.msra.mxu0 %v450
    %656 = vmatprep.subr.mxu0 %v455
    %657 = vmatpush1.msra.mxu0 %v454
    %658 = vmatprep.subr.mxu0 %v459
    %659 = vmatpush1.msra.mxu0 %v458
    %660 = vmatprep.subr.mxu0 %v463
    %661 = vmatpush1.msra.mxu0 %v462
    %662 = vmatprep.subr.mxu0 %v467
    %663 = vmatpush1.msra.mxu0 %v466
    %664 = vmatprep.subr.mxu0 %v471
    %665 = vmatpush1.msra.mxu0 %v470
    %666 = vmatprep.subr.mxu0 %v475
    %667 = vmatpush1.msra.mxu0 %v474
    %668 = vmatprep.subr.mxu0 %v479
    %669 = vmatpush1.msra.mxu0 %v478
    %670 = vmatprep.subr.mxu0 %v483
    %671 = vmatpush1.msra.mxu0 %v482
    %672 = vmatprep.subr.mxu0 0.0
    %673 = vmatpush1.msra.mxu0 0.0
    %674 = vmatprep.subr.mxu0 0.0
    %675 = vmatpush1.msra.mxu0 0.0
    %676 = vmatprep.subr.mxu0 0.0
    %677 = vmatpush1.msra.mxu0 0.0
    %678 = vmatprep.subr.mxu0 0.0
    %679 = vmatpush1.msra.mxu0 0.0
    %680 = vmatprep.subr.mxu0 0.0
    %681 = vmatpush1.msra.mxu0 0.0
    %682 = vmatprep.subr.mxu0 0.0
    %683 = vmatpush1.msra.mxu0 0.0
    %684 = vmatprep.subr.mxu0 0.0
    %685 = vmatpush1.msra.mxu0 0.0
    %686 = vmatprep.subr.mxu0 0.0
    %687 = vmatpush1.msra.mxu0 0.0
    %688 = vmatprep.subr.mxu0 0.0
    %689 = vmatpush1.msra.mxu0 0.0
    %690 = vmatprep.subr.mxu0 0.0
    %691 = vmatpush1.msra.mxu0 0.0
    %692 = vmatprep.subr.mxu0 0.0
    %693 = vmatpush1.msra.mxu0 0.0
    %694 = vmatprep.subr.mxu0 0.0
    %695 = vmatpush1.msra.mxu0 0.0
    %696 = vmatprep.subr.mxu0 0.0
    %697 = vmatpush1.msra.mxu0 0.0
    %698 = vmatprep.subr.mxu0 0.0
    %699 = vmatpush1.msra.mxu0 0.0
    %700 = vmatprep.subr.mxu0 0.0
    %701 = vmatpush1.msra.mxu0 0.0
    %702 = vmatprep.subr.mxu0 0.0
    %703 = vmatpush1.msra.mxu0 0.0
    %704 = vmatprep.mubr.f32.mxu0 0.0
    %705 = vmatmul.mubr.f32.gmra.mrb[0].mxu0 0.0
    %v706 = vpop.f32.mrb[0].mxu0
    %v707 = vadd.f32 0.0, %v706
    %v708 = vpop.f32.mrb[0].mxu0
    %v709 = vadd.f32 0.0, %v708
    %710 = vdwg.mxu0
    %711 = vmatprep.subr.mxu0 %v425
    %712 = vmatpush1.msra.mxu0 %v424
    %713 = vmatprep.subr.mxu0 %v429
    %714 = vmatpush1.msra.mxu0 %v428
    %715 = vmatprep.subr.mxu0 %v433
    %716 = vmatpush1.msra.mxu0 %v432
    %717 = vmatprep.subr.mxu0 %v437
    %718 = vmatpush1.msra.mxu0 %v436
    %719 = vmatprep.subr.mxu0 %v441
    %720 = vmatpush1.msra.mxu0 %v440
    %721 = vmatprep.subr.mxu0 %v445
    %722 = vmatpush1.msra.mxu0 %v444
    %723 = vmatprep.subr.mxu0 %v449
    %724 = vmatpush1.msra.mxu0 %v448
    %725 = vmatprep.subr.mxu0 %v453
    %726 = vmatpush1.msra.mxu0 %v452
    %727 = vmatprep.subr.mxu0 %v457
    %728 = vmatpush1.msra.mxu0 %v456
    %729 = vmatprep.subr.mxu0 %v461
    %730 = vmatpush1.msra.mxu0 %v460
    %731 = vmatprep.subr.mxu0 %v465
    %732 = vmatpush1.msra.mxu0 %v464
    %733 = vmatprep.subr.mxu0 %v469
    %734 = vmatpush1.msra.mxu0 %v468
    %735 = vmatprep.subr.mxu0 %v473
    %736 = vmatpush1.msra.mxu0 %v472
    %737 = vmatprep.subr.mxu0 %v477
    %738 = vmatpush1.msra.mxu0 %v476
    %739 = vmatprep.subr.mxu0 %v481
    %740 = vmatpush1.msra.mxu0 %v480
    %741 = vmatprep.subr.mxu0 %v485
    %742 = vmatpush1.msra.mxu0 %v484
    %743 = vmatprep.subr.mxu0 0.0
    %744 = vmatpush1.msra.mxu0 0.0
    %745 = vmatprep.subr.mxu0 0.0
    %746 = vmatpush1.msra.mxu0 0.0
    %747 = vmatprep.subr.mxu0 0.0
    %748 = vmatpush1.msra.mxu0 0.0
    %749 = vmatprep.subr.mxu0 0.0
    %750 = vmatpush1.msra.mxu0 0.0
    %751 = vmatprep.subr.mxu0 0.0
    %752 = vmatpush1.msra.mxu0 0.0
    %753 = vmatprep.subr.mxu0 0.0
    %754 = vmatpush1.msra.mxu0 0.0
    %755 = vmatprep.subr.mxu0 0.0
    %756 = vmatpush1.msra.mxu0 0.0
    %757 = vmatprep.subr.mxu0 0.0
    %758 = vmatpush1.msra.mxu0 0.0
    %759 = vmatprep.subr.mxu0 0.0
    %760 = vmatpush1.msra.mxu0 0.0
    %761 = vmatprep.subr.mxu0 0.0
    %762 = vmatpush1.msra.mxu0 0.0
    %763 = vmatprep.subr.mxu0 0.0
    %764 = vmatpush1.msra.mxu0 0.0
    %765 = vmatprep.subr.mxu0 0.0
    %766 = vmatpush1.msra.mxu0 0.0
    %767 = vmatprep.subr.mxu0 0.0
    %768 = vmatpush1.msra.mxu0 0.0
    %769 = vmatprep.subr.mxu0 0.0
    %770 = vmatpush1.msra.mxu0 0.0
    %771 = vmatprep.subr.mxu0 0.0
    %772 = vmatpush1.msra.mxu0 0.0
    %773 = vmatprep.subr.mxu0 0.0
    %774 = vmatpush1.msra.mxu0 0.0
    %775 = vmatprep.mubr.f32.mxu0 0.0
    %776 = vmatmul.mubr.f32.gmra.mrb[0].mxu0 0.0
    %v777 = vpop.f32.mrb[0].mxu0
    %v778 = vadd.f32 0.0, %v777
    %v779 = vpop.f32.mrb[0].mxu0
    %v780 = vadd.f32 0.0, %v779
    %781 = vdwg.mxu0
    %v782 = vadd.f32 %v636, %v707
    %v783 = vadd.f32 %v637, %v709
    %v784 = vadd.f32 %v638, %v778
    %v785 = vadd.f32 %v639, %v780
    %v786 = vmul.f32 %v782, 0.5
    %v787 = vtanh.pop %v786
    %v788 = vmul.f32 %v787, 0.5
    %v789 = vadd.f32 %v788, 0.5
    %v790 = vmul.f32 %v783, 0.5
    %v791 = vtanh.pop %v790
    %v792 = vmul.f32 %v791, 0.5
    %v793 = vadd.f32 %v792, 0.5
    %v794 = vtanh.pop %v784
    %v795 = vmul.f32 %v785, 0.5
    %v796 = vtanh.pop %v795
    %v797 = vmul.f32 %v796, 0.5
    %v798 = vadd.f32 %v797, 0.5
    %v799 = vmul.f32 %v793, 0.0
    %v800 = vmul.f32 %v789, %v794
    %v801 = vadd.f32 %v799, %v800
    %v802 = vtanh.pop %v801
    %v803 = vmul.f32 %v798, %v802
    %v804 = vmax.f32 %v803, 0.0
    %805 = vmatprep.subr.mxu0 %v551
    %806 = vmatpush1.msra.mxu0 %v550
    %807 = vmatprep.subr.mxu0 %v555
    %808 = vmatpush1.msra.mxu0 %v554
    %809 = vmatprep.subr.mxu0 %v559
    %810 = vmatpush1.msra.mxu0 %v558
    %811 = vmatprep.subr.mxu0 %v563
    %812 = vmatpush1.msra.mxu0 %v562
    %813 = vmatprep.subr.mxu0 %v567
    %814 = vmatpush1.msra.mxu0 %v566
    %815 = vmatprep.subr.mxu0 %v571
    %816 = vmatpush1.msra.mxu0 %v570
    %817 = vmatprep.subr.mxu0 %v575
    %818 = vmatpush1.msra.mxu0 %v574
    %819 = vmatprep.subr.mxu0 %v579
    %820 = vmatpush1.msra.mxu0 %v578
    %821 = vmatprep.subr.mxu0 %v583
    %822 = vmatpush1.msra.mxu0 %v582
    %823 = vmatprep.subr.mxu0 %v587
    %824 = vmatpush1.msra.mxu0 %v586
    %825 = vmatprep.subr.mxu0 %v591
    %826 = vmatpush1.msra.mxu0 %v590
    %827 = vmatprep.subr.mxu0 %v595
    %828 = vmatpush1.msra.mxu0 %v594
    %829 = vmatprep.subr.mxu0 %v599
    %830 = vmatpush1.msra.mxu0 %v598
    %831 = vmatprep.subr.mxu0 %v603
    %832 = vmatpush1.msra.mxu0 %v602
    %833 = vmatprep.subr.mxu0 %v607
    %834 = vmatpush1.msra.mxu0 %v606
    %835 = vmatprep.subr.mxu0 %v611
    %836 = vmatpush1.msra.mxu0 %v610
    %837 = vmatprep.subr.mxu0 0.0
    %838 = vmatpush1.msra.mxu0 0.0
    %839 = vmatprep.subr.mxu0 0.0
    %840 = vmatpush1.msra.mxu0 0.0
    %841 = vmatprep.subr.mxu0 0.0
    %842 = vmatpush1.msra.mxu0 0.0
    %843 = vmatprep.subr.mxu0 0.0
    %844 = vmatpush1.msra.mxu0 0.0
    %845 = vmatprep.subr.mxu0 0.0
    %846 = vmatpush1.msra.mxu0 0.0
    %847 = vmatprep.subr.mxu0 0.0
    %848 = vmatpush1.msra.mxu0 0.0
    %849 = vmatprep.subr.mxu0 0.0
    %850 = vmatpush1.msra.mxu0 0.0
    %851 = vmatprep.subr.mxu0 0.0
    %852 = vmatpush1.msra.mxu0 0.0
    %853 = vmatprep.subr.mxu0 0.0
    %854 = vmatpush1.msra.mxu0 0.0
    %855 = vmatprep.subr.mxu0 0.0
    %856 = vmatpush1.msra.mxu0 0.0
    %857 = vmatprep.subr.mxu0 0.0
    %858 = vmatpush1.msra.mxu0 0.0
    %859 = vmatprep.subr.mxu0 0.0
    %860 = vmatpush1.msra.mxu0 0.0
    %861 = vmatprep.subr.mxu0 0.0
    %862 = vmatpush1.msra.mxu0 0.0
    %863 = vmatprep.subr.mxu0 0.0
    %864 = vmatpush1.msra.mxu0 0.0
    %865 = vmatprep.subr.mxu0 0.0
    %866 = vmatpush1.msra.mxu0 0.0
    %867 = vmatprep.subr.mxu0 0.0
    %868 = vmatpush1.msra.mxu0 0.0
    %869 = vmatprep.mubr.f32.mxu0 0.0
    %870 = vmatmul.mubr.f32.gmra.mrb[0].mxu0 0.0
    %v871 = vpop.f32.mrb[0].mxu0
    %v872 = vadd.f32 0.0, %v871
    %v873 = vpop.f32.mrb[0].mxu0
    %v874 = vadd.f32 0.0, %v873
    %875 = vdwg.mxu0
    %876 = vmatprep.subr.mxu0 %v553
    %877 = vmatpush1.msra.mxu0 %v552
    %878 = vmatprep.subr.mxu0 %v557
    %879 = vmatpush1.msra.mxu0 %v556
    %880 = vmatprep.subr.mxu0 %v561
    %881 = vmatpush1.msra.mxu0 %v560
    %882 = vmatprep.subr.mxu0 %v565
    %883 = vmatpush1.msra.mxu0 %v564
    %884 = vmatprep.subr.mxu0 %v569
    %885 = vmatpush1.msra.mxu0 %v568
    %886 = vmatprep.subr.mxu0 %v573
    %887 = vmatpush1.msra.mxu0 %v572
    %888 = vmatprep.subr.mxu0 %v577
    %889 = vmatpush1.msra.mxu0 %v576
    %890 = vmatprep.subr.mxu0 %v581
    %891 = vmatpush1.msra.mxu0 %v580
    %892 = vmatprep.subr.mxu0 %v585
    %893 = vmatpush1.msra.mxu0 %v584
    %894 = vmatprep.subr.mxu0 %v589
    %895 = vmatpush1.msra.mxu0 %v588
    %896 = vmatprep.subr.mxu0 %v593
    %897 = vmatpush1.msra.mxu0 %v592
    %898 = vmatprep.subr.mxu0 %v597
    %899 = vmatpush1.msra.mxu0 %v596
    %900 = vmatprep.subr.mxu0 %v601
    %901 = vmatpush1.msra.mxu0 %v600
    %902 = vmatprep.subr.mxu0 %v605
    %903 = vmatpush1.msra.mxu0 %v604
    %904 = vmatprep.subr.mxu0 %v609
    %905 = vmatpush1.msra.mxu0 %v608
    %906 = vmatprep.subr.mxu0 %v613
    %907 = vmatpush1.msra.mxu0 %v612
    %908 = vmatprep.subr.mxu0 0.0
    %909 = vmatpush1.msra.mxu0 0.0
    %910 = vmatprep.subr.mxu0 0.0
    %911 = vmatpush1.msra.mxu0 0.0
    %912 = vmatprep.subr.mxu0 0.0
    %913 = vmatpush1.msra.mxu0 0.0
    %914 = vmatprep.subr.mxu0 0.0
    %915 = vmatpush1.msra.mxu0 0.0
    %916 = vmatprep.subr.mxu0 0.0
    %917 = vmatpush1.msra.mxu0 0.0
    %918 = vmatprep.subr.mxu0 0.0
    %919 = vmatpush1.msra.mxu0 0.0
    %920 = vmatprep.subr.mxu0 0.0
    %921 = vmatpush1.msra.mxu0 0.0
    %922 = vmatprep.subr.mxu0 0.0
    %923 = vmatpush1.msra.mxu0 0.0
    %924 = vmatprep.subr.mxu0 0.0
    %925 = vmatpush1.msra.mxu0 0.0
    %926 = vmatprep.subr.mxu0 0.0
    %927 = vmatpush1.msra.mxu0 0.0
    %928 = vmatprep.subr.mxu0 0.0
    %929 = vmatpush1.msra.mxu0 0.0
    %930 = vmatprep.subr.mxu0 0.0
    %931 = vmatpush1.msra.mxu0 0.0
    %932 = vmatprep.subr.mxu0 0.0
    %933 = vmatpush1.msra.mxu0 0.0
    %934 = vmatprep.subr.mxu0 0.0
    %935 = vmatpush1.msra.mxu0 0.0
    %936 = vmatprep.subr.mxu0 0.0
    %937 = vmatpush1.msra.mxu0 0.0
    %938 = vmatprep.subr.mxu0 0.0
    %939 = vmatpush1.msra.mxu0 0.0
    %940 = vmatprep.mubr.f32.mxu0 0.0
    %941 = vmatmul.mubr.f32.gmra.mrb[0].mxu0 0.0
    %v942 = vpop.f32.mrb[0].mxu0
    %v943 = vadd.f32 0.0, %v942
    %v944 = vpop.f32.mrb[0].mxu0
    %v945 = vadd.f32 0.0, %v944
    %946 = vdwg.mxu0
    %947 = vmatprep.subr.mxu0 %v487
    %948 = vmatpush1.msra.mxu0 %v486
    %949 = vmatprep.subr.mxu0 %v491
    %950 = vmatpush1.msra.mxu0 %v490
    %951 = vmatprep.subr.mxu0 %v495
    %952 = vmatpush1.msra.mxu0 %v494
    %953 = vmatprep.subr.mxu0 %v499
    %954 = vmatpush1.msra.mxu0 %v498
    %955 = vmatprep.subr.mxu0 %v503
    %956 = vmatpush1.msra.mxu0 %v502
    %957 = vmatprep.subr.mxu0 %v507
    %958 = vmatpush1.msra.mxu0 %v506
    %959 = vmatprep.subr.mxu0 %v511
    %960 = vmatpush1.msra.mxu0 %v510
    %961 = vmatprep.subr.mxu0 %v515
    %962 = vmatpush1.msra.mxu0 %v514
    %963 = vmatprep.subr.mxu0 %v519
    %964 = vmatpush1.msra.mxu0 %v518
    %965 = vmatprep.subr.mxu0 %v523
    %966 = vmatpush1.msra.mxu0 %v522
    %967 = vmatprep.subr.mxu0 %v527
    %968 = vmatpush1.msra.mxu0 %v526
    %969 = vmatprep.subr.mxu0 %v531
    %970 = vmatpush1.msra.mxu0 %v530
    %971 = vmatprep.subr.mxu0 %v535
    %972 = vmatpush1.msra.mxu0 %v534
    %973 = vmatprep.subr.mxu0 %v539
    %974 = vmatpush1.msra.mxu0 %v538
    %975 = vmatprep.subr.mxu0 %v543
    %976 = vmatpush1.msra.mxu0 %v542
    %977 = vmatprep.subr.mxu0 %v547
    %978 = vmatpush1.msra.mxu0 %v546
    %979 = vmatprep.subr.mxu0 0.0
    %980 = vmatpush1.msra.mxu0 0.0
    %981 = vmatprep.subr.mxu0 0.0
    %982 = vmatpush1.msra.mxu0 0.0
    %983 = vmatprep.subr.mxu0 0.0
    %984 = vmatpush1.msra.mxu0 0.0
    %985 = vmatprep.subr.mxu0 0.0
    %986 = vmatpush1.msra.mxu0 0.0
    %987 = vmatprep.subr.mxu0 0.0
    %988 = vmatpush1.msra.mxu0 0.0
    %989 = vmatprep.subr.mxu0 0.0
    %990 = vmatpush1.msra.mxu0 0.0
    %991 = vmatprep.subr.mxu0 0.0
    %992 = vmatpush1.msra.mxu0 0.0
    %993 = vmatprep.subr.mxu0 0.0
    %994 = vmatpush1.msra.mxu0 0.0
    %995 = vmatprep.subr.mxu0 0.0
    %996 = vmatpush1.msra.mxu0 0.0
    %997 = vmatprep.subr.mxu0 0.0
    %998 = vmatpush1.msra.mxu0 0.0
    %999 = vmatprep.subr.mxu0 0.0
    %1000 = vmatpush1.msra.mxu0 0.0
    %1001 = vmatprep.subr.mxu0 0.0
    %1002 = vmatpush1.msra.mxu0 0.0
    %1003 = vmatprep.subr.mxu0 0.0
    %1004 = vmatpush1.msra.mxu0 0.0
    %1005 = vmatprep.subr.mxu0 0.0
    %1006 = vmatpush1.msra.mxu0 0.0
    %1007 = vmatprep.subr.mxu0 0.0
    %1008 = vmatpush1.msra.mxu0 0.0
    %1009 = vmatprep.subr.mxu0 0.0
    %1010 = vmatpush1.msra.mxu0 0.0
    %1011 = vmatprep.mubr.f32.mxu0 0.0
    %1012 = vmatmul.mubr.f32.gmra.mrb[0].mxu0 %v804
    %v1013 = vpop.f32.mrb[0].mxu0
    %v1014 = vadd.f32 %v872, %v1013
    %v1015 = vpop.f32.mrb[0].mxu0
    %v1016 = vadd.f32 %v874, %v1015
    %1017 = vdwg.mxu0
    %1018 = vmatprep.subr.mxu0 %v489
    %1019 = vmatpush1.msra.mxu0 %v488
    %1020 = vmatprep.subr.mxu0 %v493
    %1021 = vmatpush1.msra.mxu0 %v492
    %1022 = vmatprep.subr.mxu0 %v497
    %1023 = vmatpush1.msra.mxu0 %v496
    %1024 = vmatprep.subr.mxu0 %v501
    %1025 = vmatpush1.msra.mxu0 %v500
    %1026 = vmatprep.subr.mxu0 %v505
    %1027 = vmatpush1.msra.mxu0 %v504
    %1028 = vmatprep.subr.mxu0 %v509
    %1029 = vmatpush1.msra.mxu0 %v508
    %1030 = vmatprep.subr.mxu0 %v513
    %1031 = vmatpush1.msra.mxu0 %v512
    %1032 = vmatprep.subr.mxu0 %v517
    %1033 = vmatpush1.msra.mxu0 %v516
    %1034 = vmatprep.subr.mxu0 %v521
    %1035 = vmatpush1.msra.mxu0 %v520
    %1036 = vmatprep.subr.mxu0 %v525
    %1037 = vmatpush1.msra.mxu0 %v524
    %1038 = vmatprep.subr.mxu0 %v529
    %1039 = vmatpush1.msra.mxu0 %v528
    %1040 = vmatprep.subr.mxu0 %v533
    %1041 = vmatpush1.msra.mxu0 %v532
    %1042 = vmatprep.subr.mxu0 %v537
    %1043 = vmatpush1.msra.mxu0 %v536
    %1044 = vmatprep.subr.mxu0 %v541
    %1045 = vmatpush1.msra.mxu0 %v540
    %1046 = vmatprep.subr.mxu0 %v545
    %1047 = vmatpush1.msra.mxu0 %v544
    %1048 = vmatprep.subr.mxu0 %v549
    %1049 = vmatpush1.msra.mxu0 %v548
    %1050 = vmatprep.subr.mxu0 0.0
    %1051 = vmatpush1.msra.mxu0 0.0
    %1052 = vmatprep.subr.mxu0 0.0
    %1053 = vmatpush1.msra.mxu0 0.0
    %1054 = vmatprep.subr.mxu0 0.0
    %1055 = vmatpush1.msra.mxu0 0.0
    %1056 = vmatprep.subr.mxu0 0.0
    %1057 = vmatpush1.msra.mxu0 0.0
    %1058 = vmatprep.subr.mxu0 0.0
    %1059 = vmatpush1.msra.mxu0 0.0
    %1060 = vmatprep.subr.mxu0 0.0
    %1061 = vmatpush1.msra.mxu0 0.0
    %1062 = vmatprep.subr.mxu0 0.0
    %1063 = vmatpush1.msra.mxu0 0.0
    %1064 = vmatprep.subr.mxu0 0.0
    %1065 = vmatpush1.msra.mxu0 0.0
    %1066 = vmatprep.subr.mxu0 0.0
    %1067 = vmatpush1.msra.mxu0 0.0
    %1068 = vmatprep.subr.mxu0 0.0
    %1069 = vmatpush1.msra.mxu0 0.0
    %1070 = vmatprep.subr.mxu0 0.0
    %1071 = vmatpush1.msra.mxu0 0.0
    %1072 = vmatprep.subr.mxu0 0.0
    %1073 = vmatpush1.msra.mxu0 0.0
    %1074 = vmatprep.subr.mxu0 0.0
    %1075 = vmatpush1.msra.mxu0 0.0
    %1076 = vmatprep.subr.mxu0 0.0
    %1077 = vmatpush1.msra.mxu0 0.0
    %1078 = vmatprep.subr.mxu0 0.0
    %1079 = vmatpush1.msra.mxu0 0.0
    %1080 = vmatprep.subr.mxu0 0.0
    %1081 = vmatpush1.msra.mxu0 0.0
    %1082 = vmatprep.mubr.f32.mxu0 0.0
    %1083 = vmatmul.mubr.f32.gmra.mrb[0].mxu0 %v804
    %v1084 = vpop.f32.mrb[0].mxu0
    %v1085 = vadd.f32 %v943, %v1084
    %v1086 = vpop.f32.mrb[0].mxu0
    %v1087 = vadd.f32 %v945, %v1086
    %1088 = vdwg.mxu0
    %v1089 = vadd.f32 %v1014, %v619
    %v1090 = vadd.f32 %v1016, %v623
    %v1091 = vadd.f32 %v1085, %v627
    %v1092 = vadd.f32 %v1087, %v631
    %v1093 = vmul.f32 %v1089, 0.5
    %v1094 = vtanh.pop %v1093
    %v1095 = vmul.f32 %v1094, 0.5
    %v1096 = vadd.f32 %v1095, 0.5
    %v1097 = vmul.f32 %v1090, 0.5
    %v1098 = vtanh.pop %v1097
    %v1099 = vmul.f32 %v1098, 0.5
    %v1100 = vadd.f32 %v1099, 0.5
    %v1101 = vtanh.pop %v1091
    %v1102 = vmul.f32 %v1092, 0.5
    %v1103 = vtanh.pop %v1102
    %v1104 = vmul.f32 %v1103, 0.5
    %v1105 = vadd.f32 %v1104, 0.5
    %v1106 = vmul.f32 %v1100, 0.0
    %v1107 = vmul.f32 %v1096, %v1101
    %v1108 = vadd.f32 %v1106, %v1107
    %v1109 = vtanh.pop %v1108
    %v1110 = vmul.f32 %v1105, %v1109
    %v1111 = vmax.f32 %v1110, 0.0
    %1112 = vst [vmem:[#allocation3] sm:$0xff] %v1111
    %v1113 = vld [vmem:[#allocation2 + $0x20] sm:$0xff]
    %v1114 = vld [vmem:[#allocation2 + $0x28] sm:$0xff]
    %v1115 = vld [vmem:[#allocation2 + $0x30] sm:$0xff]
    %v1116 = vld [vmem:[#allocation2 + $0x38] sm:$0xff]
    %1117 = vmatprep.subr.mxu0 %v423
    %1118 = vmatpush1.msra.mxu0 %v422
    %1119 = vmatprep.subr.mxu0 %v427
    %1120 = vmatpush1.msra.mxu0 %v426
    %1121 = vmatprep.subr.mxu0 %v431
    %1122 = vmatpush1.msra.mxu0 %v430
    %1123 = vmatprep.subr.mxu0 %v435
    %1124 = vmatpush1.msra.mxu0 %v434
    %1125 = vmatprep.subr.mxu0 %v439
    %1126 = vmatpush1.msra.mxu0 %v438
    %1127 = vmatprep.subr.mxu0 %v443
    %1128 = vmatpush1.msra.mxu0 %v442
    %1129 = vmatprep.subr.mxu0 %v447
    %1130 = vmatpush1.msra.mxu0 %v446
    %1131 = vmatprep.subr.mxu0 %v451
    %1132 = vmatpush1.msra.mxu0 %v450
    %1133 = vmatprep.subr.mxu0 %v455
    %1134 = vmatpush1.msra.mxu0 %v454
    %1135 = vmatprep.subr.mxu0 %v459
    %1136 = vmatpush1.msra.mxu0 %v458
    %1137 = vmatprep.subr.mxu0 %v463
    %1138 = vmatpush1.msra.mxu0 %v462
    %1139 = vmatprep.subr.mxu0 %v467
    %1140 = vmatpush1.msra.mxu0 %v466
    %1141 = vmatprep.subr.mxu0 %v471
    %1142 = vmatpush1.msra.mxu0 %v470
    %1143 = vmatprep.subr.mxu0 %v475
    %1144 = vmatpush1.msra.mxu0 %v474
    %1145 = vmatprep.subr.mxu0 %v479
    %1146 = vmatpush1.msra.mxu0 %v478
    %1147 = vmatprep.subr.mxu0 %v483
    %1148 = vmatpush1.msra.mxu0 %v482
    %1149 = vmatprep.subr.mxu0 0.0
    %1150 = vmatpush1.msra.mxu0 0.0
    %1151 = vmatprep.subr.mxu0 0.0
    %1152 = vmatpush1.msra.mxu0 0.0
    %1153 = vmatprep.subr.mxu0 0.0
    %1154 = vmatpush1.msra.mxu0 0.0
    %1155 = vmatprep.subr.mxu0 0.0
    %1156 = vmatpush1.msra.mxu0 0.0
    %1157 = vmatprep.subr.mxu0 0.0
    %1158 = vmatpush1.msra.mxu0 0.0
    %1159 = vmatprep.subr.mxu0 0.0
    %1160 = vmatpush1.msra.mxu0 0.0
    %1161 = vmatprep.subr.mxu0 0.0
    %1162 = vmatpush1.msra.mxu0 0.0
    %1163 = vmatprep.subr.mxu0 0.0
    %1164 = vmatpush1.msra.mxu0 0.0
    %1165 = vmatprep.subr.mxu0 0.0
    %1166 = vmatpush1.msra.mxu0 0.0
    %1167 = vmatprep.subr.mxu0 0.0
    %1168 = vmatpush1.msra.mxu0 0.0
    %1169 = vmatprep.subr.mxu0 0.0
    %1170 = vmatpush1.msra.mxu0 0.0
    %1171 = vmatprep.subr.mxu0 0.0
    %1172 = vmatpush1.msra.mxu0 0.0
    %1173 = vmatprep.subr.mxu0 0.0
    %1174 = vmatpush1.msra.mxu0 0.0
    %1175 = vmatprep.subr.mxu0 0.0
    %1176 = vmatpush1.msra.mxu0 0.0
    %1177 = vmatprep.subr.mxu0 0.0
    %1178 = vmatpush1.msra.mxu0 0.0
    %1179 = vmatprep.subr.mxu0 0.0
    %1180 = vmatpush1.msra.mxu0 0.0
    %1181 = vmatprep.mubr.f32.mxu0 0.0
    %1182 = vmatmul.mubr.f32.gmra.mrb[0].mxu0 %v803
    %v1183 = vpop.f32.mrb[0].mxu0
    %v1184 = vadd.f32 0.0, %v1183
    %v1185 = vpop.f32.mrb[0].mxu0
    %v1186 = vadd.f32 0.0, %v1185
    %1187 = vdwg.mxu0
    %1188 = vmatprep.subr.mxu0 %v425
    %1189 = vmatpush1.msra.mxu0 %v424
    %1190 = vmatprep.subr.mxu0 %v429
    %1191 = vmatpush1.msra.mxu0 %v428
    %1192 = vmatprep.subr.mxu0 %v433
    %1193 = vmatpush1.msra.mxu0 %v432
    %1194 = vmatprep.subr.mxu0 %v437
    %1195 = vmatpush1.msra.mxu0 %v436
    %1196 = vmatprep.subr.mxu0 %v441
    %1197 = vmatpush1.msra.mxu0 %v440
    %1198 = vmatprep.subr.mxu0 %v445
    %1199 = vmatpush1.msra.mxu0 %v444
    %1200 = vmatprep.subr.mxu0 %v449
    %1201 = vmatpush1.msra.mxu0 %v448
    %1202 = vmatprep.subr.mxu0 %v453
    %1203 = vmatpush1.msra.mxu0 %v452
    %1204 = vmatprep.subr.mxu0 %v457
    %1205 = vmatpush1.msra.mxu0 %v456
    %1206 = vmatprep.subr.mxu0 %v461
    %1207 = vmatpush1.msra.mxu0 %v460
    %1208 = vmatprep.subr.mxu0 %v465
    %1209 = vmatpush1.msra.mxu0 %v464
    %1210 = vmatprep.subr.mxu0 %v469
    %1211 = vmatpush1.msra.mxu0 %v468
    %1212 = vmatprep.subr.mxu0 %v473
    %1213 = vmatpush1.msra.mxu0 %v472
    %1214 = vmatprep.subr.mxu0 %v477
    %1215 = vmatpush1.msra.mxu0 %v476
    %1216 = vmatprep.subr.mxu0 %v481
    %1217 = vmatpush1.msra.mxu0 %v480
    %1218 = vmatprep.subr.mxu0 %v485
    %1219 = vmatpush1.msra.mxu0 %v484
    %1220 = vmatprep.subr.mxu0 0.0
    %1221 = vmatpush1.msra.mxu0 0.0
    %1222 = vmatprep.subr.mxu0 0.0
    %1223 = vmatpush1.msra.mxu0 0.0
    %1224 = vmatprep.subr.mxu0 0.0
    %1225 = vmatpush1.msra.mxu0 0.0
    %1226 = vmatprep.subr.mxu0 0.0
    %1227 = vmatpush1.msra.mxu0 0.0
    %1228 = vmatprep.subr.mxu0 0.0
    %1229 = vmatpush1.msra.mxu0 0.0
    %1230 = vmatprep.subr.mxu0 0.0
    %1231 = vmatpush1.msra.mxu0 0.0
    %1232 = vmatprep.subr.mxu0 0.0
    %1233 = vmatpush1.msra.mxu0 0.0
    %1234 = vmatprep.subr.mxu0 0.0
    %1235 = vmatpush1.msra.mxu0 0.0
    %1236 = vmatprep.subr.mxu0 0.0
    %1237 = vmatpush1.msra.mxu0 0.0
    %1238 = vmatprep.subr.mxu0 0.0
    %1239 = vmatpush1.msra.mxu0 0.0
    %1240 = vmatprep.subr.mxu0 0.0
    %1241 = vmatpush1.msra.mxu0 0.0
    %1242 = vmatprep.subr.mxu0 0.0
    %1243 = vmatpush1.msra.mxu0 0.0
    %1244 = vmatprep.subr.mxu0 0.0
    %1245 = vmatpush1.msra.mxu0 0.0
    %1246 = vmatprep.subr.mxu0 0.0
    %1247 = vmatpush1.msra.mxu0 0.0
    %1248 = vmatprep.subr.mxu0 0.0
    %1249 = vmatpush1.msra.mxu0 0.0
    %1250 = vmatprep.subr.mxu0 0.0
    %1251 = vmatpush1.msra.mxu0 0.0
    %1252 = vmatprep.mubr.f32.mxu0 0.0
    %1253 = vmatmul.mubr.f32.gmra.mrb[0].mxu0 %v803
    %v1254 = vpop.f32.mrb[0].mxu0
    %v1255 = vadd.f32 0.0, %v1254
    %v1256 = vpop.f32.mrb[0].mxu0
    %v1257 = vadd.f32 0.0, %v1256
    %1258 = vdwg.mxu0
    %v1259 = vadd.f32 %v1113, %v1184
    %v1260 = vadd.f32 %v1114, %v1186
    %v1261 = vadd.f32 %v1115, %v1255
    %v1262 = vadd.f32 %v1116, %v1257
    %v1263 = vmul.f32 %v1259, 0.5
    %v1264 = vtanh.pop %v1263
    %v1265 = vmul.f32 %v1264, 0.5
    %v1266 = vadd.f32 %v1265, 0.5
    %v1267 = vmul.f32 %v1260, 0.5
    %v1268 = vtanh.pop %v1267
    %v1269 = vmul.f32 %v1268, 0.5
    %v1270 = vadd.f32 %v1269, 0.5
    %v1271 = vtanh.pop %v1261
    %v1272 = vmul.f32 %v1262, 0.5
    %v1273 = vtanh.pop %v1272
    %v1274 = vmul.f32 %v1273, 0.5
    %v1275 = vadd.f32 %v1274, 0.5
    %v1276 = vmul.f32 %v1270, %v801
    %v1277 = vmul.f32 %v1266, %v1271
    %v1278 = vadd.f32 %v1276, %v1277
    %v1279 = vtanh.pop %v1278
    %v1280 = vmul.f32 %v1275, %v1279
    %v1281 = vmax.f32 %v1280, 0.0
    %1282 = vmatprep.subr.mxu0 %v551
    %1283 = vmatpush1.msra.mxu0 %v550
    %1284 = vmatprep.subr.mxu0 %v555
    %1285 = vmatpush1.msra.mxu0 %v554
    %1286 = vmatprep.subr.mxu0 %v559
    %1287 = vmatpush1.msra.mxu0 %v558
    %1288 = vmatprep.subr.mxu0 %v563
    %1289 = vmatpush1.msra.mxu0 %v562
    %1290 = vmatprep.subr.mxu0 %v567
    %1291 = vmatpush1.msra.mxu0 %v566
    %1292 = vmatprep.subr.mxu0 %v571
    %1293 = vmatpush1.msra.mxu0 %v570
    %1294 = vmatprep.subr.mxu0 %v575
    %1295 = vmatpush1.msra.mxu0 %v574
    %1296 = vmatprep.subr.mxu0 %v579
    %1297 = vmatpush1.msra.mxu0 %v578
    %1298 = vmatprep.subr.mxu0 %v583
    %1299 = vmatpush1.msra.mxu0 %v582
    %1300 = vmatprep.subr.mxu0 %v587
    %1301 = vmatpush1.msra.mxu0 %v586
    %1302 = vmatprep.subr.mxu0 %v591
    %1303 = vmatpush1.msra.mxu0 %v590
    %1304 = vmatprep.subr.mxu0 %v595
    %1305 = vmatpush1.msra.mxu0 %v594
    %1306 = vmatprep.subr.mxu0 %v599
    %1307 = vmatpush1.msra.mxu0 %v598
    %1308 = vmatprep.subr.mxu0 %v603
    %1309 = vmatpush1.msra.mxu0 %v602
    %1310 = vmatprep.subr.mxu0 %v607
    %1311 = vmatpush1.msra.mxu0 %v606
    %1312 = vmatprep.subr.mxu0 %v611
    %1313 = vmatpush1.msra.mxu0 %v610
    %1314 = vmatprep.subr.mxu0 0.0
    %1315 = vmatpush1.msra.mxu0 0.0
    %1316 = vmatprep.subr.mxu0 0.0
    %1317 = vmatpush1.msra.mxu0 0.0
    %1318 = vmatprep.subr.mxu0 0.0
    %1319 = vmatpush1.msra.mxu0 0.0
    %1320 = vmatprep.subr.mxu0 0.0
    %1321 = vmatpush1.msra.mxu0 0.0
    %1322 = vmatprep.subr.mxu0 0.0
    %1323 = vmatpush1.msra.mxu0 0.0
    %1324 = vmatprep.subr.mxu0 0.0
    %1325 = vmatpush1.msra.mxu0 0.0
    %1326 = vmatprep.subr.mxu0 0.0
    %1327 = vmatpush1.msra.mxu0 0.0
    %1328 = vmatprep.subr.mxu0 0.0
    %1329 = vmatpush1.msra.mxu0 0.0
    %1330 = vmatprep.subr.mxu0 0.0
    %1331 = vmatpush1.msra.mxu0 0.0
    %1332 = vmatprep.subr.mxu0 0.0
    %1333 = vmatpush1.msra.mxu0 0.0
    %1334 = vmatprep.subr.mxu0 0.0
    %1335 = vmatpush1.msra.mxu0 0.0
    %1336 = vmatprep.subr.mxu0 0.0
    %1337 = vmatpush1.msra.mxu0 0.0
    %1338 = vmatprep.subr.mxu0 0.0
    %1339 = vmatpush1.msra.mxu0 0.0
    %1340 = vmatprep.subr.mxu0 0.0
    %1341 = vmatpush1.msra.mxu0 0.0
    %1342 = vmatprep.subr.mxu0 0.0
    %1343 = vmatpush1.msra.mxu0 0.0
    %1344 = vmatprep.subr.mxu0 0.0
    %1345 = vmatpush1.msra.mxu0 0.0
    %1346 = vmatprep.mubr.f32.mxu0 0.0
    %1347 = vmatmul.mubr.f32.gmra.mrb[0].mxu0 %v1110
    %v1348 = vpop.f32.mrb[0].mxu0
    %v1349 = vadd.f32 0.0, %v1348
    %v1350 = vpop.f32.mrb[0].mxu0
    %v1351 = vadd.f32 0.0, %v1350
    %1352 = vdwg.mxu0
    %1353 = vmatprep.subr.mxu0 %v553
    %1354 = vmatpush1.msra.mxu0 %v552
    %1355 = vmatprep.subr.mxu0 %v557
    %1356 = vmatpush1.msra.mxu0 %v556
    %1357 = vmatprep.subr.mxu0 %v561
    %1358 = vmatpush1.msra.mxu0 %v560
    %1359 = vmatprep.subr.mxu0 %v565
    %1360 = vmatpush1.msra.mxu0 %v564
    %1361 = vmatprep.subr.mxu0 %v569
    %1362 = vmatpush1.msra.mxu0 %v568
    %1363 = vmatprep.subr.mxu0 %v573
    %1364 = vmatpush1.msra.mxu0 %v572
    %1365 = vmatprep.subr.mxu0 %v577
    %1366 = vmatpush1.msra.mxu0 %v576
    %1367 = vmatprep.subr.mxu0 %v581
    %1368 = vmatpush1.msra.mxu0 %v580
    %1369 = vmatprep.subr.mxu0 %v585
    %1370 = vmatpush1.msra.mxu0 %v584
    %1371 = vmatprep.subr.mxu0 %v589
    %1372 = vmatpush1.msra.mxu0 %v588
    %1373 = vmatprep.subr.mxu0 %v593
    %1374 = vmatpush1.msra.mxu0 %v592
    %1375 = vmatprep.subr.mxu0 %v597
    %1376 = vmatpush1.msra.mxu0 %v596
    %1377 = vmatprep.subr.mxu0 %v601
    %1378 = vmatpush1.msra.mxu0 %v600
    %1379 = vmatprep.subr.mxu0 %v605
    %1380 = vmatpush1.msra.mxu0 %v604
    %1381 = vmatprep.subr.mxu0 %v609
    %1382 = vmatpush1.msra.mxu0 %v608
    %1383 = vmatprep.subr.mxu0 %v613
    %1384 = vmatpush1.msra.mxu0 %v612
    %1385 = vmatprep.subr.mxu0 0.0
    %1386 = vmatpush1.msra.mxu0 0.0
    %1387 = vmatprep.subr.mxu0 0.0
    %1388 = vmatpush1.msra.mxu0 0.0
    %1389 = vmatprep.subr.mxu0 0.0
    %1390 = vmatpush1.msra.mxu0 0.0
    %1391 = vmatprep.subr.mxu0 0.0
    %1392 = vmatpush1.msra.mxu0 0.0
    %1393 = vmatprep.subr.mxu0 0.0
    %1394 = vmatpush1.msra.mxu0 0.0
    %1395 = vmatprep.subr.mxu0 0.0
    %1396 = vmatpush1.msra.mxu0 0.0
    %1397 = vmatprep.subr.mxu0 0.0
    %1398 = vmatpush1.msra.mxu0 0.0
    %1399 = vmatprep.subr.mxu0 0.0
    %1400 = vmatpush1.msra.mxu0 0.0
    %1401 = vmatprep.subr.mxu0 0.0
    %1402 = vmatpush1.msra.mxu0 0.0
    %1403 = vmatprep.subr.mxu0 0.0
    %1404 = vmatpush1.msra.mxu0 0.0
    %1405 = vmatprep.subr.mxu0 0.0
    %1406 = vmatpush1.msra.mxu0 0.0
    %1407 = vmatprep.subr.mxu0 0.0
    %1408 = vmatpush1.msra.mxu0 0.0
    %1409 = vmatprep.subr.mxu0 0.0
    %1410 = vmatpush1.msra.mxu0 0.0
    %1411 = vmatprep.subr.mxu0 0.0
    %1412 = vmatpush1.msra.mxu0 0.0
    %1413 = vmatprep.subr.mxu0 0.0
    %1414 = vmatpush1.msra.mxu0 0.0
    %1415 = vmatprep.subr.mxu0 0.0
    %1416 = vmatpush1.msra.mxu0 0.0
    %1417 = vmatprep.mubr.f32.mxu0 0.0
    %1418 = vmatmul.mubr.f32.gmra.mrb[0].mxu0 %v1110
    %v1419 = vpop.f32.mrb[0].mxu0
    %v1420 = vadd.f32 0.0, %v1419
    %v1421 = vpop.f32.mrb[0].mxu0
    %v1422 = vadd.f32 0.0, %v1421
    %1423 = vdwg.mxu0
    %1424 = vmatprep.subr.mxu0 %v487
    %1425 = vmatpush1.msra.mxu0 %v486
    %1426 = vmatprep.subr.mxu0 %v491
    %1427 = vmatpush1.msra.mxu0 %v490
    %1428 = vmatprep.subr.mxu0 %v495
    %1429 = vmatpush1.msra.mxu0 %v494
    %1430 = vmatprep.subr.mxu0 %v499
    %1431 = vmatpush1.msra.mxu0 %v498
    %1432 = vmatprep.subr.mxu0 %v503
    %1433 = vmatpush1.msra.mxu0 %v502
    %1434 = vmatprep.subr.mxu0 %v507
    %1435 = vmatpush1.msra.mxu0 %v506
    %1436 = vmatprep.subr.mxu0 %v511
    %1437 = vmatpush1.msra.mxu0 %v510
    %1438 = vmatprep.subr.mxu0 %v515
    %1439 = vmatpush1.msra.mxu0 %v514
    %1440 = vmatprep.subr.mxu0 %v519
    %1441 = vmatpush1.msra.mxu0 %v518
    %1442 = vmatprep.subr.mxu0 %v523
    %1443 = vmatpush1.msra.mxu0 %v522
    %1444 = vmatprep.subr.mxu0 %v527
    %1445 = vmatpush1.msra.mxu0 %v526
    %1446 = vmatprep.subr.mxu0 %v531
    %1447 = vmatpush1.msra.mxu0 %v530
    %1448 = vmatprep.subr.mxu0 %v535
    %1449 = vmatpush1.msra.mxu0 %v534
    %1450 = vmatprep.subr.mxu0 %v539
    %1451 = vmatpush1.msra.mxu0 %v538
    %1452 = vmatprep.subr.mxu0 %v543
    %1453 = vmatpush1.msra.mxu0 %v542
    %1454 = vmatprep.subr.mxu0 %v547
    %1455 = vmatpush1.msra.mxu0 %v546
    %1456 = vmatprep.subr.mxu0 0.0
    %1457 = vmatpush1.msra.mxu0 0.0
    %1458 = vmatprep.subr.mxu0 0.0
    %1459 = vmatpush1.msra.mxu0 0.0
    %1460 = vmatprep.subr.mxu0 0.0
    %1461 = vmatpush1.msra.mxu0 0.0
    %1462 = vmatprep.subr.mxu0 0.0
    %1463 = vmatpush1.msra.mxu0 0.0
    %1464 = vmatprep.subr.mxu0 0.0
    %1465 = vmatpush1.msra.mxu0 0.0
    %1466 = vmatprep.subr.mxu0 0.0
    %1467 = vmatpush1.msra.mxu0 0.0
    %1468 = vmatprep.subr.mxu0 0.0
    %1469 = vmatpush1.msra.mxu0 0.0
    %1470 = vmatprep.subr.mxu0 0.0
    %1471 = vmatpush1.msra.mxu0 0.0
    %1472 = vmatprep.subr.mxu0 0.0
    %1473 = vmatpush1.msra.mxu0 0.0
    %1474 = vmatprep.subr.mxu0 0.0
    %1475 = vmatpush1.msra.mxu0 0.0
    %1476 = vmatprep.subr.mxu0 0.0
    %1477 = vmatpush1.msra.mxu0 0.0
    %1478 = vmatprep.subr.mxu0 0.0
    %1479 = vmatpush1.msra.mxu0 0.0
    %1480 = vmatprep.subr.mxu0 0.0
    %1481 = vmatpush1.msra.mxu0 0.0
    %1482 = vmatprep.subr.mxu0 0.0
    %1483 = vmatpush1.msra.mxu0 0.0
    %1484 = vmatprep.subr.mxu0 0.0
    %1485 = vmatpush1.msra.mxu0 0.0
    %1486 = vmatprep.subr.mxu0 0.0
    %1487 = vmatpush1.msra.mxu0 0.0
    %1488 = vmatprep.mubr.f32.mxu0 0.0
    %1489 = vmatmul.mubr.f32.gmra.mrb[0].mxu0 %v1281
    %v1490 = vpop.f32.mrb[0].mxu0
    %v1491 = vadd.f32 %v1349, %v1490
    %v1492 = vpop.f32.mrb[0].mxu0
    %v1493 = vadd.f32 %v1351, %v1492
    %1494 = vdwg.mxu0
    %1495 = vmatprep.subr.mxu0 %v489
    %1496 = vmatpush1.msra.mxu0 %v488
    %1497 = vmatprep.subr.mxu0 %v493
    %1498 = vmatpush1.msra.mxu0 %v492
    %1499 = vmatprep.subr.mxu0 %v497
    %1500 = vmatpush1.msra.mxu0 %v496
    %1501 = vmatprep.subr.mxu0 %v501
    %1502 = vmatpush1.msra.mxu0 %v500
    %1503 = vmatprep.subr.mxu0 %v505
    %1504 = vmatpush1.msra.mxu0 %v504
    %1505 = vmatprep.subr.mxu0 %v509
    %1506 = vmatpush1.msra.mxu0 %v508
    %1507 = vmatprep.subr.mxu0 %v513
    %1508 = vmatpush1.msra.mxu0 %v512
    %1509 = vmatprep.subr.mxu0 %v517
    %1510 = vmatpush1.msra.mxu0 %v516
    %1511 = vmatprep.subr.mxu0 %v521
    %1512 = vmatpush1.msra.mxu0 %v520
    %1513 = vmatprep.subr.mxu0 %v525
    %1514 = vmatpush1.msra.mxu0 %v524
    %1515 = vmatprep.subr.mxu0 %v529
    %1516 = vmatpush1.msra.mxu0 %v528
    %1517 = vmatprep.subr.mxu0 %v533
    %1518 = vmatpush1.msra.mxu0 %v532
    %1519 = vmatprep.subr.mxu0 %v537
    %1520 = vmatpush1.msra.mxu0 %v536
    %1521 = vmatprep.subr.mxu0 %v541
    %1522 = vmatpush1.msra.mxu0 %v540
    %1523 = vmatprep.subr.mxu0 %v545
    %1524 = vmatpush1.msra.mxu0 %v544
    %1525 = vmatprep.subr.mxu0 %v549
    %1526 = vmatpush1.msra.mxu0 %v548
    %1527 = vmatprep.subr.mxu0 0.0
    %1528 = vmatpush1.msra.mxu0 0.0
    %1529 = vmatprep.subr.mxu0 0.0
    %1530 = vmatpush1.msra.mxu0 0.0
    %1531 = vmatprep.subr.mxu0 0.0
    %1532 = vmatpush1.msra.mxu0 0.0
    %1533 = vmatprep.subr.mxu0 0.0
    %1534 = vmatpush1.msra.mxu0 0.0
    %1535 = vmatprep.subr.mxu0 0.0
    %1536 = vmatpush1.msra.mxu0 0.0
    %1537 = vmatprep.subr.mxu0 0.0
    %1538 = vmatpush1.msra.mxu0 0.0
    %1539 = vmatprep.subr.mxu0 0.0
    %1540 = vmatpush1.msra.mxu0 0.0
    %1541 = vmatprep.subr.mxu0 0.0
    %1542 = vmatpush1.msra.mxu0 0.0
    %1543 = vmatprep.subr.mxu0 0.0
    %1544 = vmatpush1.msra.mxu0 0.0
    %1545 = vmatprep.subr.mxu0 0.0
    %1546 = vmatpush1.msra.mxu0 0.0
    %1547 = vmatprep.subr.mxu0 0.0
    %1548 = vmatpush1.msra.mxu0 0.0
    %1549 = vmatprep.subr.mxu0 0.0
    %1550 = vmatpush1.msra.mxu0 0.0
    %1551 = vmatprep.subr.mxu0 0.0
    %1552 = vmatpush1.msra.mxu0 0.0
    %1553 = vmatprep.subr.mxu0 0.0
    %1554 = vmatpush1.msra.mxu0 0.0
    %1555 = vmatprep.subr.mxu0 0.0
    %1556 = vmatpush1.msra.mxu0 0.0
    %1557 = vmatprep.subr.mxu0 0.0
    %1558 = vmatpush1.msra.mxu0 0.0
    %1559 = vmatprep.mubr.f32.mxu0 0.0
    %1560 = vmatmul.mubr.f32.gmra.mrb[0].mxu0 %v1281
    %v1561 = vpop.f32.mrb[0].mxu0
    %v1562 = vadd.f32 %v1420, %v1561
    %v1563 = vpop.f32.mrb[0].mxu0
    %v1564 = vadd.f32 %v1422, %v1563
    %1565 = vdwg.mxu0
    %v1566 = vadd.f32 %v1491, %v619
    %v1567 = vadd.f32 %v1493, %v623
    %v1568 = vadd.f32 %v1562, %v627
    %v1569 = vadd.f32 %v1564, %v631
    %v1570 = vmul.f32 %v1566, 0.5
    %v1571 = vtanh.pop %v1570
    %v1572 = vmul.f32 %v1571, 0.5
    %v1573 = vadd.f32 %v1572, 0.5
    %v1574 = vmul.f32 %v1567, 0.5
    %v1575 = vtanh.pop %v1574
    %v1576 = vmul.f32 %v1575, 0.5
    %v1577 = vadd.f32 %v1576, 0.5
    %v1578 = vtanh.pop %v1568
    %v1579 = vmul.f32 %v1569, 0.5
    %v1580 = vtanh.pop %v1579
    %v1581 = vmul.f32 %v1580, 0.5
    %v1582 = vadd.f32 %v1581, 0.5
    %v1583 = vmul.f32 %v1577, %v1108
    %v1584 = vmul.f32 %v1573, %v1578
    %v1585 = vadd.f32 %v1583, %v1584
    %v1586 = vtanh.pop %v1585
    %v1587 = vmul.f32 %v1582, %v1586
    %v1588 = vmax.f32 %v1587, 0.0
    %1589 = vst [vmem:[#allocation3 + $0x8] sm:$0xff] %v1588
    %v1590 = vld [vmem:[#allocation2 + $0x40] sm:$0xff]
    %v1591 = vld [vmem:[#allocation2 + $0x48] sm:$0xff]
    %v1592 = vld [vmem:[#allocation2 + $0x50] sm:$0xff]
    %v1593 = vld [vmem:[#allocation2 + $0x58] sm:$0xff]
    %1594 = vmatprep.subr.mxu0 %v423
    %1595 = vmatpush1.msra.mxu0 %v422
    %1596 = vmatprep.subr.mxu0 %v427
    %1597 = vmatpush1.msra.mxu0 %v426
    %1598 = vmatprep.subr.mxu0 %v431
    %1599 = vmatpush1.msra.mxu0 %v430
    %1600 = vmatprep.subr.mxu0 %v435
    %1601 = vmatpush1.msra.mxu0 %v434
    %1602 = vmatprep.subr.mxu0 %v439
    %1603 = vmatpush1.msra.mxu0 %v438
    %1604 = vmatprep.subr.mxu0 %v443
    %1605 = vmatpush1.msra.mxu0 %v442
    %1606 = vmatprep.subr.mxu0 %v447
    %1607 = vmatpush1.msra.mxu0 %v446
    %1608 = vmatprep.subr.mxu0 %v451
    %1609 = vmatpush1.msra.mxu0 %v450
    %1610 = vmatprep.subr.mxu0 %v455
    %1611 = vmatpush1.msra.mxu0 %v454
    %1612 = vmatprep.subr.mxu0 %v459
    %1613 = vmatpush1.msra.mxu0 %v458
    %1614 = vmatprep.subr.mxu0 %v463
    %1615 = vmatpush1.msra.mxu0 %v462
    %1616 = vmatprep.subr.mxu0 %v467
    %1617 = vmatpush1.msra.mxu0 %v466
    %1618 = vmatprep.subr.mxu0 %v471
    %1619 = vmatpush1.msra.mxu0 %v470
    %1620 = vmatprep.subr.mxu0 %v475
    %1621 = vmatpush1.msra.mxu0 %v474
    %1622 = vmatprep.subr.mxu0 %v479
    %1623 = vmatpush1.msra.mxu0 %v478
    %1624 = vmatprep.subr.mxu0 %v483
    %1625 = vmatpush1.msra.mxu0 %v482
    %1626 = vmatprep.subr.mxu0 0.0
    %1627 = vmatpush1.msra.mxu0 0.0
    %1628 = vmatprep.subr.mxu0 0.0
    %1629 = vmatpush1.msra.mxu0 0.0
    %1630 = vmatprep.subr.mxu0 0.0
    %1631 = vmatpush1.msra.mxu0 0.0
    %1632 = vmatprep.subr.mxu0 0.0
    %1633 = vmatpush1.msra.mxu0 0.0
    %1634 = vmatprep.subr.mxu0 0.0
    %1635 = vmatpush1.msra.mxu0 0.0
    %1636 = vmatprep.subr.mxu0 0.0
    %1637 = vmatpush1.msra.mxu0 0.0
    %1638 = vmatprep.subr.mxu0 0.0
    %1639 = vmatpush1.msra.mxu0 0.0
    %1640 = vmatprep.subr.mxu0 0.0
    %1641 = vmatpush1.msra.mxu0 0.0
    %1642 = vmatprep.subr.mxu0 0.0
    %1643 = vmatpush1.msra.mxu0 0.0
    %1644 = vmatprep.subr.mxu0 0.0
    %1645 = vmatpush1.msra.mxu0 0.0
    %1646 = vmatprep.subr.mxu0 0.0
    %1647 = vmatpush1.msra.mxu0 0.0
    %1648 = vmatprep.subr.mxu0 0.0
    %1649 = vmatpush1.msra.mxu0 0.0
    %1650 = vmatprep.subr.mxu0 0.0
    %1651 = vmatpush1.msra.mxu0 0.0
    %1652 = vmatprep.subr.mxu0 0.0
    %1653 = vmatpush1.msra.mxu0 0.0
    %1654 = vmatprep.subr.mxu0 0.0
    %1655 = vmatpush1.msra.mxu0 0.0
    %1656 = vmatprep.subr.mxu0 0.0
    %1657 = vmatpush1.msra.mxu0 0.0
    %1658 = vmatprep.mubr.f32.mxu0 0.0
    %1659 = vmatmul.mubr.f32.gmra.mrb[0].mxu0 %v1280
    %v1660 = vpop.f32.mrb[0].mxu0
    %v1661 = vadd.f32 0.0, %v1660
    %v1662 = vpop.f32.mrb[0].mxu0
    %v1663 = vadd.f32 0.0, %v1662
    %1664 = vdwg.mxu0
    %1665 = vmatprep.subr.mxu0 %v425
    %1666 = vmatpush1.msra.mxu0 %v424
    %1667 = vmatprep.subr.mxu0 %v429
    %1668 = vmatpush1.msra.mxu0 %v428
    %1669 = vmatprep.subr.mxu0 %v433
    %1670 = vmatpush1.msra.mxu0 %v432
    %1671 = vmatprep.subr.mxu0 %v437
    %1672 = vmatpush1.msra.mxu0 %v436
    %1673 = vmatprep.subr.mxu0 %v441
    %1674 = vmatpush1.msra.mxu0 %v440
    %1675 = vmatprep.subr.mxu0 %v445
    %1676 = vmatpush1.msra.mxu0 %v444
    %1677 = vmatprep.subr.mxu0 %v449
    %1678 = vmatpush1.msra.mxu0 %v448
    %1679 = vmatprep.subr.mxu0 %v453
    %1680 = vmatpush1.msra.mxu0 %v452
    %1681 = vmatprep.subr.mxu0 %v457
    %1682 = vmatpush1.msra.mxu0 %v456
    %1683 = vmatprep.subr.mxu0 %v461
    %1684 = vmatpush1.msra.mxu0 %v460
    %1685 = vmatprep.subr.mxu0 %v465
    %1686 = vmatpush1.msra.mxu0 %v464
    %1687 = vmatprep.subr.mxu0 %v469
    %1688 = vmatpush1.msra.mxu0 %v468
    %1689 = vmatprep.subr.mxu0 %v473
    %1690 = vmatpush1.msra.mxu0 %v472
    %1691 = vmatprep.subr.mxu0 %v477
    %1692 = vmatpush1.msra.mxu0 %v476
    %1693 = vmatprep.subr.mxu0 %v481
    %1694 = vmatpush1.msra.mxu0 %v480
    %1695 = vmatprep.subr.mxu0 %v485
    %1696 = vmatpush1.msra.mxu0 %v484
    %1697 = vmatprep.subr.mxu0 0.0
    %1698 = vmatpush1.msra.mxu0 0.0
    %1699 = vmatprep.subr.mxu0 0.0
    %1700 = vmatpush1.msra.mxu0 0.0
    %1701 = vmatprep.subr.mxu0 0.0
    %1702 = vmatpush1.msra.mxu0 0.0
    %1703 = vmatprep.subr.mxu0 0.0
    %1704 = vmatpush1.msra.mxu0 0.0
    %1705 = vmatprep.subr.mxu0 0.0
    %1706 = vmatpush1.msra.mxu0 0.0
    %1707 = vmatprep.subr.mxu0 0.0
    %1708 = vmatpush1.msra.mxu0 0.0
    %1709 = vmatprep.subr.mxu0 0.0
    %1710 = vmatpush1.msra.mxu0 0.0
    %1711 = vmatprep.subr.mxu0 0.0
    %1712 = vmatpush1.msra.mxu0 0.0
    %1713 = vmatprep.subr.mxu0 0.0
    %1714 = vmatpush1.msra.mxu0 0.0
    %1715 = vmatprep.subr.mxu0 0.0
    %1716 = vmatpush1.msra.mxu0 0.0
    %1717 = vmatprep.subr.mxu0 0.0
    %1718 = vmatpush1.msra.mxu0 0.0
    %1719 = vmatprep.subr.mxu0 0.0
    %1720 = vmatpush1.msra.mxu0 0.0
    %1721 = vmatprep.subr.mxu0 0.0
    %1722 = vmatpush1.msra.mxu0 0.0
    %1723 = vmatprep.subr.mxu0 0.0
    %1724 = vmatpush1.msra.mxu0 0.0
    %1725 = vmatprep.subr.mxu0 0.0
    %1726 = vmatpush1.msra.mxu0 0.0
    %1727 = vmatprep.subr.mxu0 0.0
    %1728 = vmatpush1.msra.mxu0 0.0
    %1729 = vmatprep.mubr.f32.mxu0 0.0
    %1730 = vmatmul.mubr.f32.gmra.mrb[0].mxu0 %v1280
    %v1731 = vpop.f32.mrb[0].mxu0
    %v1732 = vadd.f32 0.0, %v1731
    %v1733 = vpop.f32.mrb[0].mxu0
    %v1734 = vadd.f32 0.0, %v1733
    %1735 = vdwg.mxu0
    %v1736 = vadd.f32 %v1590, %v1661
    %v1737 = vadd.f32 %v1591, %v1663
    %v1738 = vadd.f32 %v1592, %v1732
    %v1739 = vadd.f32 %v1593, %v1734
    %v1740 = vmul.f32 %v1736, 0.5
    %v1741 = vtanh.pop %v1740
    %v1742 = vmul.f32 %v1741, 0.5
    %v1743 = vadd.f32 %v1742, 0.5
    %v1744 = vmul.f32 %v1737, 0.5
    %v1745 = vtanh.pop %v1744
    %v1746 = vmul.f32 %v1745, 0.5
    %v1747 = vadd.f32 %v1746, 0.5
    %v1748 = vtanh.pop %v1738
    %v1749 = vmul.f32 %v1739, 0.5
    %v1750 = vtanh.pop %v1749
    %v1751 = vmul.f32 %v1750, 0.5
    %v1752 = vadd.f32 %v1751, 0.5
    %v1753 = vmul.f32 %v1747, %v1278
    %v1754 = vmul.f32 %v1743, %v1748
    %v1755 = vadd.f32 %v1753, %v1754
    %v1756 = vtanh.pop %v1755
    %v1757 = vmul.f32 %v1752, %v1756
    %v1758 = vmax.f32 %v1757, 0.0
    %1759 = vmatprep.subr.mxu0 %v551
    %1760 = vmatpush1.msra.mxu0 %v550
    %1761 = vmatprep.subr.mxu0 %v555
    %1762 = vmatpush1.msra.mxu0 %v554
    %1763 = vmatprep.subr.mxu0 %v559
    %1764 = vmatpush1.msra.mxu0 %v558
    %1765 = vmatprep.subr.mxu0 %v563
    %1766 = vmatpush1.msra.mxu0 %v562
    %1767 = vmatprep.subr.mxu0 %v567
    %1768 = vmatpush1.msra.mxu0 %v566
    %1769 = vmatprep.subr.mxu0 %v571
    %1770 = vmatpush1.msra.mxu0 %v570
    %1771 = vmatprep.subr.mxu0 %v575
    %1772 = vmatpush1.msra.mxu0 %v574
    %1773 = vmatprep.subr.mxu0 %v579
    %1774 = vmatpush1.msra.mxu0 %v578
    %1775 = vmatprep.subr.mxu0 %v583
    %1776 = vmatpush1.msra.mxu0 %v582
    %1777 = vmatprep.subr.mxu0 %v587
    %1778 = vmatpush1.msra.mxu0 %v586
    %1779 = vmatprep.subr.mxu0 %v591
    %1780 = vmatpush1.msra.mxu0 %v590
    %1781 = vmatprep.subr.mxu0 %v595
    %1782 = vmatpush1.msra.mxu0 %v594
    %1783 = vmatprep.subr.mxu0 %v599
    %1784 = vmatpush1.msra.mxu0 %v598
    %1785 = vmatprep.subr.mxu0 %v603
    %1786 = vmatpush1.msra.mxu0 %v602
    %1787 = vmatprep.subr.mxu0 %v607
    %1788 = vmatpush1.msra.mxu0 %v606
    %1789 = vmatprep.subr.mxu0 %v611
    %1790 = vmatpush1.msra.mxu0 %v610
    %1791 = vmatprep.subr.mxu0 0.0
    %1792 = vmatpush1.msra.mxu0 0.0
    %1793 = vmatprep.subr.mxu0 0.0
    %1794 = vmatpush1.msra.mxu0 0.0
    %1795 = vmatprep.subr.mxu0 0.0
    %1796 = vmatpush1.msra.mxu0 0.0
    %1797 = vmatprep.subr.mxu0 0.0
    %1798 = vmatpush1.msra.mxu0 0.0
    %1799 = vmatprep.subr.mxu0 0.0
    %1800 = vmatpush1.msra.mxu0 0.0
    %1801 = vmatprep.subr.mxu0 0.0
    %1802 = vmatpush1.msra.mxu0 0.0
    %1803 = vmatprep.subr.mxu0 0.0
    %1804 = vmatpush1.msra.mxu0 0.0
    %1805 = vmatprep.subr.mxu0 0.0
    %1806 = vmatpush1.msra.mxu0 0.0
    %1807 = vmatprep.subr.mxu0 0.0
    %1808 = vmatpush1.msra.mxu0 0.0
    %1809 = vmatprep.subr.mxu0 0.0
    %1810 = vmatpush1.msra.mxu0 0.0
    %1811 = vmatprep.subr.mxu0 0.0
    %1812 = vmatpush1.msra.mxu0 0.0
    %1813 = vmatprep.subr.mxu0 0.0
    %1814 = vmatpush1.msra.mxu0 0.0
    %1815 = vmatprep.subr.mxu0 0.0
    %1816 = vmatpush1.msra.mxu0 0.0
    %1817 = vmatprep.subr.mxu0 0.0
    %1818 = vmatpush1.msra.mxu0 0.0
    %1819 = vmatprep.subr.mxu0 0.0
    %1820 = vmatpush1.msra.mxu0 0.0
    %1821 = vmatprep.subr.mxu0 0.0
    %1822 = vmatpush1.msra.mxu0 0.0
    %1823 = vmatprep.mubr.f32.mxu0 0.0
    %1824 = vmatmul.mubr.f32.gmra.mrb[0].mxu0 %v1587
    %v1825 = vpop.f32.mrb[0].mxu0
    %v1826 = vadd.f32 0.0, %v1825
    %v1827 = vpop.f32.mrb[0].mxu0
    %v1828 = vadd.f32 0.0, %v1827
    %1829 = vdwg.mxu0
    %1830 = vmatprep.subr.mxu0 %v553
    %1831 = vmatpush1.msra.mxu0 %v552
    %1832 = vmatprep.subr.mxu0 %v557
    %1833 = vmatpush1.msra.mxu0 %v556
    %1834 = vmatprep.subr.mxu0 %v561
    %1835 = vmatpush1.msra.mxu0 %v560
    %1836 = vmatprep.subr.mxu0 %v565
    %1837 = vmatpush1.msra.mxu0 %v564
    %1838 = vmatprep.subr.mxu0 %v569
    %1839 = vmatpush1.msra.mxu0 %v568
    %1840 = vmatprep.subr.mxu0 %v573
    %1841 = vmatpush1.msra.mxu0 %v572
    %1842 = vmatprep.subr.mxu0 %v577
    %1843 = vmatpush1.msra.mxu0 %v576
    %1844 = vmatprep.subr.mxu0 %v581
    %1845 = vmatpush1.msra.mxu0 %v580
    %1846 = vmatprep.subr.mxu0 %v585
    %1847 = vmatpush1.msra.mxu0 %v584
    %1848 = vmatprep.subr.mxu0 %v589
    %1849 = vmatpush1.msra.mxu0 %v588
    %1850 = vmatprep.subr.mxu0 %v593
    %1851 = vmatpush1.msra.mxu0 %v592
    %1852 = vmatprep.subr.mxu0 %v597
    %1853 = vmatpush1.msra.mxu0 %v596
    %1854 = vmatprep.subr.mxu0 %v601
    %1855 = vmatpush1.msra.mxu0 %v600
    %1856 = vmatprep.subr.mxu0 %v605
    %1857 = vmatpush1.msra.mxu0 %v604
    %1858 = vmatprep.subr.mxu0 %v609
    %1859 = vmatpush1.msra.mxu0 %v608
    %1860 = vmatprep.subr.mxu0 %v613
    %1861 = vmatpush1.msra.mxu0 %v612
    %1862 = vmatprep.subr.mxu0 0.0
    %1863 = vmatpush1.msra.mxu0 0.0
    %1864 = vmatprep.subr.mxu0 0.0
    %1865 = vmatpush1.msra.mxu0 0.0
    %1866 = vmatprep.subr.mxu0 0.0
    %1867 = vmatpush1.msra.mxu0 0.0
    %1868 = vmatprep.subr.mxu0 0.0
    %1869 = vmatpush1.msra.mxu0 0.0
    %1870 = vmatprep.subr.mxu0 0.0
    %1871 = vmatpush1.msra.mxu0 0.0
    %1872 = vmatprep.subr.mxu0 0.0
    %1873 = vmatpush1.msra.mxu0 0.0
    %1874 = vmatprep.subr.mxu0 0.0
    %1875 = vmatpush1.msra.mxu0 0.0
    %1876 = vmatprep.subr.mxu0 0.0
    %1877 = vmatpush1.msra.mxu0 0.0
    %1878 = vmatprep.subr.mxu0 0.0
    %1879 = vmatpush1.msra.mxu0 0.0
    %1880 = vmatprep.subr.mxu0 0.0
    %1881 = vmatpush1.msra.mxu0 0.0
    %1882 = vmatprep.subr.mxu0 0.0
    %1883 = vmatpush1.msra.mxu0 0.0
    %1884 = vmatprep.subr.mxu0 0.0
    %1885 = vmatpush1.msra.mxu0 0.0
    %1886 = vmatprep.subr.mxu0 0.0
    %1887 = vmatpush1.msra.mxu0 0.0
    %1888 = vmatprep.subr.mxu0 0.0
    %1889 = vmatpush1.msra.mxu0 0.0
    %1890 = vmatprep.subr.mxu0 0.0
    %1891 = vmatpush1.msra.mxu0 0.0
    %1892 = vmatprep.subr.mxu0 0.0
    %1893 = vmatpush1.msra.mxu0 0.0
    %1894 = vmatprep.mubr.f32.mxu0 0.0
    %1895 = vmatmul.mubr.f32.gmra.mrb[0].mxu0 %v1587
    %v1896 = vpop.f32.mrb[0].mxu0
    %v1897 = vadd.f32 0.0, %v1896
    %v1898 = vpop.f32.mrb[0].mxu0
    %v1899 = vadd.f32 0.0, %v1898
    %1900 = vdwg.mxu0
    %1901 = vmatprep.subr.mxu0 %v487
    %1902 = vmatpush1.msra.mxu0 %v486
    %1903 = vmatprep.subr.mxu0 %v491
    %1904 = vmatpush1.msra.mxu0 %v490
    %1905 = vmatprep.subr.mxu0 %v495
    %1906 = vmatpush1.msra.mxu0 %v494
    %1907 = vmatprep.subr.mxu0 %v499
    %1908 = vmatpush1.msra.mxu0 %v498
    %1909 = vmatprep.subr.mxu0 %v503
    %1910 = vmatpush1.msra.mxu0 %v502
    %1911 = vmatprep.subr.mxu0 %v507
    %1912 = vmatpush1.msra.mxu0 %v506
    %1913 = vmatprep.subr.mxu0 %v511
    %1914 = vmatpush1.msra.mxu0 %v510
    %1915 = vmatprep.subr.mxu0 %v515
    %1916 = vmatpush1.msra.mxu0 %v514
    %1917 = vmatprep.subr.mxu0 %v519
    %1918 = vmatpush1.msra.mxu0 %v518
    %1919 = vmatprep.subr.mxu0 %v523
    %1920 = vmatpush1.msra.mxu0 %v522
    %1921 = vmatprep.subr.mxu0 %v527
    %1922 = vmatpush1.msra.mxu0 %v526
    %1923 = vmatprep.subr.mxu0 %v531
    %1924 = vmatpush1.msra.mxu0 %v530
    %1925 = vmatprep.subr.mxu0 %v535
    %1926 = vmatpush1.msra.mxu0 %v534
    %1927 = vmatprep.subr.mxu0 %v539
    %1928 = vmatpush1.msra.mxu0 %v538
    %1929 = vmatprep.subr.mxu0 %v543
    %1930 = vmatpush1.msra.mxu0 %v542
    %1931 = vmatprep.subr.mxu0 %v547
    %1932 = vmatpush1.msra.mxu0 %v546
    %1933 = vmatprep.subr.mxu0 0.0
    %1934 = vmatpush1.msra.mxu0 0.0
    %1935 = vmatprep.subr.mxu0 0.0
    %1936 = vmatpush1.msra.mxu0 0.0
    %1937 = vmatprep.subr.mxu0 0.0
    %1938 = vmatpush1.msra.mxu0 0.0
    %1939 = vmatprep.subr.mxu0 0.0
    %1940 = vmatpush1.msra.mxu0 0.0
    %1941 = vmatprep.subr.mxu0 0.0
    %1942 = vmatpush1.msra.mxu0 0.0
    %1943 = vmatprep.subr.mxu0 0.0
    %1944 = vmatpush1.msra.mxu0 0.0
    %1945 = vmatprep.subr.mxu0 0.0
    %1946 = vmatpush1.msra.mxu0 0.0
    %1947 = vmatprep.subr.mxu0 0.0
    %1948 = vmatpush1.msra.mxu0 0.0
    %1949 = vmatprep.subr.mxu0 0.0
    %1950 = vmatpush1.msra.mxu0 0.0
    %1951 = vmatprep.subr.mxu0 0.0
    %1952 = vmatpush1.msra.mxu0 0.0
    %1953 = vmatprep.subr.mxu0 0.0
    %1954 = vmatpush1.msra.mxu0 0.0
    %1955 = vmatprep.subr.mxu0 0.0
    %1956 = vmatpush1.msra.mxu0 0.0
    %1957 = vmatprep.subr.mxu0 0.0
    %1958 = vmatpush1.msra.mxu0 0.0
    %1959 = vmatprep.subr.mxu0 0.0
    %1960 = vmatpush1.msra.mxu0 0.0
    %1961 = vmatprep.subr.mxu0 0.0
    %1962 = vmatpush1.msra.mxu0 0.0
    %1963 = vmatprep.subr.mxu0 0.0
    %1964 = vmatpush1.msra.mxu0 0.0
    %1965 = vmatprep.mubr.f32.mxu0 0.0
    %1966 = vmatmul.mubr.f32.gmra.mrb[0].mxu0 %v1758
    %v1967 = vpop.f32.mrb[0].mxu0
    %v1968 = vadd.f32 %v1826, %v1967
    %v1969 = vpop.f32.mrb[0].mxu0
    %v1970 = vadd.f32 %v1828, %v1969
    %1971 = vdwg.mxu0
    %1972 = vmatprep.subr.mxu0 %v489
    %1973 = vmatpush1.msra.mxu0 %v488
    %1974 = vmatprep.subr.mxu0 %v493
    %1975 = vmatpush1.msra.mxu0 %v492
    %1976 = vmatprep.subr.mxu0 %v497
    %1977 = vmatpush1.msra.mxu0 %v496
    %1978 = vmatprep.subr.mxu0 %v501
    %1979 = vmatpush1.msra.mxu0 %v500
    %1980 = vmatprep.subr.mxu0 %v505
    %1981 = vmatpush1.msra.mxu0 %v504
    %1982 = vmatprep.subr.mxu0 %v509
    %1983 = vmatpush1.msra.mxu0 %v508
    %1984 = vmatprep.subr.mxu0 %v513
    %1985 = vmatpush1.msra.mxu0 %v512
    %1986 = vmatprep.subr.mxu0 %v517
    %1987 = vmatpush1.msra.mxu0 %v516
    %1988 = vmatprep.subr.mxu0 %v521
    %1989 = vmatpush1.msra.mxu0 %v520
    %1990 = vmatprep.subr.mxu0 %v525
    %1991 = vmatpush1.msra.mxu0 %v524
    %1992 = vmatprep.subr.mxu0 %v529
    %1993 = vmatpush1.msra.mxu0 %v528
    %1994 = vmatprep.subr.mxu0 %v533
    %1995 = vmatpush1.msra.mxu0 %v532
    %1996 = vmatprep.subr.mxu0 %v537
    %1997 = vmatpush1.msra.mxu0 %v536
    %1998 = vmatprep.subr.mxu0 %v541
    %1999 = vmatpush1.msra.mxu0 %v540
    %2000 = vmatprep.subr.mxu0 %v545
    %2001 = vmatpush1.msra.mxu0 %v544
    %2002 = vmatprep.subr.mxu0 %v549
    %2003 = vmatpush1.msra.mxu0 %v548
    %2004 = vmatprep.subr.mxu0 0.0
    %2005 = vmatpush1.msra.mxu0 0.0
    %2006 = vmatprep.subr.mxu0 0.0
    %2007 = vmatpush1.msra.mxu0 0.0
    %2008 = vmatprep.subr.mxu0 0.0
    %2009 = vmatpush1.msra.mxu0 0.0
    %2010 = vmatprep.subr.mxu0 0.0
    %2011 = vmatpush1.msra.mxu0 0.0
    %2012 = vmatprep.subr.mxu0 0.0
    %2013 = vmatpush1.msra.mxu0 0.0
    %2014 = vmatprep.subr.mxu0 0.0
    %2015 = vmatpush1.msra.mxu0 0.0
    %2016 = vmatprep.subr.mxu0 0.0
    %2017 = vmatpush1.msra.mxu0 0.0
    %2018 = vmatprep.subr.mxu0 0.0
    %2019 = vmatpush1.msra.mxu0 0.0
    %2020 = vmatprep.subr.mxu0 0.0
    %2021 = vmatpush1.msra.mxu0 0.0
    %2022 = vmatprep.subr.mxu0 0.0
    %2023 = vmatpush1.msra.mxu0 0.0
    %2024 = vmatprep.subr.mxu0 0.0
    %2025 = vmatpush1.msra.mxu0 0.0
    %2026 = vmatprep.subr.mxu0 0.0
    %2027 = vmatpush1.msra.mxu0 0.0
    %2028 = vmatprep.subr.mxu0 0.0
    %2029 = vmatpush1.msra.mxu0 0.0
    %2030 = vmatprep.subr.mxu0 0.0
    %2031 = vmatpush1.msra.mxu0 0.0
    %2032 = vmatprep.subr.mxu0 0.0
    %2033 = vmatpush1.msra.mxu0 0.0
    %2034 = vmatprep.subr.mxu0 0.0
    %2035 = vmatpush1.msra.mxu0 0.0
    %2036 = vmatprep.mubr.f32.mxu0 0.0
    %2037 = vmatmul.mubr.f32.gmra.mrb[0].mxu0 %v1758
    %v2038 = vpop.f32.mrb[0].mxu0
    %v2039 = vadd.f32 %v1897, %v2038
    %v2040 = vpop.f32.mrb[0].mxu0
    %v2041 = vadd.f32 %v1899, %v2040
    %2042 = vdwg.mxu0
    %v2043 = vadd.f32 %v1968, %v619
    %v2044 = vadd.f32 %v1970, %v623
    %v2045 = vadd.f32 %v2039, %v627
    %v2046 = vadd.f32 %v2041, %v631
    %v2047 = vmul.f32 %v2043, 0.5
    %v2048 = vtanh.pop %v2047
    %v2049 = vmul.f32 %v2048, 0.5
    %v2050 = vadd.f32 %v2049, 0.5
    %v2051 = vmul.f32 %v2044, 0.5
    %v2052 = vtanh.pop %v2051
    %v2053 = vmul.f32 %v2052, 0.5
    %v2054 = vadd.f32 %v2053, 0.5
    %v2055 = vtanh.pop %v2045
    %v2056 = vmul.f32 %v2046, 0.5
    %v2057 = vtanh.pop %v2056
    %v2058 = vmul.f32 %v2057, 0.5
    %v2059 = vadd.f32 %v2058, 0.5
    %v2060 = vmul.f32 %v2054, %v1585
    %v2061 = vmul.f32 %v2050, %v2055
    %v2062 = vadd.f32 %v2060, %v2061
    %v2063 = vtanh.pop %v2062
    %v2064 = vmul.f32 %v2059, %v2063
    %v2065 = vmax.f32 %v2064, 0.0
    %2066 = vst [vmem:[#allocation3 + $0x10] sm:$0xff] %v2065
    %v2067 = vld [vmem:[#allocation2 + $0x60] sm:$0xff]
    %v2068 = vld [vmem:[#allocation2 + $0x68] sm:$0xff]
    %v2069 = vld [vmem:[#allocation2 + $0x70] sm:$0xff]
    %v2070 = vld [vmem:[#allocation2 + $0x78] sm:$0xff]
    %2071 = vmatprep.subr.mxu0 %v423
    %2072 = vmatpush1.msra.mxu0 %v422
    %2073 = vmatprep.subr.mxu0 %v427
    %2074 = vmatpush1.msra.mxu0 %v426
    %2075 = vmatprep.subr.mxu0 %v431
    %2076 = vmatpush1.msra.mxu0 %v430
    %2077 = vmatprep.subr.mxu0 %v435
    %2078 = vmatpush1.msra.mxu0 %v434
    %2079 = vmatprep.subr.mxu0 %v439
    %2080 = vmatpush1.msra.mxu0 %v438
    %2081 = vmatprep.subr.mxu0 %v443
    %2082 = vmatpush1.msra.mxu0 %v442
    %2083 = vmatprep.subr.mxu0 %v447
    %2084 = vmatpush1.msra.mxu0 %v446
    %2085 = vmatprep.subr.mxu0 %v451
    %2086 = vmatpush1.msra.mxu0 %v450
    %2087 = vmatprep.subr.mxu0 %v455
    %2088 = vmatpush1.msra.mxu0 %v454
    %2089 = vmatprep.subr.mxu0 %v459
    %2090 = vmatpush1.msra.mxu0 %v458
    %2091 = vmatprep.subr.mxu0 %v463
    %2092 = vmatpush1.msra.mxu0 %v462
    %2093 = vmatprep.subr.mxu0 %v467
    %2094 = vmatpush1.msra.mxu0 %v466
    %2095 = vmatprep.subr.mxu0 %v471
    %2096 = vmatpush1.msra.mxu0 %v470
    %2097 = vmatprep.subr.mxu0 %v475
    %2098 = vmatpush1.msra.mxu0 %v474
    %2099 = vmatprep.subr.mxu0 %v479
    %2100 = vmatpush1.msra.mxu0 %v478
    %2101 = vmatprep.subr.mxu0 %v483
    %2102 = vmatpush1.msra.mxu0 %v482
    %2103 = vmatprep.subr.mxu0 0.0
    %2104 = vmatpush1.msra.mxu0 0.0
    %2105 = vmatprep.subr.mxu0 0.0
    %2106 = vmatpush1.msra.mxu0 0.0
    %2107 = vmatprep.subr.mxu0 0.0
    %2108 = vmatpush1.msra.mxu0 0.0
    %2109 = vmatprep.subr.mxu0 0.0
    %2110 = vmatpush1.msra.mxu0 0.0
    %2111 = vmatprep.subr.mxu0 0.0
    %2112 = vmatpush1.msra.mxu0 0.0
    %2113 = vmatprep.subr.mxu0 0.0
    %2114 = vmatpush1.msra.mxu0 0.0
    %2115 = vmatprep.subr.mxu0 0.0
    %2116 = vmatpush1.msra.mxu0 0.0
    %2117 = vmatprep.subr.mxu0 0.0
    %2118 = vmatpush1.msra.mxu0 0.0
    %2119 = vmatprep.subr.mxu0 0.0
    %2120 = vmatpush1.msra.mxu0 0.0
    %2121 = vmatprep.subr.mxu0 0.0
    %2122 = vmatpush1.msra.mxu0 0.0
    %2123 = vmatprep.subr.mxu0 0.0
    %2124 = vmatpush1.msra.mxu0 0.0
    %2125 = vmatprep.subr.mxu0 0.0
    %2126 = vmatpush1.msra.mxu0 0.0
    %2127 = vmatprep.subr.mxu0 0.0
    %2128 = vmatpush1.msra.mxu0 0.0
    %2129 = vmatprep.subr.mxu0 0.0
    %2130 = vmatpush1.msra.mxu0 0.0
    %2131 = vmatprep.subr.mxu0 0.0
    %2132 = vmatpush1.msra.mxu0 0.0
    %2133 = vmatprep.subr.mxu0 0.0
    %2134 = vmatpush1.msra.mxu0 0.0
    %2135 = vmatprep.mubr.f32.mxu0 0.0
    %2136 = vmatmul.mubr.f32.gmra.mrb[0].mxu0 %v1757
    %v2137 = vpop.f32.mrb[0].mxu0
    %v2138 = vadd.f32 0.0, %v2137
    %v2139 = vpop.f32.mrb[0].mxu0
    %v2140 = vadd.f32 0.0, %v2139
    %2141 = vdwg.mxu0
    %2142 = vmatprep.subr.mxu0 %v425
    %2143 = vmatpush1.msra.mxu0 %v424
    %2144 = vmatprep.subr.mxu0 %v429
    %2145 = vmatpush1.msra.mxu0 %v428
    %2146 = vmatprep.subr.mxu0 %v433
    %2147 = vmatpush1.msra.mxu0 %v432
    %2148 = vmatprep.subr.mxu0 %v437
    %2149 = vmatpush1.msra.mxu0 %v436
    %2150 = vmatprep.subr.mxu0 %v441
    %2151 = vmatpush1.msra.mxu0 %v440
    %2152 = vmatprep.subr.mxu0 %v445
    %2153 = vmatpush1.msra.mxu0 %v444
    %2154 = vmatprep.subr.mxu0 %v449
    %2155 = vmatpush1.msra.mxu0 %v448
    %2156 = vmatprep.subr.mxu0 %v453
    %2157 = vmatpush1.msra.mxu0 %v452
    %2158 = vmatprep.subr.mxu0 %v457
    %2159 = vmatpush1.msra.mxu0 %v456
    %2160 = vmatprep.subr.mxu0 %v461
    %2161 = vmatpush1.msra.mxu0 %v460
    %2162 = vmatprep.subr.mxu0 %v465
    %2163 = vmatpush1.msra.mxu0 %v464
    %2164 = vmatprep.subr.mxu0 %v469
    %2165 = vmatpush1.msra.mxu0 %v468
    %2166 = vmatprep.subr.mxu0 %v473
    %2167 = vmatpush1.msra.mxu0 %v472
    %2168 = vmatprep.subr.mxu0 %v477
    %2169 = vmatpush1.msra.mxu0 %v476
    %2170 = vmatprep.subr.mxu0 %v481
    %2171 = vmatpush1.msra.mxu0 %v480
    %2172 = vmatprep.subr.mxu0 %v485
    %2173 = vmatpush1.msra.mxu0 %v484
    %2174 = vmatprep.subr.mxu0 0.0
    %2175 = vmatpush1.msra.mxu0 0.0
    %2176 = vmatprep.subr.mxu0 0.0
    %2177 = vmatpush1.msra.mxu0 0.0
    %2178 = vmatprep.subr.mxu0 0.0
    %2179 = vmatpush1.msra.mxu0 0.0
    %2180 = vmatprep.subr.mxu0 0.0
    %2181 = vmatpush1.msra.mxu0 0.0
    %2182 = vmatprep.subr.mxu0 0.0
    %2183 = vmatpush1.msra.mxu0 0.0
    %2184 = vmatprep.subr.mxu0 0.0
    %2185 = vmatpush1.msra.mxu0 0.0
    %2186 = vmatprep.subr.mxu0 0.0
    %2187 = vmatpush1.msra.mxu0 0.0
    %2188 = vmatprep.subr.mxu0 0.0
    %2189 = vmatpush1.msra.mxu0 0.0
    %2190 = vmatprep.subr.mxu0 0.0
    %2191 = vmatpush1.msra.mxu0 0.0
    %2192 = vmatprep.subr.mxu0 0.0
    %2193 = vmatpush1.msra.mxu0 0.0
    %2194 = vmatprep.subr.mxu0 0.0
    %2195 = vmatpush1.msra.mxu0 0.0
    %2196 = vmatprep.subr.mxu0 0.0
    %2197 = vmatpush1.msra.mxu0 0.0
    %2198 = vmatprep.subr.mxu0 0.0
    %2199 = vmatpush1.msra.mxu0 0.0
    %2200 = vmatprep.subr.mxu0 0.0
    %2201 = vmatpush1.msra.mxu0 0.0
    %2202 = vmatprep.subr.mxu0 0.0
    %2203 = vmatpush1.msra.mxu0 0.0
    %2204 = vmatprep.subr.mxu0 0.0
    %2205 = vmatpush1.msra.mxu0 0.0
    %2206 = vmatprep.mubr.f32.mxu0 0.0
    %2207 = vmatmul.mubr.f32.gmra.mrb[0].mxu0 %v1757
    %v2208 = vpop.f32.mrb[0].mxu0
    %v2209 = vadd.f32 0.0, %v2208
    %v2210 = vpop.f32.mrb[0].mxu0
    %v2211 = vadd.f32 0.0, %v2210
    %2212 = vdwg.mxu0
    %v2213 = vadd.f32 %v2067, %v2138
    %v2214 = vadd.f32 %v2068, %v2140
    %v2215 = vadd.f32 %v2069, %v2209
    %v2216 = vadd.f32 %v2070, %v2211
    %v2217 = vmul.f32 %v2213, 0.5
    %v2218 = vtanh.pop %v2217
    %v2219 = vmul.f32 %v2218, 0.5
    %v2220 = vadd.f32 %v2219, 0.5
    %v2221 = vmul.f32 %v2214, 0.5
    %v2222 = vtanh.pop %v2221
    %v2223 = vmul.f32 %v2222, 0.5
    %v2224 = vadd.f32 %v2223, 0.5
    %v2225 = vtanh.pop %v2215
    %v2226 = vmul.f32 %v2216, 0.5
    %v2227 = vtanh.pop %v2226
    %v2228 = vmul.f32 %v2227, 0.5
    %v2229 = vadd.f32 %v2228, 0.5
    %v2230 = vmul.f32 %v2224, %v1755
    %v2231 = vmul.f32 %v2220, %v2225
    %v2232 = vadd.f32 %v2230, %v2231
    %v2233 = vtanh.pop %v2232
    %v2234 = vmul.f32 %v2229, %v2233
    %v2235 = vmax.f32 %v2234, 0.0
    %2236 = vmatprep.subr.mxu0 %v551
    %2237 = vmatpush1.msra.mxu0 %v550
    %2238 = vmatprep.subr.mxu0 %v555
    %2239 = vmatpush1.msra.mxu0 %v554
    %2240 = vmatprep.subr.mxu0 %v559
    %2241 = vmatpush1.msra.mxu0 %v558
    %2242 = vmatprep.subr.mxu0 %v563
    %2243 = vmatpush1.msra.mxu0 %v562
    %2244 = vmatprep.subr.mxu0 %v567
    %2245 = vmatpush1.msra.mxu0 %v566
    %2246 = vmatprep.subr.mxu0 %v571
    %2247 = vmatpush1.msra.mxu0 %v570
    %2248 = vmatprep.subr.mxu0 %v575
    %2249 = vmatpush1.msra.mxu0 %v574
    %2250 = vmatprep.subr.mxu0 %v579
    %2251 = vmatpush1.msra.mxu0 %v578
    %2252 = vmatprep.subr.mxu0 %v583
    %2253 = vmatpush1.msra.mxu0 %v582
    %2254 = vmatprep.subr.mxu0 %v587
    %2255 = vmatpush1.msra.mxu0 %v586
    %2256 = vmatprep.subr.mxu0 %v591
    %2257 = vmatpush1.msra.mxu0 %v590
    %2258 = vmatprep.subr.mxu0 %v595
    %2259 = vmatpush1.msra.mxu0 %v594
    %2260 = vmatprep.subr.mxu0 %v599
    %2261 = vmatpush1.msra.mxu0 %v598
    %2262 = vmatprep.subr.mxu0 %v603
    %2263 = vmatpush1.msra.mxu0 %v602
    %2264 = vmatprep.subr.mxu0 %v607
    %2265 = vmatpush1.msra.mxu0 %v606
    %2266 = vmatprep.subr.mxu0 %v611
    %2267 = vmatpush1.msra.mxu0 %v610
    %2268 = vmatprep.subr.mxu0 0.0
    %2269 = vmatpush1.msra.mxu0 0.0
    %2270 = vmatprep.subr.mxu0 0.0
    %2271 = vmatpush1.msra.mxu0 0.0
    %2272 = vmatprep.subr.mxu0 0.0
    %2273 = vmatpush1.msra.mxu0 0.0
    %2274 = vmatprep.subr.mxu0 0.0
    %2275 = vmatpush1.msra.mxu0 0.0
    %2276 = vmatprep.subr.mxu0 0.0
    %2277 = vmatpush1.msra.mxu0 0.0
    %2278 = vmatprep.subr.mxu0 0.0
    %2279 = vmatpush1.msra.mxu0 0.0
    %2280 = vmatprep.subr.mxu0 0.0
    %2281 = vmatpush1.msra.mxu0 0.0
    %2282 = vmatprep.subr.mxu0 0.0
    %2283 = vmatpush1.msra.mxu0 0.0
    %2284 = vmatprep.subr.mxu0 0.0
    %2285 = vmatpush1.msra.mxu0 0.0
    %2286 = vmatprep.subr.mxu0 0.0
    %2287 = vmatpush1.msra.mxu0 0.0
    %2288 = vmatprep.subr.mxu0 0.0
    %2289 = vmatpush1.msra.mxu0 0.0
    %2290 = vmatprep.subr.mxu0 0.0
    %2291 = vmatpush1.msra.mxu0 0.0
    %2292 = vmatprep.subr.mxu0 0.0
    %2293 = vmatpush1.msra.mxu0 0.0
    %2294 = vmatprep.subr.mxu0 0.0
    %2295 = vmatpush1.msra.mxu0 0.0
    %2296 = vmatprep.subr.mxu0 0.0
    %2297 = vmatpush1.msra.mxu0 0.0
    %2298 = vmatprep.subr.mxu0 0.0
    %2299 = vmatpush1.msra.mxu0 0.0
    %2300 = vmatprep.mubr.f32.mxu0 0.0
    %2301 = vmatmul.mubr.f32.gmra.mrb[0].mxu0 %v2064
    %v2302 = vpop.f32.mrb[0].mxu0
    %v2303 = vadd.f32 0.0, %v2302
    %v2304 = vpop.f32.mrb[0].mxu0
    %v2305 = vadd.f32 0.0, %v2304
    %2306 = vdwg.mxu0
    %2307 = vmatprep.subr.mxu0 %v553
    %2308 = vmatpush1.msra.mxu0 %v552
    %2309 = vmatprep.subr.mxu0 %v557
    %2310 = vmatpush1.msra.mxu0 %v556
    %2311 = vmatprep.subr.mxu0 %v561
    %2312 = vmatpush1.msra.mxu0 %v560
    %2313 = vmatprep.subr.mxu0 %v565
    %2314 = vmatpush1.msra.mxu0 %v564
    %2315 = vmatprep.subr.mxu0 %v569
    %2316 = vmatpush1.msra.mxu0 %v568
    %2317 = vmatprep.subr.mxu0 %v573
    %2318 = vmatpush1.msra.mxu0 %v572
    %2319 = vmatprep.subr.mxu0 %v577
    %2320 = vmatpush1.msra.mxu0 %v576
    %2321 = vmatprep.subr.mxu0 %v581
    %2322 = vmatpush1.msra.mxu0 %v580
    %2323 = vmatprep.subr.mxu0 %v585
    %2324 = vmatpush1.msra.mxu0 %v584
    %2325 = vmatprep.subr.mxu0 %v589
    %2326 = vmatpush1.msra.mxu0 %v588
    %2327 = vmatprep.subr.mxu0 %v593
    %2328 = vmatpush1.msra.mxu0 %v592
    %2329 = vmatprep.subr.mxu0 %v597
    %2330 = vmatpush1.msra.mxu0 %v596
    %2331 = vmatprep.subr.mxu0 %v601
    %2332 = vmatpush1.msra.mxu0 %v600
    %2333 = vmatprep.subr.mxu0 %v605
    %2334 = vmatpush1.msra.mxu0 %v604
    %2335 = vmatprep.subr.mxu0 %v609
    %2336 = vmatpush1.msra.mxu0 %v608
    %2337 = vmatprep.subr.mxu0 %v613
    %2338 = vmatpush1.msra.mxu0 %v612
    %2339 = vmatprep.subr.mxu0 0.0
    %2340 = vmatpush1.msra.mxu0 0.0
    %2341 = vmatprep.subr.mxu0 0.0
    %2342 = vmatpush1.msra.mxu0 0.0
    %2343 = vmatprep.subr.mxu0 0.0
    %2344 = vmatpush1.msra.mxu0 0.0
    %2345 = vmatprep.subr.mxu0 0.0
    %2346 = vmatpush1.msra.mxu0 0.0
    %2347 = vmatprep.subr.mxu0 0.0
    %2348 = vmatpush1.msra.mxu0 0.0
    %2349 = vmatprep.subr.mxu0 0.0
    %2350 = vmatpush1.msra.mxu0 0.0
    %2351 = vmatprep.subr.mxu0 0.0
    %2352 = vmatpush1.msra.mxu0 0.0
    %2353 = vmatprep.subr.mxu0 0.0
    %2354 = vmatpush1.msra.mxu0 0.0
    %2355 = vmatprep.subr.mxu0 0.0
    %2356 = vmatpush1.msra.mxu0 0.0
    %2357 = vmatprep.subr.mxu0 0.0
    %2358 = vmatpush1.msra.mxu0 0.0
    %2359 = vmatprep.subr.mxu0 0.0
    %2360 = vmatpush1.msra.mxu0 0.0
    %2361 = vmatprep.subr.mxu0 0.0
    %2362 = vmatpush1.msra.mxu0 0.0
    %2363 = vmatprep.subr.mxu0 0.0
    %2364 = vmatpush1.msra.mxu0 0.0
    %2365 = vmatprep.subr.mxu0 0.0
    %2366 = vmatpush1.msra.mxu0 0.0
    %2367 = vmatprep.subr.mxu0 0.0
    %2368 = vmatpush1.msra.mxu0 0.0
    %2369 = vmatprep.subr.mxu0 0.0
    %2370 = vmatpush1.msra.mxu0 0.0
    %2371 = vmatprep.mubr.f32.mxu0 0.0
    %2372 = vmatmul.mubr.f32.gmra.mrb[0].mxu0 %v2064
    %v2373 = vpop.f32.mrb[0].mxu0
    %v2374 = vadd.f32 0.0, %v2373
    %v2375 = vpop.f32.mrb[0].mxu0
    %v2376 = vadd.f32 0.0, %v2375
    %2377 = vdwg.mxu0
    %2378 = vmatprep.subr.mxu0 %v487
    %2379 = vmatpush1.msra.mxu0 %v486
    %2380 = vmatprep.subr.mxu0 %v491
    %2381 = vmatpush1.msra.mxu0 %v490
    %2382 = vmatprep.subr.mxu0 %v495
    %2383 = vmatpush1.msra.mxu0 %v494
    %2384 = vmatprep.subr.mxu0 %v499
    %2385 = vmatpush1.msra.mxu0 %v498
    %2386 = vmatprep.subr.mxu0 %v503
    %2387 = vmatpush1.msra.mxu0 %v502
    %2388 = vmatprep.subr.mxu0 %v507
    %2389 = vmatpush1.msra.mxu0 %v506
    %2390 = vmatprep.subr.mxu0 %v511
    %2391 = vmatpush1.msra.mxu0 %v510
    %2392 = vmatprep.subr.mxu0 %v515
    %2393 = vmatpush1.msra.mxu0 %v514
    %2394 = vmatprep.subr.mxu0 %v519
    %2395 = vmatpush1.msra.mxu0 %v518
    %2396 = vmatprep.subr.mxu0 %v523
    %2397 = vmatpush1.msra.mxu0 %v522
    %2398 = vmatprep.subr.mxu0 %v527
    %2399 = vmatpush1.msra.mxu0 %v526
    %2400 = vmatprep.subr.mxu0 %v531
    %2401 = vmatpush1.msra.mxu0 %v530
    %2402 = vmatprep.subr.mxu0 %v535
    %2403 = vmatpush1.msra.mxu0 %v534
    %2404 = vmatprep.subr.mxu0 %v539
    %2405 = vmatpush1.msra.mxu0 %v538
    %2406 = vmatprep.subr.mxu0 %v543
    %2407 = vmatpush1.msra.mxu0 %v542
    %2408 = vmatprep.subr.mxu0 %v547
    %2409 = vmatpush1.msra.mxu0 %v546
    %2410 = vmatprep.subr.mxu0 0.0
    %2411 = vmatpush1.msra.mxu0 0.0
    %2412 = vmatprep.subr.mxu0 0.0
    %2413 = vmatpush1.msra.mxu0 0.0
    %2414 = vmatprep.subr.mxu0 0.0
    %2415 = vmatpush1.msra.mxu0 0.0
    %2416 = vmatprep.subr.mxu0 0.0
    %2417 = vmatpush1.msra.mxu0 0.0
    %2418 = vmatprep.subr.mxu0 0.0
    %2419 = vmatpush1.msra.mxu0 0.0
    %2420 = vmatprep.subr.mxu0 0.0
    %2421 = vmatpush1.msra.mxu0 0.0
    %2422 = vmatprep.subr.mxu0 0.0
    %2423 = vmatpush1.msra.mxu0 0.0
    %2424 = vmatprep.subr.mxu0 0.0
    %2425 = vmatpush1.msra.mxu0 0.0
    %2426 = vmatprep.subr.mxu0 0.0
    %2427 = vmatpush1.msra.mxu0 0.0
    %2428 = vmatprep.subr.mxu0 0.0
    %2429 = vmatpush1.msra.mxu0 0.0
    %2430 = vmatprep.subr.mxu0 0.0
    %2431 = vmatpush1.msra.mxu0 0.0
    %2432 = vmatprep.subr.mxu0 0.0
    %2433 = vmatpush1.msra.mxu0 0.0
    %2434 = vmatprep.subr.mxu0 0.0
    %2435 = vmatpush1.msra.mxu0 0.0
    %2436 = vmatprep.subr.mxu0 0.0
    %2437 = vmatpush1.msra.mxu0 0.0
    %2438 = vmatprep.subr.mxu0 0.0
    %2439 = vmatpush1.msra.mxu0 0.0
    %2440 = vmatprep.subr.mxu0 0.0
    %2441 = vmatpush1.msra.mxu0 0.0
    %2442 = vmatprep.mubr.f32.mxu0 0.0
    %2443 = vmatmul.mubr.f32.gmra.mrb[0].mxu0 %v2235
    %v2444 = vpop.f32.mrb[0].mxu0
    %v2445 = vadd.f32 %v2303, %v2444
    %v2446 = vpop.f32.mrb[0].mxu0
    %v2447 = vadd.f32 %v2305, %v2446
    %2448 = vdwg.mxu0
    %2449 = vmatprep.subr.mxu0 %v489
    %2450 = vmatpush1.msra.mxu0 %v488
    %2451 = vmatprep.subr.mxu0 %v493
    %2452 = vmatpush1.msra.mxu0 %v492
    %2453 = vmatprep.subr.mxu0 %v497
    %2454 = vmatpush1.msra.mxu0 %v496
    %2455 = vmatprep.subr.mxu0 %v501
    %2456 = vmatpush1.msra.mxu0 %v500
    %2457 = vmatprep.subr.mxu0 %v505
    %2458 = vmatpush1.msra.mxu0 %v504
    %2459 = vmatprep.subr.mxu0 %v509
    %2460 = vmatpush1.msra.mxu0 %v508
    %2461 = vmatprep.subr.mxu0 %v513
    %2462 = vmatpush1.msra.mxu0 %v512
    %2463 = vmatprep.subr.mxu0 %v517
    %2464 = vmatpush1.msra.mxu0 %v516
    %2465 = vmatprep.subr.mxu0 %v521
    %2466 = vmatpush1.msra.mxu0 %v520
    %2467 = vmatprep.subr.mxu0 %v525
    %2468 = vmatpush1.msra.mxu0 %v524
    %2469 = vmatprep.subr.mxu0 %v529
    %2470 = vmatpush1.msra.mxu0 %v528
    %2471 = vmatprep.subr.mxu0 %v533
    %2472 = vmatpush1.msra.mxu0 %v532
    %2473 = vmatprep.subr.mxu0 %v537
    %2474 = vmatpush1.msra.mxu0 %v536
    %2475 = vmatprep.subr.mxu0 %v541
    %2476 = vmatpush1.msra.mxu0 %v540
    %2477 = vmatprep.subr.mxu0 %v545
    %2478 = vmatpush1.msra.mxu0 %v544
    %2479 = vmatprep.subr.mxu0 %v549
    %2480 = vmatpush1.msra.mxu0 %v548
    %2481 = vmatprep.subr.mxu0 0.0
    %2482 = vmatpush1.msra.mxu0 0.0
    %2483 = vmatprep.subr.mxu0 0.0
    %2484 = vmatpush1.msra.mxu0 0.0
    %2485 = vmatprep.subr.mxu0 0.0
    %2486 = vmatpush1.msra.mxu0 0.0
    %2487 = vmatprep.subr.mxu0 0.0
    %2488 = vmatpush1.msra.mxu0 0.0
    %2489 = vmatprep.subr.mxu0 0.0
    %2490 = vmatpush1.msra.mxu0 0.0
    %2491 = vmatprep.subr.mxu0 0.0
    %2492 = vmatpush1.msra.mxu0 0.0
    %2493 = vmatprep.subr.mxu0 0.0
    %2494 = vmatpush1.msra.mxu0 0.0
    %2495 = vmatprep.subr.mxu0 0.0
    %2496 = vmatpush1.msra.mxu0 0.0
    %2497 = vmatprep.subr.mxu0 0.0
    %2498 = vmatpush1.msra.mxu0 0.0
    %2499 = vmatprep.subr.mxu0 0.0
    %2500 = vmatpush1.msra.mxu0 0.0
    %2501 = vmatprep.subr.mxu0 0.0
    %2502 = vmatpush1.msra.mxu0 0.0
    %2503 = vmatprep.subr.mxu0 0.0
    %2504 = vmatpush1.msra.mxu0 0.0
    %2505 = vmatprep.subr.mxu0 0.0
    %2506 = vmatpush1.msra.mxu0 0.0
    %2507 = vmatprep.subr.mxu0 0.0
    %2508 = vmatpush1.msra.mxu0 0.0
    %2509 = vmatprep.subr.mxu0 0.0
    %2510 = vmatpush1.msra.mxu0 0.0
    %2511 = vmatprep.subr.mxu0 0.0
    %2512 = vmatpush1.msra.mxu0 0.0
    %2513 = vmatprep.mubr.f32.mxu0 0.0
    %2514 = vmatmul.mubr.f32.gmra.mrb[0].mxu0 %v2235
    %v2515 = vpop.f32.mrb[0].mxu0
    %v2516 = vadd.f32 %v2374, %v2515
    %v2517 = vpop.f32.mrb[0].mxu0
    %v2518 = vadd.f32 %v2376, %v2517
    %2519 = vdwg.mxu0
    %v2520 = vadd.f32 %v2445, %v619
    %v2521 = vadd.f32 %v2447, %v623
    %v2522 = vadd.f32 %v2516, %v627
    %v2523 = vadd.f32 %v2518, %v631
    %v2524 = vmul.f32 %v2520, 0.5
    %v2525 = vtanh.pop %v2524
    %v2526 = vmul.f32 %v2525, 0.5
    %v2527 = vadd.f32 %v2526, 0.5
    %v2528 = vmul.f32 %v2521, 0.5
    %v2529 = vtanh.pop %v2528
    %v2530 = vmul.f32 %v2529, 0.5
    %v2531 = vadd.f32 %v2530, 0.5
    %v2532 = vtanh.pop %v2522
    %v2533 = vmul.f32 %v2523, 0.5
    %v2534 = vtanh.pop %v2533
    %v2535 = vmul.f32 %v2534, 0.5
    %v2536 = vadd.f32 %v2535, 0.5
    %v2537 = vmul.f32 %v2531, %v2062
    %v2538 = vmul.f32 %v2527, %v2532
    %v2539 = vadd.f32 %v2537, %v2538
    %v2540 = vtanh.pop %v2539
    %v2541 = vmul.f32 %v2536, %v2540
    %v2542 = vmax.f32 %v2541, 0.0
    %2543 = vst [vmem:[#allocation3 + $0x18] sm:$0xff] %v2542
    %v2544 = vld [vmem:[#allocation2 + $0x80] sm:$0xff]
    %v2545 = vld [vmem:[#allocation2 + $0x88] sm:$0xff]
    %v2546 = vld [vmem:[#allocation2 + $0x90] sm:$0xff]
    %v2547 = vld [vmem:[#allocation2 + $0x98] sm:$0xff]
    %2548 = vmatprep.subr.mxu0 %v423
    %2549 = vmatpush1.msra.mxu0 %v422
    %2550 = vmatprep.subr.mxu0 %v427
    %2551 = vmatpush1.msra.mxu0 %v426
    %2552 = vmatprep.subr.mxu0 %v431
    %2553 = vmatpush1.msra.mxu0 %v430
    %2554 = vmatprep.subr.mxu0 %v435
    %2555 = vmatpush1.msra.mxu0 %v434
    %2556 = vmatprep.subr.mxu0 %v439
    %2557 = vmatpush1.msra.mxu0 %v438
    %2558 = vmatprep.subr.mxu0 %v443
    %2559 = vmatpush1.msra.mxu0 %v442
    %2560 = vmatprep.subr.mxu0 %v447
    %2561 = vmatpush1.msra.mxu0 %v446
    %2562 = vmatprep.subr.mxu0 %v451
    %2563 = vmatpush1.msra.mxu0 %v450
    %2564 = vmatprep.subr.mxu0 %v455
    %2565 = vmatpush1.msra.mxu0 %v454
    %2566 = vmatprep.subr.mxu0 %v459
    %2567 = vmatpush1.msra.mxu0 %v458
    %2568 = vmatprep.subr.mxu0 %v463
    %2569 = vmatpush1.msra.mxu0 %v462
    %2570 = vmatprep.subr.mxu0 %v467
    %2571 = vmatpush1.msra.mxu0 %v466
    %2572 = vmatprep.subr.mxu0 %v471
    %2573 = vmatpush1.msra.mxu0 %v470
    %2574 = vmatprep.subr.mxu0 %v475
    %2575 = vmatpush1.msra.mxu0 %v474
    %2576 = vmatprep.subr.mxu0 %v479
    %2577 = vmatpush1.msra.mxu0 %v478
    %2578 = vmatprep.subr.mxu0 %v483
    %2579 = vmatpush1.msra.mxu0 %v482
    %2580 = vmatprep.subr.mxu0 0.0
    %2581 = vmatpush1.msra.mxu0 0.0
    %2582 = vmatprep.subr.mxu0 0.0
    %2583 = vmatpush1.msra.mxu0 0.0
    %2584 = vmatprep.subr.mxu0 0.0
    %2585 = vmatpush1.msra.mxu0 0.0
    %2586 = vmatprep.subr.mxu0 0.0
    %2587 = vmatpush1.msra.mxu0 0.0
    %2588 = vmatprep.subr.mxu0 0.0
    %2589 = vmatpush1.msra.mxu0 0.0
    %2590 = vmatprep.subr.mxu0 0.0
    %2591 = vmatpush1.msra.mxu0 0.0
    %2592 = vmatprep.subr.mxu0 0.0
    %2593 = vmatpush1.msra.mxu0 0.0
    %2594 = vmatprep.subr.mxu0 0.0
    %2595 = vmatpush1.msra.mxu0 0.0
    %2596 = vmatprep.subr.mxu0 0.0
    %2597 = vmatpush1.msra.mxu0 0.0
    %2598 = vmatprep.subr.mxu0 0.0
    %2599 = vmatpush1.msra.mxu0 0.0
    %2600 = vmatprep.subr.mxu0 0.0
    %2601 = vmatpush1.msra.mxu0 0.0
    %2602 = vmatprep.subr.mxu0 0.0
    %2603 = vmatpush1.msra.mxu0 0.0
    %2604 = vmatprep.subr.mxu0 0.0
    %2605 = vmatpush1.msra.mxu0 0.0
    %2606 = vmatprep.subr.mxu0 0.0
    %2607 = vmatpush1.msra.mxu0 0.0
    %2608 = vmatprep.subr.mxu0 0.0
    %2609 = vmatpush1.msra.mxu0 0.0
    %2610 = vmatprep.subr.mxu0 0.0
    %2611 = vmatpush1.msra.mxu0 0.0
    %2612 = vmatprep.mubr.f32.mxu0 0.0
    %2613 = vmatmul.mubr.f32.gmra.mrb[0].mxu0 %v2234
    %v2614 = vpop.f32.mrb[0].mxu0
    %v2615 = vadd.f32 0.0, %v2614
    %v2616 = vpop.f32.mrb[0].mxu0
    %v2617 = vadd.f32 0.0, %v2616
    %2618 = vdwg.mxu0
    %2619 = vmatprep.subr.mxu0 %v425
    %2620 = vmatpush1.msra.mxu0 %v424
    %2621 = vmatprep.subr.mxu0 %v429
    %2622 = vmatpush1.msra.mxu0 %v428
    %2623 = vmatprep.subr.mxu0 %v433
    %2624 = vmatpush1.msra.mxu0 %v432
    %2625 = vmatprep.subr.mxu0 %v437
    %2626 = vmatpush1.msra.mxu0 %v436
    %2627 = vmatprep.subr.mxu0 %v441
    %2628 = vmatpush1.msra.mxu0 %v440
    %2629 = vmatprep.subr.mxu0 %v445
    %2630 = vmatpush1.msra.mxu0 %v444
    %2631 = vmatprep.subr.mxu0 %v449
    %2632 = vmatpush1.msra.mxu0 %v448
    %2633 = vmatprep.subr.mxu0 %v453
    %2634 = vmatpush1.msra.mxu0 %v452
    %2635 = vmatprep.subr.mxu0 %v457
    %2636 = vmatpush1.msra.mxu0 %v456
    %2637 = vmatprep.subr.mxu0 %v461
    %2638 = vmatpush1.msra.mxu0 %v460
    %2639 = vmatprep.subr.mxu0 %v465
    %2640 = vmatpush1.msra.mxu0 %v464
    %2641 = vmatprep.subr.mxu0 %v469
    %2642 = vmatpush1.msra.mxu0 %v468
    %2643 = vmatprep.subr.mxu0 %v473
    %2644 = vmatpush1.msra.mxu0 %v472
    %2645 = vmatprep.subr.mxu0 %v477
    %2646 = vmatpush1.msra.mxu0 %v476
    %2647 = vmatprep.subr.mxu0 %v481
    %2648 = vmatpush1.msra.mxu0 %v480
    %2649 = vmatprep.subr.mxu0 %v485
    %2650 = vmatpush1.msra.mxu0 %v484
    %2651 = vmatprep.subr.mxu0 0.0
    %2652 = vmatpush1.msra.mxu0 0.0
    %2653 = vmatprep.subr.mxu0 0.0
    %2654 = vmatpush1.msra.mxu0 0.0
    %2655 = vmatprep.subr.mxu0 0.0
    %2656 = vmatpush1.msra.mxu0 0.0
    %2657 = vmatprep.subr.mxu0 0.0
    %2658 = vmatpush1.msra.mxu0 0.0
    %2659 = vmatprep.subr.mxu0 0.0
    %2660 = vmatpush1.msra.mxu0 0.0
    %2661 = vmatprep.subr.mxu0 0.0
    %2662 = vmatpush1.msra.mxu0 0.0
    %2663 = vmatprep.subr.mxu0 0.0
    %2664 = vmatpush1.msra.mxu0 0.0
    %2665 = vmatprep.subr.mxu0 0.0
    %2666 = vmatpush1.msra.mxu0 0.0
    %2667 = vmatprep.subr.mxu0 0.0
    %2668 = vmatpush1.msra.mxu0 0.0
    %2669 = vmatprep.subr.mxu0 0.0
    %2670 = vmatpush1.msra.mxu0 0.0
    %2671 = vmatprep.subr.mxu0 0.0
    %2672 = vmatpush1.msra.mxu0 0.0
    %2673 = vmatprep.subr.mxu0 0.0
    %2674 = vmatpush1.msra.mxu0 0.0
    %2675 = vmatprep.subr.mxu0 0.0
    %2676 = vmatpush1.msra.mxu0 0.0
    %2677 = vmatprep.subr.mxu0 0.0
    %2678 = vmatpush1.msra.mxu0 0.0
    %2679 = vmatprep.subr.mxu0 0.0
    %2680 = vmatpush1.msra.mxu0 0.0
    %2681 = vmatprep.subr.mxu0 0.0
    %2682 = vmatpush1.msra.mxu0 0.0
    %2683 = vmatprep.mubr.f32.mxu0 0.0
    %2684 = vmatmul.mubr.f32.gmra.mrb[0].mxu0 %v2234
    %v2685 = vpop.f32.mrb[0].mxu0
    %v2686 = vadd.f32 0.0, %v2685
    %v2687 = vpop.f32.mrb[0].mxu0
    %v2688 = vadd.f32 0.0, %v2687
    %2689 = vdwg.mxu0
    %v2690 = vadd.f32 %v2544, %v2615
    %v2691 = vadd.f32 %v2545, %v2617
    %v2692 = vadd.f32 %v2546, %v2686
    %v2693 = vadd.f32 %v2547, %v2688
    %v2694 = vmul.f32 %v2690, 0.5
    %v2695 = vtanh.pop %v2694
    %v2696 = vmul.f32 %v2695, 0.5
    %v2697 = vadd.f32 %v2696, 0.5
    %v2698 = vmul.f32 %v2691, 0.5
    %v2699 = vtanh.pop %v2698
    %v2700 = vmul.f32 %v2699, 0.5
    %v2701 = vadd.f32 %v2700, 0.5
    %v2702 = vtanh.pop %v2692
    %v2703 = vmul.f32 %v2693, 0.5
    %v2704 = vtanh.pop %v2703
    %v2705 = vmul.f32 %v2704, 0.5
    %v2706 = vadd.f32 %v2705, 0.5
    %v2707 = vmul.f32 %v2701, %v2232
    %v2708 = vmul.f32 %v2697, %v2702
    %v2709 = vadd.f32 %v2707, %v2708
    %v2710 = vtanh.pop %v2709
    %v2711 = vmul.f32 %v2706, %v2710
    %v2712 = vmax.f32 %v2711, 0.0
    %2713 = vmatprep.subr.mxu0 %v551
    %2714 = vmatpush1.msra.mxu0 %v550
    %2715 = vmatprep.subr.mxu0 %v555
    %2716 = vmatpush1.msra.mxu0 %v554
    %2717 = vmatprep.subr.mxu0 %v559
    %2718 = vmatpush1.msra.mxu0 %v558
    %2719 = vmatprep.subr.mxu0 %v563
    %2720 = vmatpush1.msra.mxu0 %v562
    %2721 = vmatprep.subr.mxu0 %v567
    %2722 = vmatpush1.msra.mxu0 %v566
    %2723 = vmatprep.subr.mxu0 %v571
    %2724 = vmatpush1.msra.mxu0 %v570
    %2725 = vmatprep.subr.mxu0 %v575
    %2726 = vmatpush1.msra.mxu0 %v574
    %2727 = vmatprep.subr.mxu0 %v579
    %2728 = vmatpush1.msra.mxu0 %v578
    %2729 = vmatprep.subr.mxu0 %v583
    %2730 = vmatpush1.msra.mxu0 %v582
    %2731 = vmatprep.subr.mxu0 %v587
    %2732 = vmatpush1.msra.mxu0 %v586
    %2733 = vmatprep.subr.mxu0 %v591
    %2734 = vmatpush1.msra.mxu0 %v590
    %2735 = vmatprep.subr.mxu0 %v595
    %2736 = vmatpush1.msra.mxu0 %v594
    %2737 = vmatprep.subr.mxu0 %v599
    %2738 = vmatpush1.msra.mxu0 %v598
    %2739 = vmatprep.subr.mxu0 %v603
    %2740 = vmatpush1.msra.mxu0 %v602
    %2741 = vmatprep.subr.mxu0 %v607
    %2742 = vmatpush1.msra.mxu0 %v606
    %2743 = vmatprep.subr.mxu0 %v611
    %2744 = vmatpush1.msra.mxu0 %v610
    %2745 = vmatprep.subr.mxu0 0.0
    %2746 = vmatpush1.msra.mxu0 0.0
    %2747 = vmatprep.subr.mxu0 0.0
    %2748 = vmatpush1.msra.mxu0 0.0
    %2749 = vmatprep.subr.mxu0 0.0
    %2750 = vmatpush1.msra.mxu0 0.0
    %2751 = vmatprep.subr.mxu0 0.0
    %2752 = vmatpush1.msra.mxu0 0.0
    %2753 = vmatprep.subr.mxu0 0.0
    %2754 = vmatpush1.msra.mxu0 0.0
    %2755 = vmatprep.subr.mxu0 0.0
    %2756 = vmatpush1.msra.mxu0 0.0
    %2757 = vmatprep.subr.mxu0 0.0
    %2758 = vmatpush1.msra.mxu0 0.0
    %2759 = vmatprep.subr.mxu0 0.0
    %2760 = vmatpush1.msra.mxu0 0.0
    %2761 = vmatprep.subr.mxu0 0.0
    %2762 = vmatpush1.msra.mxu0 0.0
    %2763 = vmatprep.subr.mxu0 0.0
    %2764 = vmatpush1.msra.mxu0 0.0
    %2765 = vmatprep.subr.mxu0 0.0
    %2766 = vmatpush1.msra.mxu0 0.0
    %2767 = vmatprep.subr.mxu0 0.0
    %2768 = vmatpush1.msra.mxu0 0.0
    %2769 = vmatprep.subr.mxu0 0.0
    %2770 = vmatpush1.msra.mxu0 0.0
    %2771 = vmatprep.subr.mxu0 0.0
    %2772 = vmatpush1.msra.mxu0 0.0
    %2773 = vmatprep.subr.mxu0 0.0
    %2774 = vmatpush1.msra.mxu0 0.0
    %2775 = vmatprep.subr.mxu0 0.0
    %2776 = vmatpush1.msra.mxu0 0.0
    %2777 = vmatprep.mubr.f32.mxu0 0.0
    %2778 = vmatmul.mubr.f32.gmra.mrb[0].mxu0 %v2541
    %v2779 = vpop.f32.mrb[0].mxu0
    %v2780 = vadd.f32 0.0, %v2779
    %v2781 = vpop.f32.mrb[0].mxu0
    %v2782 = vadd.f32 0.0, %v2781
    %2783 = vdwg.mxu0
    %2784 = vmatprep.subr.mxu0 %v553
    %2785 = vmatpush1.msra.mxu0 %v552
    %2786 = vmatprep.subr.mxu0 %v557
    %2787 = vmatpush1.msra.mxu0 %v556
    %2788 = vmatprep.subr.mxu0 %v561
    %2789 = vmatpush1.msra.mxu0 %v560
    %2790 = vmatprep.subr.mxu0 %v565
    %2791 = vmatpush1.msra.mxu0 %v564
    %2792 = vmatprep.subr.mxu0 %v569
    %2793 = vmatpush1.msra.mxu0 %v568
    %2794 = vmatprep.subr.mxu0 %v573
    %2795 = vmatpush1.msra.mxu0 %v572
    %2796 = vmatprep.subr.mxu0 %v577
    %2797 = vmatpush1.msra.mxu0 %v576
    %2798 = vmatprep.subr.mxu0 %v581
    %2799 = vmatpush1.msra.mxu0 %v580
    %2800 = vmatprep.subr.mxu0 %v585
    %2801 = vmatpush1.msra.mxu0 %v584
    %2802 = vmatprep.subr.mxu0 %v589
    %2803 = vmatpush1.msra.mxu0 %v588
    %2804 = vmatprep.subr.mxu0 %v593
    %2805 = vmatpush1.msra.mxu0 %v592
    %2806 = vmatprep.subr.mxu0 %v597
    %2807 = vmatpush1.msra.mxu0 %v596
    %2808 = vmatprep.subr.mxu0 %v601
    %2809 = vmatpush1.msra.mxu0 %v600
    %2810 = vmatprep.subr.mxu0 %v605
    %2811 = vmatpush1.msra.mxu0 %v604
    %2812 = vmatprep.subr.mxu0 %v609
    %2813 = vmatpush1.msra.mxu0 %v608
    %2814 = vmatprep.subr.mxu0 %v613
    %2815 = vmatpush1.msra.mxu0 %v612
    %2816 = vmatprep.subr.mxu0 0.0
    %2817 = vmatpush1.msra.mxu0 0.0
    %2818 = vmatprep.subr.mxu0 0.0
    %2819 = vmatpush1.msra.mxu0 0.0
    %2820 = vmatprep.subr.mxu0 0.0
    %2821 = vmatpush1.msra.mxu0 0.0
    %2822 = vmatprep.subr.mxu0 0.0
    %2823 = vmatpush1.msra.mxu0 0.0
    %2824 = vmatprep.subr.mxu0 0.0
    %2825 = vmatpush1.msra.mxu0 0.0
    %2826 = vmatprep.subr.mxu0 0.0
    %2827 = vmatpush1.msra.mxu0 0.0
    %2828 = vmatprep.subr.mxu0 0.0
    %2829 = vmatpush1.msra.mxu0 0.0
    %2830 = vmatprep.subr.mxu0 0.0
    %2831 = vmatpush1.msra.mxu0 0.0
    %2832 = vmatprep.subr.mxu0 0.0
    %2833 = vmatpush1.msra.mxu0 0.0
    %2834 = vmatprep.subr.mxu0 0.0
    %2835 = vmatpush1.msra.mxu0 0.0
    %2836 = vmatprep.subr.mxu0 0.0
    %2837 = vmatpush1.msra.mxu0 0.0
    %2838 = vmatprep.subr.mxu0 0.0
    %2839 = vmatpush1.msra.mxu0 0.0
    %2840 = vmatprep.subr.mxu0 0.0
    %2841 = vmatpush1.msra.mxu0 0.0
    %2842 = vmatprep.subr.mxu0 0.0
    %2843 = vmatpush1.msra.mxu0 0.0
    %2844 = vmatprep.subr.mxu0 0.0
    %2845 = vmatpush1.msra.mxu0 0.0
    %2846 = vmatprep.subr.mxu0 0.0
    %2847 = vmatpush1.msra.mxu0 0.0
    %2848 = vmatprep.mubr.f32.mxu0 0.0
    %2849 = vmatmul.mubr.f32.gmra.mrb[0].mxu0 %v2541
    %v2850 = vpop.f32.mrb[0].mxu0
    %v2851 = vadd.f32 0.0, %v2850
    %v2852 = vpop.f32.mrb[0].mxu0
    %v2853 = vadd.f32 0.0, %v2852
    %2854 = vdwg.mxu0
    %2855 = vmatprep.subr.mxu0 %v487
    %2856 = vmatpush1.msra.mxu0 %v486
    %2857 = vmatprep.subr.mxu0 %v491
    %2858 = vmatpush1.msra.mxu0 %v490
    %2859 = vmatprep.subr.mxu0 %v495
    %2860 = vmatpush1.msra.mxu0 %v494
    %2861 = vmatprep.subr.mxu0 %v499
    %2862 = vmatpush1.msra.mxu0 %v498
    %2863 = vmatprep.subr.mxu0 %v503
    %2864 = vmatpush1.msra.mxu0 %v502
    %2865 = vmatprep.subr.mxu0 %v507
    %2866 = vmatpush1.msra.mxu0 %v506
    %2867 = vmatprep.subr.mxu0 %v511
    %2868 = vmatpush1.msra.mxu0 %v510
    %2869 = vmatprep.subr.mxu0 %v515
    %2870 = vmatpush1.msra.mxu0 %v514
    %2871 = vmatprep.subr.mxu0 %v519
    %2872 = vmatpush1.msra.mxu0 %v518
    %2873 = vmatprep.subr.mxu0 %v523
    %2874 = vmatpush1.msra.mxu0 %v522
    %2875 = vmatprep.subr.mxu0 %v527
    %2876 = vmatpush1.msra.mxu0 %v526
    %2877 = vmatprep.subr.mxu0 %v531
    %2878 = vmatpush1.msra.mxu0 %v530
    %2879 = vmatprep.subr.mxu0 %v535
    %2880 = vmatpush1.msra.mxu0 %v534
    %2881 = vmatprep.subr.mxu0 %v539
    %2882 = vmatpush1.msra.mxu0 %v538
    %2883 = vmatprep.subr.mxu0 %v543
    %2884 = vmatpush1.msra.mxu0 %v542
    %2885 = vmatprep.subr.mxu0 %v547
    %2886 = vmatpush1.msra.mxu0 %v546
    %2887 = vmatprep.subr.mxu0 0.0
    %2888 = vmatpush1.msra.mxu0 0.0
    %2889 = vmatprep.subr.mxu0 0.0
    %2890 = vmatpush1.msra.mxu0 0.0
    %2891 = vmatprep.subr.mxu0 0.0
    %2892 = vmatpush1.msra.mxu0 0.0
    %2893 = vmatprep.subr.mxu0 0.0
    %2894 = vmatpush1.msra.mxu0 0.0
    %2895 = vmatprep.subr.mxu0 0.0
    %2896 = vmatpush1.msra.mxu0 0.0
    %2897 = vmatprep.subr.mxu0 0.0
    %2898 = vmatpush1.msra.mxu0 0.0
    %2899 = vmatprep.subr.mxu0 0.0
    %2900 = vmatpush1.msra.mxu0 0.0
    %2901 = vmatprep.subr.mxu0 0.0
    %2902 = vmatpush1.msra.mxu0 0.0
    %2903 = vmatprep.subr.mxu0 0.0
    %2904 = vmatpush1.msra.mxu0 0.0
    %2905 = vmatprep.subr.mxu0 0.0
    %2906 = vmatpush1.msra.mxu0 0.0
    %2907 = vmatprep.subr.mxu0 0.0
    %2908 = vmatpush1.msra.mxu0 0.0
    %2909 = vmatprep.subr.mxu0 0.0
    %2910 = vmatpush1.msra.mxu0 0.0
    %2911 = vmatprep.subr.mxu0 0.0
    %2912 = vmatpush1.msra.mxu0 0.0
    %2913 = vmatprep.subr.mxu0 0.0
    %2914 = vmatpush1.msra.mxu0 0.0
    %2915 = vmatprep.subr.mxu0 0.0
    %2916 = vmatpush1.msra.mxu0 0.0
    %2917 = vmatprep.subr.mxu0 0.0
    %2918 = vmatpush1.msra.mxu0 0.0
    %2919 = vmatprep.mubr.f32.mxu0 0.0
    %2920 = vmatmul.mubr.f32.gmra.mrb[0].mxu0 %v2712
    %v2921 = vpop.f32.mrb[0].mxu0
    %v2922 = vadd.f32 %v2780, %v2921
    %v2923 = vpop.f32.mrb[0].mxu0
    %v2924 = vadd.f32 %v2782, %v2923
    %2925 = vdwg.mxu0
    %2926 = vmatprep.subr.mxu0 %v489
    %2927 = vmatpush1.msra.mxu0 %v488
    %2928 = vmatprep.subr.mxu0 %v493
    %2929 = vmatpush1.msra.mxu0 %v492
    %2930 = vmatprep.subr.mxu0 %v497
    %2931 = vmatpush1.msra.mxu0 %v496
    %2932 = vmatprep.subr.mxu0 %v501
    %2933 = vmatpush1.msra.mxu0 %v500
    %2934 = vmatprep.subr.mxu0 %v505
    %2935 = vmatpush1.msra.mxu0 %v504
    %2936 = vmatprep.subr.mxu0 %v509
    %2937 = vmatpush1.msra.mxu0 %v508
    %2938 = vmatprep.subr.mxu0 %v513
    %2939 = vmatpush1.msra.mxu0 %v512
    %2940 = vmatprep.subr.mxu0 %v517
    %2941 = vmatpush1.msra.mxu0 %v516
    %2942 = vmatprep.subr.mxu0 %v521
    %2943 = vmatpush1.msra.mxu0 %v520
    %2944 = vmatprep.subr.mxu0 %v525
    %2945 = vmatpush1.msra.mxu0 %v524
    %2946 = vmatprep.subr.mxu0 %v529
    %2947 = vmatpush1.msra.mxu0 %v528
    %2948 = vmatprep.subr.mxu0 %v533
    %2949 = vmatpush1.msra.mxu0 %v532
    %2950 = vmatprep.subr.mxu0 %v537
    %2951 = vmatpush1.msra.mxu0 %v536
    %2952 = vmatprep.subr.mxu0 %v541
    %2953 = vmatpush1.msra.mxu0 %v540
    %2954 = vmatprep.subr.mxu0 %v545
    %2955 = vmatpush1.msra.mxu0 %v544
    %2956 = vmatprep.subr.mxu0 %v549
    %2957 = vmatpush1.msra.mxu0 %v548
    %2958 = vmatprep.subr.mxu0 0.0
    %2959 = vmatpush1.msra.mxu0 0.0
    %2960 = vmatprep.subr.mxu0 0.0
    %2961 = vmatpush1.msra.mxu0 0.0
    %2962 = vmatprep.subr.mxu0 0.0
    %2963 = vmatpush1.msra.mxu0 0.0
    %2964 = vmatprep.subr.mxu0 0.0
    %2965 = vmatpush1.msra.mxu0 0.0
    %2966 = vmatprep.subr.mxu0 0.0
    %2967 = vmatpush1.msra.mxu0 0.0
    %2968 = vmatprep.subr.mxu0 0.0
    %2969 = vmatpush1.msra.mxu0 0.0
    %2970 = vmatprep.subr.mxu0 0.0
    %2971 = vmatpush1.msra.mxu0 0.0
    %2972 = vmatprep.subr.mxu0 0.0
    %2973 = vmatpush1.msra.mxu0 0.0
    %2974 = vmatprep.subr.mxu0 0.0
    %2975 = vmatpush1.msra.mxu0 0.0
    %2976 = vmatprep.subr.mxu0 0.0
    %2977 = vmatpush1.msra.mxu0 0.0
    %2978 = vmatprep.subr.mxu0 0.0
    %2979 = vmatpush1.msra.mxu0 0.0
    %2980 = vmatprep.subr.mxu0 0.0
    %2981 = vmatpush1.msra.mxu0 0.0
    %2982 = vmatprep.subr.mxu0 0.0
    %2983 = vmatpush1.msra.mxu0 0.0
    %2984 = vmatprep.subr.mxu0 0.0
    %2985 = vmatpush1.msra.mxu0 0.0
    %2986 = vmatprep.subr.mxu0 0.0
    %2987 = vmatpush1.msra.mxu0 0.0
    %2988 = vmatprep.subr.mxu0 0.0
    %2989 = vmatpush1.msra.mxu0 0.0
    %2990 = vmatprep.mubr.f32.mxu0 0.0
    %2991 = vmatmul.mubr.f32.gmra.mrb[0].mxu0 %v2712
    %v2992 = vpop.f32.mrb[0].mxu0
    %v2993 = vadd.f32 %v2851, %v2992
    %v2994 = vpop.f32.mrb[0].mxu0
    %v2995 = vadd.f32 %v2853, %v2994
    %2996 = vdwg.mxu0
    %v2997 = vadd.f32 %v2922, %v619
    %v2998 = vadd.f32 %v2924, %v623
    %v2999 = vadd.f32 %v2993, %v627
    %v3000 = vadd.f32 %v2995, %v631
    %v3001 = vmul.f32 %v2997, 0.5
    %v3002 = vtanh.pop %v3001
    %v3003 = vmul.f32 %v3002, 0.5
    %v3004 = vadd.f32 %v3003, 0.5
    %v3005 = vmul.f32 %v2998, 0.5
    %v3006 = vtanh.pop %v3005
    %v3007 = vmul.f32 %v3006, 0.5
    %v3008 = vadd.f32 %v3007, 0.5
    %v3009 = vtanh.pop %v2999
    %v3010 = vmul.f32 %v3000, 0.5
    %v3011 = vtanh.pop %v3010
    %v3012 = vmul.f32 %v3011, 0.5
    %v3013 = vadd.f32 %v3012, 0.5
    %v3014 = vmul.f32 %v3008, %v2539
    %v3015 = vmul.f32 %v3004, %v3009
    %v3016 = vadd.f32 %v3014, %v3015
    %v3017 = vtanh.pop %v3016
    %v3018 = vmul.f32 %v3013, %v3017
    %v3019 = vmax.f32 %v3018, 0.0
    %3020 = vst [vmem:[#allocation3 + $0x20] sm:$0xff] %v3019
    %v3021 = vld [vmem:[#allocation2 + $0xa0] sm:$0xff]
    %v3022 = vld [vmem:[#allocation2 + $0xa8] sm:$0xff]
    %v3023 = vld [vmem:[#allocation2 + $0xb0] sm:$0xff]
    %v3024 = vld [vmem:[#allocation2 + $0xb8] sm:$0xff]
    %3025 = vmatprep.subr.mxu0 %v423
    %3026 = vmatpush1.msra.mxu0 %v422
    %3027 = vmatprep.subr.mxu0 %v427
    %3028 = vmatpush1.msra.mxu0 %v426
    %3029 = vmatprep.subr.mxu0 %v431
    %3030 = vmatpush1.msra.mxu0 %v430
    %3031 = vmatprep.subr.mxu0 %v435
    %3032 = vmatpush1.msra.mxu0 %v434
    %3033 = vmatprep.subr.mxu0 %v439
    %3034 = vmatpush1.msra.mxu0 %v438
    %3035 = vmatprep.subr.mxu0 %v443
    %3036 = vmatpush1.msra.mxu0 %v442
    %3037 = vmatprep.subr.mxu0 %v447
    %3038 = vmatpush1.msra.mxu0 %v446
    %3039 = vmatprep.subr.mxu0 %v451
    %3040 = vmatpush1.msra.mxu0 %v450
    %3041 = vmatprep.subr.mxu0 %v455
    %3042 = vmatpush1.msra.mxu0 %v454
    %3043 = vmatprep.subr.mxu0 %v459
    %3044 = vmatpush1.msra.mxu0 %v458
    %3045 = vmatprep.subr.mxu0 %v463
    %3046 = vmatpush1.msra.mxu0 %v462
    %3047 = vmatprep.subr.mxu0 %v467
    %3048 = vmatpush1.msra.mxu0 %v466
    %3049 = vmatprep.subr.mxu0 %v471
    %3050 = vmatpush1.msra.mxu0 %v470
    %3051 = vmatprep.subr.mxu0 %v475
    %3052 = vmatpush1.msra.mxu0 %v474
    %3053 = vmatprep.subr.mxu0 %v479
    %3054 = vmatpush1.msra.mxu0 %v478
    %3055 = vmatprep.subr.mxu0 %v483
    %3056 = vmatpush1.msra.mxu0 %v482
    %3057 = vmatprep.subr.mxu0 0.0
    %3058 = vmatpush1.msra.mxu0 0.0
    %3059 = vmatprep.subr.mxu0 0.0
    %3060 = vmatpush1.msra.mxu0 0.0
    %3061 = vmatprep.subr.mxu0 0.0
    %3062 = vmatpush1.msra.mxu0 0.0
    %3063 = vmatprep.subr.mxu0 0.0
    %3064 = vmatpush1.msra.mxu0 0.0
    %3065 = vmatprep.subr.mxu0 0.0
    %3066 = vmatpush1.msra.mxu0 0.0
    %3067 = vmatprep.subr.mxu0 0.0
    %3068 = vmatpush1.msra.mxu0 0.0
    %3069 = vmatprep.subr.mxu0 0.0
    %3070 = vmatpush1.msra.mxu0 0.0
    %3071 = vmatprep.subr.mxu0 0.0
    %3072 = vmatpush1.msra.mxu0 0.0
    %3073 = vmatprep.subr.mxu0 0.0
    %3074 = vmatpush1.msra.mxu0 0.0
    %3075 = vmatprep.subr.mxu0 0.0
    %3076 = vmatpush1.msra.mxu0 0.0
    %3077 = vmatprep.subr.mxu0 0.0
    %3078 = vmatpush1.msra.mxu0 0.0
    %3079 = vmatprep.subr.mxu0 0.0
    %3080 = vmatpush1.msra.mxu0 0.0
    %3081 = vmatprep.subr.mxu0 0.0
    %3082 = vmatpush1.msra.mxu0 0.0
    %3083 = vmatprep.subr.mxu0 0.0
    %3084 = vmatpush1.msra.mxu0 0.0
    %3085 = vmatprep.subr.mxu0 0.0
    %3086 = vmatpush1.msra.mxu0 0.0
    %3087 = vmatprep.subr.mxu0 0.0
    %3088 = vmatpush1.msra.mxu0 0.0
    %3089 = vmatprep.mubr.f32.mxu0 0.0
    %3090 = vmatmul.mubr.f32.gmra.mrb[0].mxu0 %v2711
    %v3091 = vpop.f32.mrb[0].mxu0
    %v3092 = vadd.f32 0.0, %v3091
    %v3093 = vpop.f32.mrb[0].mxu0
    %v3094 = vadd.f32 0.0, %v3093
    %3095 = vdwg.mxu0
    %3096 = vmatprep.subr.mxu0 %v425
    %3097 = vmatpush1.msra.mxu0 %v424
    %3098 = vmatprep.subr.mxu0 %v429
    %3099 = vmatpush1.msra.mxu0 %v428
    %3100 = vmatprep.subr.mxu0 %v433
    %3101 = vmatpush1.msra.mxu0 %v432
    %3102 = vmatprep.subr.mxu0 %v437
    %3103 = vmatpush1.msra.mxu0 %v436
    %3104 = vmatprep.subr.mxu0 %v441
    %3105 = vmatpush1.msra.mxu0 %v440
    %3106 = vmatprep.subr.mxu0 %v445
    %3107 = vmatpush1.msra.mxu0 %v444
    %3108 = vmatprep.subr.mxu0 %v449
    %3109 = vmatpush1.msra.mxu0 %v448
    %3110 = vmatprep.subr.mxu0 %v453
    %3111 = vmatpush1.msra.mxu0 %v452
    %3112 = vmatprep.subr.mxu0 %v457
    %3113 = vmatpush1.msra.mxu0 %v456
    %3114 = vmatprep.subr.mxu0 %v461
    %3115 = vmatpush1.msra.mxu0 %v460
    %3116 = vmatprep.subr.mxu0 %v465
    %3117 = vmatpush1.msra.mxu0 %v464
    %3118 = vmatprep.subr.mxu0 %v469
    %3119 = vmatpush1.msra.mxu0 %v468
    %3120 = vmatprep.subr.mxu0 %v473
    %3121 = vmatpush1.msra.mxu0 %v472
    %3122 = vmatprep.subr.mxu0 %v477
    %3123 = vmatpush1.msra.mxu0 %v476
    %3124 = vmatprep.subr.mxu0 %v481
    %3125 = vmatpush1.msra.mxu0 %v480
    %3126 = vmatprep.subr.mxu0 %v485
    %3127 = vmatpush1.msra.mxu0 %v484
    %3128 = vmatprep.subr.mxu0 0.0
    %3129 = vmatpush1.msra.mxu0 0.0
    %3130 = vmatprep.subr.mxu0 0.0
    %3131 = vmatpush1.msra.mxu0 0.0
    %3132 = vmatprep.subr.mxu0 0.0
    %3133 = vmatpush1.msra.mxu0 0.0
    %3134 = vmatprep.subr.mxu0 0.0
    %3135 = vmatpush1.msra.mxu0 0.0
    %3136 = vmatprep.subr.mxu0 0.0
    %3137 = vmatpush1.msra.mxu0 0.0
    %3138 = vmatprep.subr.mxu0 0.0
    %3139 = vmatpush1.msra.mxu0 0.0
    %3140 = vmatprep.subr.mxu0 0.0
    %3141 = vmatpush1.msra.mxu0 0.0
    %3142 = vmatprep.subr.mxu0 0.0
    %3143 = vmatpush1.msra.mxu0 0.0
    %3144 = vmatprep.subr.mxu0 0.0
    %3145 = vmatpush1.msra.mxu0 0.0
    %3146 = vmatprep.subr.mxu0 0.0
    %3147 = vmatpush1.msra.mxu0 0.0
    %3148 = vmatprep.subr.mxu0 0.0
    %3149 = vmatpush1.msra.mxu0 0.0
    %3150 = vmatprep.subr.mxu0 0.0
    %3151 = vmatpush1.msra.mxu0 0.0
    %3152 = vmatprep.subr.mxu0 0.0
    %3153 = vmatpush1.msra.mxu0 0.0
    %3154 = vmatprep.subr.mxu0 0.0
    %3155 = vmatpush1.msra.mxu0 0.0
    %3156 = vmatprep.subr.mxu0 0.0
    %3157 = vmatpush1.msra.mxu0 0.0
    %3158 = vmatprep.subr.mxu0 0.0
    %3159 = vmatpush1.msra.mxu0 0.0
    %3160 = vmatprep.mubr.f32.mxu0 0.0
    %3161 = vmatmul.mubr.f32.gmra.mrb[0].mxu0 %v2711
    %v3162 = vpop.f32.mrb[0].mxu0
    %v3163 = vadd.f32 0.0, %v3162
    %v3164 = vpop.f32.mrb[0].mxu0
    %v3165 = vadd.f32 0.0, %v3164
    %3166 = vdwg.mxu0
    %v3167 = vadd.f32 %v3021, %v3092
    %v3168 = vadd.f32 %v3022, %v3094
    %v3169 = vadd.f32 %v3023, %v3163
    %v3170 = vadd.f32 %v3024, %v3165
    %v3171 = vmul.f32 %v3167, 0.5
    %v3172 = vtanh.pop %v3171
    %v3173 = vmul.f32 %v3172, 0.5
    %v3174 = vadd.f32 %v3173, 0.5
    %v3175 = vmul.f32 %v3168, 0.5
    %v3176 = vtanh.pop %v3175
    %v3177 = vmul.f32 %v3176, 0.5
    %v3178 = vadd.f32 %v3177, 0.5
    %v3179 = vtanh.pop %v3169
    %v3180 = vmul.f32 %v3170, 0.5
    %v3181 = vtanh.pop %v3180
    %v3182 = vmul.f32 %v3181, 0.5
    %v3183 = vadd.f32 %v3182, 0.5
    %v3184 = vmul.f32 %v3178, %v2709
    %v3185 = vmul.f32 %v3174, %v3179
    %v3186 = vadd.f32 %v3184, %v3185
    %v3187 = vtanh.pop %v3186
    %v3188 = vmul.f32 %v3183, %v3187
    %v3189 = vmax.f32 %v3188, 0.0
    %3190 = vmatprep.subr.mxu0 %v551
    %3191 = vmatpush1.msra.mxu0 %v550
    %3192 = vmatprep.subr.mxu0 %v555
    %3193 = vmatpush1.msra.mxu0 %v554
    %3194 = vmatprep.subr.mxu0 %v559
    %3195 = vmatpush1.msra.mxu0 %v558
    %3196 = vmatprep.subr.mxu0 %v563
    %3197 = vmatpush1.msra.mxu0 %v562
    %3198 = vmatprep.subr.mxu0 %v567
    %3199 = vmatpush1.msra.mxu0 %v566
    %3200 = vmatprep.subr.mxu0 %v571
    %3201 = vmatpush1.msra.mxu0 %v570
    %3202 = vmatprep.subr.mxu0 %v575
    %3203 = vmatpush1.msra.mxu0 %v574
    %3204 = vmatprep.subr.mxu0 %v579
    %3205 = vmatpush1.msra.mxu0 %v578
    %3206 = vmatprep.subr.mxu0 %v583
    %3207 = vmatpush1.msra.mxu0 %v582
    %3208 = vmatprep.subr.mxu0 %v587
    %3209 = vmatpush1.msra.mxu0 %v586
    %3210 = vmatprep.subr.mxu0 %v591
    %3211 = vmatpush1.msra.mxu0 %v590
    %3212 = vmatprep.subr.mxu0 %v595
    %3213 = vmatpush1.msra.mxu0 %v594
    %3214 = vmatprep.subr.mxu0 %v599
    %3215 = vmatpush1.msra.mxu0 %v598
    %3216 = vmatprep.subr.mxu0 %v603
    %3217 = vmatpush1.msra.mxu0 %v602
    %3218 = vmatprep.subr.mxu0 %v607
    %3219 = vmatpush1.msra.mxu0 %v606
    %3220 = vmatprep.subr.mxu0 %v611
    %3221 = vmatpush1.msra.mxu0 %v610
    %3222 = vmatprep.subr.mxu0 0.0
    %3223 = vmatpush1.msra.mxu0 0.0
    %3224 = vmatprep.subr.mxu0 0.0
    %3225 = vmatpush1.msra.mxu0 0.0
    %3226 = vmatprep.subr.mxu0 0.0
    %3227 = vmatpush1.msra.mxu0 0.0
    %3228 = vmatprep.subr.mxu0 0.0
    %3229 = vmatpush1.msra.mxu0 0.0
    %3230 = vmatprep.subr.mxu0 0.0
    %3231 = vmatpush1.msra.mxu0 0.0
    %3232 = vmatprep.subr.mxu0 0.0
    %3233 = vmatpush1.msra.mxu0 0.0
    %3234 = vmatprep.subr.mxu0 0.0
    %3235 = vmatpush1.msra.mxu0 0.0
    %3236 = vmatprep.subr.mxu0 0.0
    %3237 = vmatpush1.msra.mxu0 0.0
    %3238 = vmatprep.subr.mxu0 0.0
    %3239 = vmatpush1.msra.mxu0 0.0
    %3240 = vmatprep.subr.mxu0 0.0
    %3241 = vmatpush1.msra.mxu0 0.0
    %3242 = vmatprep.subr.mxu0 0.0
    %3243 = vmatpush1.msra.mxu0 0.0
    %3244 = vmatprep.subr.mxu0 0.0
    %3245 = vmatpush1.msra.mxu0 0.0
    %3246 = vmatprep.subr.mxu0 0.0
    %3247 = vmatpush1.msra.mxu0 0.0
    %3248 = vmatprep.subr.mxu0 0.0
    %3249 = vmatpush1.msra.mxu0 0.0
    %3250 = vmatprep.subr.mxu0 0.0
    %3251 = vmatpush1.msra.mxu0 0.0
    %3252 = vmatprep.subr.mxu0 0.0
    %3253 = vmatpush1.msra.mxu0 0.0
    %3254 = vmatprep.mubr.f32.mxu0 0.0
    %3255 = vmatmul.mubr.f32.gmra.mrb[0].mxu0 %v3018
    %v3256 = vpop.f32.mrb[0].mxu0
    %v3257 = vadd.f32 0.0, %v3256
    %v3258 = vpop.f32.mrb[0].mxu0
    %v3259 = vadd.f32 0.0, %v3258
    %3260 = vdwg.mxu0
    %3261 = vmatprep.subr.mxu0 %v553
    %3262 = vmatpush1.msra.mxu0 %v552
    %3263 = vmatprep.subr.mxu0 %v557
    %3264 = vmatpush1.msra.mxu0 %v556
    %3265 = vmatprep.subr.mxu0 %v561
    %3266 = vmatpush1.msra.mxu0 %v560
    %3267 = vmatprep.subr.mxu0 %v565
    %3268 = vmatpush1.msra.mxu0 %v564
    %3269 = vmatprep.subr.mxu0 %v569
    %3270 = vmatpush1.msra.mxu0 %v568
    %3271 = vmatprep.subr.mxu0 %v573
    %3272 = vmatpush1.msra.mxu0 %v572
    %3273 = vmatprep.subr.mxu0 %v577
    %3274 = vmatpush1.msra.mxu0 %v576
    %3275 = vmatprep.subr.mxu0 %v581
    %3276 = vmatpush1.msra.mxu0 %v580
    %3277 = vmatprep.subr.mxu0 %v585
    %3278 = vmatpush1.msra.mxu0 %v584
    %3279 = vmatprep.subr.mxu0 %v589
    %3280 = vmatpush1.msra.mxu0 %v588
    %3281 = vmatprep.subr.mxu0 %v593
    %3282 = vmatpush1.msra.mxu0 %v592
    %3283 = vmatprep.subr.mxu0 %v597
    %3284 = vmatpush1.msra.mxu0 %v596
    %3285 = vmatprep.subr.mxu0 %v601
    %3286 = vmatpush1.msra.mxu0 %v600
    %3287 = vmatprep.subr.mxu0 %v605
    %3288 = vmatpush1.msra.mxu0 %v604
    %3289 = vmatprep.subr.mxu0 %v609
    %3290 = vmatpush1.msra.mxu0 %v608
    %3291 = vmatprep.subr.mxu0 %v613
    %3292 = vmatpush1.msra.mxu0 %v612
    %3293 = vmatprep.subr.mxu0 0.0
    %3294 = vmatpush1.msra.mxu0 0.0
    %3295 = vmatprep.subr.mxu0 0.0
    %3296 = vmatpush1.msra.mxu0 0.0
    %3297 = vmatprep.subr.mxu0 0.0
    %3298 = vmatpush1.msra.mxu0 0.0
    %3299 = vmatprep.subr.mxu0 0.0
    %3300 = vmatpush1.msra.mxu0 0.0
    %3301 = vmatprep.subr.mxu0 0.0
    %3302 = vmatpush1.msra.mxu0 0.0
    %3303 = vmatprep.subr.mxu0 0.0
    %3304 = vmatpush1.msra.mxu0 0.0
    %3305 = vmatprep.subr.mxu0 0.0
    %3306 = vmatpush1.msra.mxu0 0.0
    %3307 = vmatprep.subr.mxu0 0.0
    %3308 = vmatpush1.msra.mxu0 0.0
    %3309 = vmatprep.subr.mxu0 0.0
    %3310 = vmatpush1.msra.mxu0 0.0
    %3311 = vmatprep.subr.mxu0 0.0
    %3312 = vmatpush1.msra.mxu0 0.0
    %3313 = vmatprep.subr.mxu0 0.0
    %3314 = vmatpush1.msra.mxu0 0.0
    %3315 = vmatprep.subr.mxu0 0.0
    %3316 = vmatpush1.msra.mxu0 0.0
    %3317 = vmatprep.subr.mxu0 0.0
    %3318 = vmatpush1.msra.mxu0 0.0
    %3319 = vmatprep.subr.mxu0 0.0
    %3320 = vmatpush1.msra.mxu0 0.0
    %3321 = vmatprep.subr.mxu0 0.0
    %3322 = vmatpush1.msra.mxu0 0.0
    %3323 = vmatprep.subr.mxu0 0.0
    %3324 = vmatpush1.msra.mxu0 0.0
    %3325 = vmatprep.mubr.f32.mxu0 0.0
    %3326 = vmatmul.mubr.f32.gmra.mrb[0].mxu0 %v3018
    %v3327 = vpop.f32.mrb[0].mxu0
    %v3328 = vadd.f32 0.0, %v3327
    %v3329 = vpop.f32.mrb[0].mxu0
    %v3330 = vadd.f32 0.0, %v3329
    %3331 = vdwg.mxu0
    %3332 = vmatprep.subr.mxu0 %v487
    %3333 = vmatpush1.msra.mxu0 %v486
    %3334 = vmatprep.subr.mxu0 %v491
    %3335 = vmatpush1.msra.mxu0 %v490
    %3336 = vmatprep.subr.mxu0 %v495
    %3337 = vmatpush1.msra.mxu0 %v494
    %3338 = vmatprep.subr.mxu0 %v499
    %3339 = vmatpush1.msra.mxu0 %v498
    %3340 = vmatprep.subr.mxu0 %v503
    %3341 = vmatpush1.msra.mxu0 %v502
    %3342 = vmatprep.subr.mxu0 %v507
    %3343 = vmatpush1.msra.mxu0 %v506
    %3344 = vmatprep.subr.mxu0 %v511
    %3345 = vmatpush1.msra.mxu0 %v510
    %3346 = vmatprep.subr.mxu0 %v515
    %3347 = vmatpush1.msra.mxu0 %v514
    %3348 = vmatprep.subr.mxu0 %v519
    %3349 = vmatpush1.msra.mxu0 %v518
    %3350 = vmatprep.subr.mxu0 %v523
    %3351 = vmatpush1.msra.mxu0 %v522
    %3352 = vmatprep.subr.mxu0 %v527
    %3353 = vmatpush1.msra.mxu0 %v526
    %3354 = vmatprep.subr.mxu0 %v531
    %3355 = vmatpush1.msra.mxu0 %v530
    %3356 = vmatprep.subr.mxu0 %v535
    %3357 = vmatpush1.msra.mxu0 %v534
    %3358 = vmatprep.subr.mxu0 %v539
    %3359 = vmatpush1.msra.mxu0 %v538
    %3360 = vmatprep.subr.mxu0 %v543
    %3361 = vmatpush1.msra.mxu0 %v542
    %3362 = vmatprep.subr.mxu0 %v547
    %3363 = vmatpush1.msra.mxu0 %v546
    %3364 = vmatprep.subr.mxu0 0.0
    %3365 = vmatpush1.msra.mxu0 0.0
    %3366 = vmatprep.subr.mxu0 0.0
    %3367 = vmatpush1.msra.mxu0 0.0
    %3368 = vmatprep.subr.mxu0 0.0
    %3369 = vmatpush1.msra.mxu0 0.0
    %3370 = vmatprep.subr.mxu0 0.0
    %3371 = vmatpush1.msra.mxu0 0.0
    %3372 = vmatprep.subr.mxu0 0.0
    %3373 = vmatpush1.msra.mxu0 0.0
    %3374 = vmatprep.subr.mxu0 0.0
    %3375 = vmatpush1.msra.mxu0 0.0
    %3376 = vmatprep.subr.mxu0 0.0
    %3377 = vmatpush1.msra.mxu0 0.0
    %3378 = vmatprep.subr.mxu0 0.0
    %3379 = vmatpush1.msra.mxu0 0.0
    %3380 = vmatprep.subr.mxu0 0.0
    %3381 = vmatpush1.msra.mxu0 0.0
    %3382 = vmatprep.subr.mxu0 0.0
    %3383 = vmatpush1.msra.mxu0 0.0
    %3384 = vmatprep.subr.mxu0 0.0
    %3385 = vmatpush1.msra.mxu0 0.0
    %3386 = vmatprep.subr.mxu0 0.0
    %3387 = vmatpush1.msra.mxu0 0.0
    %3388 = vmatprep.subr.mxu0 0.0
    %3389 = vmatpush1.msra.mxu0 0.0
    %3390 = vmatprep.subr.mxu0 0.0
    %3391 = vmatpush1.msra.mxu0 0.0
    %3392 = vmatprep.subr.mxu0 0.0
    %3393 = vmatpush1.msra.mxu0 0.0
    %3394 = vmatprep.subr.mxu0 0.0
    %3395 = vmatpush1.msra.mxu0 0.0
    %3396 = vmatprep.mubr.f32.mxu0 0.0
    %3397 = vmatmul.mubr.f32.gmra.mrb[0].mxu0 %v3189
    %v3398 = vpop.f32.mrb[0].mxu0
    %v3399 = vadd.f32 %v3257, %v3398
    %v3400 = vpop.f32.mrb[0].mxu0
    %v3401 = vadd.f32 %v3259, %v3400
    %3402 = vdwg.mxu0
    %3403 = vmatprep.subr.mxu0 %v489
    %3404 = vmatpush1.msra.mxu0 %v488
    %3405 = vmatprep.subr.mxu0 %v493
    %3406 = vmatpush1.msra.mxu0 %v492
    %3407 = vmatprep.subr.mxu0 %v497
    %3408 = vmatpush1.msra.mxu0 %v496
    %3409 = vmatprep.subr.mxu0 %v501
    %3410 = vmatpush1.msra.mxu0 %v500
    %3411 = vmatprep.subr.mxu0 %v505
    %3412 = vmatpush1.msra.mxu0 %v504
    %3413 = vmatprep.subr.mxu0 %v509
    %3414 = vmatpush1.msra.mxu0 %v508
    %3415 = vmatprep.subr.mxu0 %v513
    %3416 = vmatpush1.msra.mxu0 %v512
    %3417 = vmatprep.subr.mxu0 %v517
    %3418 = vmatpush1.msra.mxu0 %v516
    %3419 = vmatprep.subr.mxu0 %v521
    %3420 = vmatpush1.msra.mxu0 %v520
    %3421 = vmatprep.subr.mxu0 %v525
    %3422 = vmatpush1.msra.mxu0 %v524
    %3423 = vmatprep.subr.mxu0 %v529
    %3424 = vmatpush1.msra.mxu0 %v528
    %3425 = vmatprep.subr.mxu0 %v533
    %3426 = vmatpush1.msra.mxu0 %v532
    %3427 = vmatprep.subr.mxu0 %v537
    %3428 = vmatpush1.msra.mxu0 %v536
    %3429 = vmatprep.subr.mxu0 %v541
    %3430 = vmatpush1.msra.mxu0 %v540
    %3431 = vmatprep.subr.mxu0 %v545
    %3432 = vmatpush1.msra.mxu0 %v544
    %3433 = vmatprep.subr.mxu0 %v549
    %3434 = vmatpush1.msra.mxu0 %v548
    %3435 = vmatprep.subr.mxu0 0.0
    %3436 = vmatpush1.msra.mxu0 0.0
    %3437 = vmatprep.subr.mxu0 0.0
    %3438 = vmatpush1.msra.mxu0 0.0
    %3439 = vmatprep.subr.mxu0 0.0
    %3440 = vmatpush1.msra.mxu0 0.0
    %3441 = vmatprep.subr.mxu0 0.0
    %3442 = vmatpush1.msra.mxu0 0.0
    %3443 = vmatprep.subr.mxu0 0.0
    %3444 = vmatpush1.msra.mxu0 0.0
    %3445 = vmatprep.subr.mxu0 0.0
    %3446 = vmatpush1.msra.mxu0 0.0
    %3447 = vmatprep.subr.mxu0 0.0
    %3448 = vmatpush1.msra.mxu0 0.0
    %3449 = vmatprep.subr.mxu0 0.0
    %3450 = vmatpush1.msra.mxu0 0.0
    %3451 = vmatprep.subr.mxu0 0.0
    %3452 = vmatpush1.msra.mxu0 0.0
    %3453 = vmatprep.subr.mxu0 0.0
    %3454 = vmatpush1.msra.mxu0 0.0
    %3455 = vmatprep.subr.mxu0 0.0
    %3456 = vmatpush1.msra.mxu0 0.0
    %3457 = vmatprep.subr.mxu0 0.0
    %3458 = vmatpush1.msra.mxu0 0.0
    %3459 = vmatprep.subr.mxu0 0.0
    %3460 = vmatpush1.msra.mxu0 0.0
    %3461 = vmatprep.subr.mxu0 0.0
    %3462 = vmatpush1.msra.mxu0 0.0
    %3463 = vmatprep.subr.mxu0 0.0
    %3464 = vmatpush1.msra.mxu0 0.0
    %3465 = vmatprep.subr.mxu0 0.0
    %3466 = vmatpush1.msra.mxu0 0.0
    %3467 = vmatprep.mubr.f32.mxu0 0.0
    %3468 = vmatmul.mubr.f32.gmra.mrb[0].mxu0 %v3189
    %v3469 = vpop.f32.mrb[0].mxu0
    %v3470 = vadd.f32 %v3328, %v3469
    %v3471 = vpop.f32.mrb[0].mxu0
    %v3472 = vadd.f32 %v3330, %v3471
    %3473 = vdwg.mxu0
    %v3474 = vadd.f32 %v3399, %v619
    %v3475 = vadd.f32 %v3401, %v623
    %v3476 = vadd.f32 %v3470, %v627
    %v3477 = vadd.f32 %v3472, %v631
    %v3478 = vmul.f32 %v3474, 0.5
    %v3479 = vtanh.pop %v3478
    %v3480 = vmul.f32 %v3479, 0.5
    %v3481 = vadd.f32 %v3480, 0.5
    %v3482 = vmul.f32 %v3475, 0.5
    %v3483 = vtanh.pop %v3482
    %v3484 = vmul.f32 %v3483, 0.5
    %v3485 = vadd.f32 %v3484, 0.5
    %v3486 = vtanh.pop %v3476
    %v3487 = vmul.f32 %v3477, 0.5
    %v3488 = vtanh.pop %v3487
    %v3489 = vmul.f32 %v3488, 0.5
    %v3490 = vadd.f32 %v3489, 0.5
    %v3491 = vmul.f32 %v3485, %v3016
    %v3492 = vmul.f32 %v3481, %v3486
    %v3493 = vadd.f32 %v3491, %v3492
    %v3494 = vtanh.pop %v3493
    %v3495 = vmul.f32 %v3490, %v3494
    %v3496 = vmax.f32 %v3495, 0.0
    %3497 = vst [vmem:[#allocation3 + $0x28] sm:$0xff] %v3496
    %v3498 = vld [vmem:[#allocation2 + $0xc0] sm:$0xff]
    %v3499 = vld [vmem:[#allocation2 + $0xc8] sm:$0xff]
    %v3500 = vld [vmem:[#allocation2 + $0xd0] sm:$0xff]
    %v3501 = vld [vmem:[#allocation2 + $0xd8] sm:$0xff]
    %3502 = vmatprep.subr.mxu0 %v423
    %3503 = vmatpush1.msra.mxu0 %v422
    %3504 = vmatprep.subr.mxu0 %v427
    %3505 = vmatpush1.msra.mxu0 %v426
    %3506 = vmatprep.subr.mxu0 %v431
    %3507 = vmatpush1.msra.mxu0 %v430
    %3508 = vmatprep.subr.mxu0 %v435
    %3509 = vmatpush1.msra.mxu0 %v434
    %3510 = vmatprep.subr.mxu0 %v439
    %3511 = vmatpush1.msra.mxu0 %v438
    %3512 = vmatprep.subr.mxu0 %v443
    %3513 = vmatpush1.msra.mxu0 %v442
    %3514 = vmatprep.subr.mxu0 %v447
    %3515 = vmatpush1.msra.mxu0 %v446
    %3516 = vmatprep.subr.mxu0 %v451
    %3517 = vmatpush1.msra.mxu0 %v450
    %3518 = vmatprep.subr.mxu0 %v455
    %3519 = vmatpush1.msra.mxu0 %v454
    %3520 = vmatprep.subr.mxu0 %v459
    %3521 = vmatpush1.msra.mxu0 %v458
    %3522 = vmatprep.subr.mxu0 %v463
    %3523 = vmatpush1.msra.mxu0 %v462
    %3524 = vmatprep.subr.mxu0 %v467
    %3525 = vmatpush1.msra.mxu0 %v466
    %3526 = vmatprep.subr.mxu0 %v471
    %3527 = vmatpush1.msra.mxu0 %v470
    %3528 = vmatprep.subr.mxu0 %v475
    %3529 = vmatpush1.msra.mxu0 %v474
    %3530 = vmatprep.subr.mxu0 %v479
    %3531 = vmatpush1.msra.mxu0 %v478
    %3532 = vmatprep.subr.mxu0 %v483
    %3533 = vmatpush1.msra.mxu0 %v482
    %3534 = vmatprep.subr.mxu0 0.0
    %3535 = vmatpush1.msra.mxu0 0.0
    %3536 = vmatprep.subr.mxu0 0.0
    %3537 = vmatpush1.msra.mxu0 0.0
    %3538 = vmatprep.subr.mxu0 0.0
    %3539 = vmatpush1.msra.mxu0 0.0
    %3540 = vmatprep.subr.mxu0 0.0
    %3541 = vmatpush1.msra.mxu0 0.0
    %3542 = vmatprep.subr.mxu0 0.0
    %3543 = vmatpush1.msra.mxu0 0.0
    %3544 = vmatprep.subr.mxu0 0.0
    %3545 = vmatpush1.msra.mxu0 0.0
    %3546 = vmatprep.subr.mxu0 0.0
    %3547 = vmatpush1.msra.mxu0 0.0
    %3548 = vmatprep.subr.mxu0 0.0
    %3549 = vmatpush1.msra.mxu0 0.0
    %3550 = vmatprep.subr.mxu0 0.0
    %3551 = vmatpush1.msra.mxu0 0.0
    %3552 = vmatprep.subr.mxu0 0.0
    %3553 = vmatpush1.msra.mxu0 0.0
    %3554 = vmatprep.subr.mxu0 0.0
    %3555 = vmatpush1.msra.mxu0 0.0
    %3556 = vmatprep.subr.mxu0 0.0
    %3557 = vmatpush1.msra.mxu0 0.0
    %3558 = vmatprep.subr.mxu0 0.0
    %3559 = vmatpush1.msra.mxu0 0.0
    %3560 = vmatprep.subr.mxu0 0.0
    %3561 = vmatpush1.msra.mxu0 0.0
    %3562 = vmatprep.subr.mxu0 0.0
    %3563 = vmatpush1.msra.mxu0 0.0
    %3564 = vmatprep.subr.mxu0 0.0
    %3565 = vmatpush1.msra.mxu0 0.0
    %3566 = vmatprep.mubr.f32.mxu0 0.0
    %3567 = vmatmul.mubr.f32.gmra.mrb[0].mxu0 %v3188
    %v3568 = vpop.f32.mrb[0].mxu0
    %v3569 = vadd.f32 0.0, %v3568
    %v3570 = vpop.f32.mrb[0].mxu0
    %v3571 = vadd.f32 0.0, %v3570
    %3572 = vdwg.mxu0
    %3573 = vmatprep.subr.mxu0 %v425
    %3574 = vmatpush1.msra.mxu0 %v424
    %3575 = vmatprep.subr.mxu0 %v429
    %3576 = vmatpush1.msra.mxu0 %v428
    %3577 = vmatprep.subr.mxu0 %v433
    %3578 = vmatpush1.msra.mxu0 %v432
    %3579 = vmatprep.subr.mxu0 %v437
    %3580 = vmatpush1.msra.mxu0 %v436
    %3581 = vmatprep.subr.mxu0 %v441
    %3582 = vmatpush1.msra.mxu0 %v440
    %3583 = vmatprep.subr.mxu0 %v445
    %3584 = vmatpush1.msra.mxu0 %v444
    %3585 = vmatprep.subr.mxu0 %v449
    %3586 = vmatpush1.msra.mxu0 %v448
    %3587 = vmatprep.subr.mxu0 %v453
    %3588 = vmatpush1.msra.mxu0 %v452
    %3589 = vmatprep.subr.mxu0 %v457
    %3590 = vmatpush1.msra.mxu0 %v456
    %3591 = vmatprep.subr.mxu0 %v461
    %3592 = vmatpush1.msra.mxu0 %v460
    %3593 = vmatprep.subr.mxu0 %v465
    %3594 = vmatpush1.msra.mxu0 %v464
    %3595 = vmatprep.subr.mxu0 %v469
    %3596 = vmatpush1.msra.mxu0 %v468
    %3597 = vmatprep.subr.mxu0 %v473
    %3598 = vmatpush1.msra.mxu0 %v472
    %3599 = vmatprep.subr.mxu0 %v477
    %3600 = vmatpush1.msra.mxu0 %v476
    %3601 = vmatprep.subr.mxu0 %v481
    %3602 = vmatpush1.msra.mxu0 %v480
    %3603 = vmatprep.subr.mxu0 %v485
    %3604 = vmatpush1.msra.mxu0 %v484
    %3605 = vmatprep.subr.mxu0 0.0
    %3606 = vmatpush1.msra.mxu0 0.0
    %3607 = vmatprep.subr.mxu0 0.0
    %3608 = vmatpush1.msra.mxu0 0.0
    %3609 = vmatprep.subr.mxu0 0.0
    %3610 = vmatpush1.msra.mxu0 0.0
    %3611 = vmatprep.subr.mxu0 0.0
    %3612 = vmatpush1.msra.mxu0 0.0
    %3613 = vmatprep.subr.mxu0 0.0
    %3614 = vmatpush1.msra.mxu0 0.0
    %3615 = vmatprep.subr.mxu0 0.0
    %3616 = vmatpush1.msra.mxu0 0.0
    %3617 = vmatprep.subr.mxu0 0.0
    %3618 = vmatpush1.msra.mxu0 0.0
    %3619 = vmatprep.subr.mxu0 0.0
    %3620 = vmatpush1.msra.mxu0 0.0
    %3621 = vmatprep.subr.mxu0 0.0
    %3622 = vmatpush1.msra.mxu0 0.0
    %3623 = vmatprep.subr.mxu0 0.0
    %3624 = vmatpush1.msra.mxu0 0.0
    %3625 = vmatprep.subr.mxu0 0.0
    %3626 = vmatpush1.msra.mxu0 0.0
    %3627 = vmatprep.subr.mxu0 0.0
    %3628 = vmatpush1.msra.mxu0 0.0
    %3629 = vmatprep.subr.mxu0 0.0
    %3630 = vmatpush1.msra.mxu0 0.0
    %3631 = vmatprep.subr.mxu0 0.0
    %3632 = vmatpush1.msra.mxu0 0.0
    %3633 = vmatprep.subr.mxu0 0.0
    %3634 = vmatpush1.msra.mxu0 0.0
    %3635 = vmatprep.subr.mxu0 0.0
    %3636 = vmatpush1.msra.mxu0 0.0
    %3637 = vmatprep.mubr.f32.mxu0 0.0
    %3638 = vmatmul.mubr.f32.gmra.mrb[0].mxu0 %v3188
    %v3639 = vpop.f32.mrb[0].mxu0
    %v3640 = vadd.f32 0.0, %v3639
    %v3641 = vpop.f32.mrb[0].mxu0
    %v3642 = vadd.f32 0.0, %v3641
    %3643 = vdwg.mxu0
    %v3644 = vadd.f32 %v3498, %v3569
    %v3645 = vadd.f32 %v3499, %v3571
    %v3646 = vadd.f32 %v3500, %v3640
    %v3647 = vadd.f32 %v3501, %v3642
    %v3648 = vmul.f32 %v3644, 0.5
    %v3649 = vtanh.pop %v3648
    %v3650 = vmul.f32 %v3649, 0.5
    %v3651 = vadd.f32 %v3650, 0.5
    %v3652 = vmul.f32 %v3645, 0.5
    %v3653 = vtanh.pop %v3652
    %v3654 = vmul.f32 %v3653, 0.5
    %v3655 = vadd.f32 %v3654, 0.5
    %v3656 = vtanh.pop %v3646
    %v3657 = vmul.f32 %v3647, 0.5
    %v3658 = vtanh.pop %v3657
    %v3659 = vmul.f32 %v3658, 0.5
    %v3660 = vadd.f32 %v3659, 0.5
    %v3661 = vmul.f32 %v3655, %v3186
    %v3662 = vmul.f32 %v3651, %v3656
    %v3663 = vadd.f32 %v3661, %v3662
    %v3664 = vtanh.pop %v3663
    %v3665 = vmul.f32 %v3660, %v3664
    %v3666 = vmax.f32 %v3665, 0.0
    %3667 = vmatprep.subr.mxu0 %v551
    %3668 = vmatpush1.msra.mxu0 %v550
    %3669 = vmatprep.subr.mxu0 %v555
    %3670 = vmatpush1.msra.mxu0 %v554
    %3671 = vmatprep.subr.mxu0 %v559
    %3672 = vmatpush1.msra.mxu0 %v558
    %3673 = vmatprep.subr.mxu0 %v563
    %3674 = vmatpush1.msra.mxu0 %v562
    %3675 = vmatprep.subr.mxu0 %v567
    %3676 = vmatpush1.msra.mxu0 %v566
    %3677 = vmatprep.subr.mxu0 %v571
    %3678 = vmatpush1.msra.mxu0 %v570
    %3679 = vmatprep.subr.mxu0 %v575
    %3680 = vmatpush1.msra.mxu0 %v574
    %3681 = vmatprep.subr.mxu0 %v579
    %3682 = vmatpush1.msra.mxu0 %v578
    %3683 = vmatprep.subr.mxu0 %v583
    %3684 = vmatpush1.msra.mxu0 %v582
    %3685 = vmatprep.subr.mxu0 %v587
    %3686 = vmatpush1.msra.mxu0 %v586
    %3687 = vmatprep.subr.mxu0 %v591
    %3688 = vmatpush1.msra.mxu0 %v590
    %3689 = vmatprep.subr.mxu0 %v595
    %3690 = vmatpush1.msra.mxu0 %v594
    %3691 = vmatprep.subr.mxu0 %v599
    %3692 = vmatpush1.msra.mxu0 %v598
    %3693 = vmatprep.subr.mxu0 %v603
    %3694 = vmatpush1.msra.mxu0 %v602
    %3695 = vmatprep.subr.mxu0 %v607
    %3696 = vmatpush1.msra.mxu0 %v606
    %3697 = vmatprep.subr.mxu0 %v611
    %3698 = vmatpush1.msra.mxu0 %v610
    %3699 = vmatprep.subr.mxu0 0.0
    %3700 = vmatpush1.msra.mxu0 0.0
    %3701 = vmatprep.subr.mxu0 0.0
    %3702 = vmatpush1.msra.mxu0 0.0
    %3703 = vmatprep.subr.mxu0 0.0
    %3704 = vmatpush1.msra.mxu0 0.0
    %3705 = vmatprep.subr.mxu0 0.0
    %3706 = vmatpush1.msra.mxu0 0.0
    %3707 = vmatprep.subr.mxu0 0.0
    %3708 = vmatpush1.msra.mxu0 0.0
    %3709 = vmatprep.subr.mxu0 0.0
    %3710 = vmatpush1.msra.mxu0 0.0
    %3711 = vmatprep.subr.mxu0 0.0
    %3712 = vmatpush1.msra.mxu0 0.0
    %3713 = vmatprep.subr.mxu0 0.0
    %3714 = vmatpush1.msra.mxu0 0.0
    %3715 = vmatprep.subr.mxu0 0.0
    %3716 = vmatpush1.msra.mxu0 0.0
    %3717 = vmatprep.subr.mxu0 0.0
    %3718 = vmatpush1.msra.mxu0 0.0
    %3719 = vmatprep.subr.mxu0 0.0
    %3720 = vmatpush1.msra.mxu0 0.0
    %3721 = vmatprep.subr.mxu0 0.0
    %3722 = vmatpush1.msra.mxu0 0.0
    %3723 = vmatprep.subr.mxu0 0.0
    %3724 = vmatpush1.msra.mxu0 0.0
    %3725 = vmatprep.subr.mxu0 0.0
    %3726 = vmatpush1.msra.mxu0 0.0
    %3727 = vmatprep.subr.mxu0 0.0
    %3728 = vmatpush1.msra.mxu0 0.0
    %3729 = vmatprep.subr.mxu0 0.0
    %3730 = vmatpush1.msra.mxu0 0.0
    %3731 = vmatprep.mubr.f32.mxu0 0.0
    %3732 = vmatmul.mubr.f32.gmra.mrb[0].mxu0 %v3495
    %v3733 = vpop.f32.mrb[0].mxu0
    %v3734 = vadd.f32 0.0, %v3733
    %v3735 = vpop.f32.mrb[0].mxu0
    %v3736 = vadd.f32 0.0, %v3735
    %3737 = vdwg.mxu0
    %3738 = vmatprep.subr.mxu0 %v553
    %3739 = vmatpush1.msra.mxu0 %v552
    %3740 = vmatprep.subr.mxu0 %v557
    %3741 = vmatpush1.msra.mxu0 %v556
    %3742 = vmatprep.subr.mxu0 %v561
    %3743 = vmatpush1.msra.mxu0 %v560
    %3744 = vmatprep.subr.mxu0 %v565
    %3745 = vmatpush1.msra.mxu0 %v564
    %3746 = vmatprep.subr.mxu0 %v569
    %3747 = vmatpush1.msra.mxu0 %v568
    %3748 = vmatprep.subr.mxu0 %v573
    %3749 = vmatpush1.msra.mxu0 %v572
    %3750 = vmatprep.subr.mxu0 %v577
    %3751 = vmatpush1.msra.mxu0 %v576
    %3752 = vmatprep.subr.mxu0 %v581
    %3753 = vmatpush1.msra.mxu0 %v580
    %3754 = vmatprep.subr.mxu0 %v585
    %3755 = vmatpush1.msra.mxu0 %v584
    %3756 = vmatprep.subr.mxu0 %v589
    %3757 = vmatpush1.msra.mxu0 %v588
    %3758 = vmatprep.subr.mxu0 %v593
    %3759 = vmatpush1.msra.mxu0 %v592
    %3760 = vmatprep.subr.mxu0 %v597
    %3761 = vmatpush1.msra.mxu0 %v596
    %3762 = vmatprep.subr.mxu0 %v601
    %3763 = vmatpush1.msra.mxu0 %v600
    %3764 = vmatprep.subr.mxu0 %v605
    %3765 = vmatpush1.msra.mxu0 %v604
    %3766 = vmatprep.subr.mxu0 %v609
    %3767 = vmatpush1.msra.mxu0 %v608
    %3768 = vmatprep.subr.mxu0 %v613
    %3769 = vmatpush1.msra.mxu0 %v612
    %3770 = vmatprep.subr.mxu0 0.0
    %3771 = vmatpush1.msra.mxu0 0.0
    %3772 = vmatprep.subr.mxu0 0.0
    %3773 = vmatpush1.msra.mxu0 0.0
    %3774 = vmatprep.subr.mxu0 0.0
    %3775 = vmatpush1.msra.mxu0 0.0
    %3776 = vmatprep.subr.mxu0 0.0
    %3777 = vmatpush1.msra.mxu0 0.0
    %3778 = vmatprep.subr.mxu0 0.0
    %3779 = vmatpush1.msra.mxu0 0.0
    %3780 = vmatprep.subr.mxu0 0.0
    %3781 = vmatpush1.msra.mxu0 0.0
    %3782 = vmatprep.subr.mxu0 0.0
    %3783 = vmatpush1.msra.mxu0 0.0
    %3784 = vmatprep.subr.mxu0 0.0
    %3785 = vmatpush1.msra.mxu0 0.0
    %3786 = vmatprep.subr.mxu0 0.0
    %3787 = vmatpush1.msra.mxu0 0.0
    %3788 = vmatprep.subr.mxu0 0.0
    %3789 = vmatpush1.msra.mxu0 0.0
    %3790 = vmatprep.subr.mxu0 0.0
    %3791 = vmatpush1.msra.mxu0 0.0
    %3792 = vmatprep.subr.mxu0 0.0
    %3793 = vmatpush1.msra.mxu0 0.0
    %3794 = vmatprep.subr.mxu0 0.0
    %3795 = vmatpush1.msra.mxu0 0.0
    %3796 = vmatprep.subr.mxu0 0.0
    %3797 = vmatpush1.msra.mxu0 0.0
    %3798 = vmatprep.subr.mxu0 0.0
    %3799 = vmatpush1.msra.mxu0 0.0
    %3800 = vmatprep.subr.mxu0 0.0
    %3801 = vmatpush1.msra.mxu0 0.0
    %3802 = vmatprep.mubr.f32.mxu0 0.0
    %3803 = vmatmul.mubr.f32.gmra.mrb[0].mxu0 %v3495
    %v3804 = vpop.f32.mrb[0].mxu0
    %v3805 = vadd.f32 0.0, %v3804
    %v3806 = vpop.f32.mrb[0].mxu0
    %v3807 = vadd.f32 0.0, %v3806
    %3808 = vdwg.mxu0
    %3809 = vmatprep.subr.mxu0 %v487
    %3810 = vmatpush1.msra.mxu0 %v486
    %3811 = vmatprep.subr.mxu0 %v491
    %3812 = vmatpush1.msra.mxu0 %v490
    %3813 = vmatprep.subr.mxu0 %v495
    %3814 = vmatpush1.msra.mxu0 %v494
    %3815 = vmatprep.subr.mxu0 %v499
    %3816 = vmatpush1.msra.mxu0 %v498
    %3817 = vmatprep.subr.mxu0 %v503
    %3818 = vmatpush1.msra.mxu0 %v502
    %3819 = vmatprep.subr.mxu0 %v507
    %3820 = vmatpush1.msra.mxu0 %v506
    %3821 = vmatprep.subr.mxu0 %v511
    %3822 = vmatpush1.msra.mxu0 %v510
    %3823 = vmatprep.subr.mxu0 %v515
    %3824 = vmatpush1.msra.mxu0 %v514
    %3825 = vmatprep.subr.mxu0 %v519
    %3826 = vmatpush1.msra.mxu0 %v518
    %3827 = vmatprep.subr.mxu0 %v523
    %3828 = vmatpush1.msra.mxu0 %v522
    %3829 = vmatprep.subr.mxu0 %v527
    %3830 = vmatpush1.msra.mxu0 %v526
    %3831 = vmatprep.subr.mxu0 %v531
    %3832 = vmatpush1.msra.mxu0 %v530
    %3833 = vmatprep.subr.mxu0 %v535
    %3834 = vmatpush1.msra.mxu0 %v534
    %3835 = vmatprep.subr.mxu0 %v539
    %3836 = vmatpush1.msra.mxu0 %v538
    %3837 = vmatprep.subr.mxu0 %v543
    %3838 = vmatpush1.msra.mxu0 %v542
    %3839 = vmatprep.subr.mxu0 %v547
    %3840 = vmatpush1.msra.mxu0 %v546
    %3841 = vmatprep.subr.mxu0 0.0
    %3842 = vmatpush1.msra.mxu0 0.0
    %3843 = vmatprep.subr.mxu0 0.0
    %3844 = vmatpush1.msra.mxu0 0.0
    %3845 = vmatprep.subr.mxu0 0.0
    %3846 = vmatpush1.msra.mxu0 0.0
    %3847 = vmatprep.subr.mxu0 0.0
    %3848 = vmatpush1.msra.mxu0 0.0
    %3849 = vmatprep.subr.mxu0 0.0
    %3850 = vmatpush1.msra.mxu0 0.0
    %3851 = vmatprep.subr.mxu0 0.0
    %3852 = vmatpush1.msra.mxu0 0.0
    %3853 = vmatprep.subr.mxu0 0.0
    %3854 = vmatpush1.msra.mxu0 0.0
    %3855 = vmatprep.subr.mxu0 0.0
    %3856 = vmatpush1.msra.mxu0 0.0
    %3857 = vmatprep.subr.mxu0 0.0
    %3858 = vmatpush1.msra.mxu0 0.0
    %3859 = vmatprep.subr.mxu0 0.0
    %3860 = vmatpush1.msra.mxu0 0.0
    %3861 = vmatprep.subr.mxu0 0.0
    %3862 = vmatpush1.msra.mxu0 0.0
    %3863 = vmatprep.subr.mxu0 0.0
    %3864 = vmatpush1.msra.mxu0 0.0
    %3865 = vmatprep.subr.mxu0 0.0
    %3866 = vmatpush1.msra.mxu0 0.0
    %3867 = vmatprep.subr.mxu0 0.0
    %3868 = vmatpush1.msra.mxu0 0.0
    %3869 = vmatprep.subr.mxu0 0.0
    %3870 = vmatpush1.msra.mxu0 0.0
    %3871 = vmatprep.subr.mxu0 0.0
    %3872 = vmatpush1.msra.mxu0 0.0
    %3873 = vmatprep.mubr.f32.mxu0 0.0
    %3874 = vmatmul.mubr.f32.gmra.mrb[0].mxu0 %v3666
    %v3875 = vpop.f32.mrb[0].mxu0
    %v3876 = vadd.f32 %v3734, %v3875
    %v3877 = vpop.f32.mrb[0].mxu0
    %v3878 = vadd.f32 %v3736, %v3877
    %3879 = vdwg.mxu0
    %3880 = vmatprep.subr.mxu0 %v489
    %3881 = vmatpush1.msra.mxu0 %v488
    %3882 = vmatprep.subr.mxu0 %v493
    %3883 = vmatpush1.msra.mxu0 %v492
    %3884 = vmatprep.subr.mxu0 %v497
    %3885 = vmatpush1.msra.mxu0 %v496
    %3886 = vmatprep.subr.mxu0 %v501
    %3887 = vmatpush1.msra.mxu0 %v500
    %3888 = vmatprep.subr.mxu0 %v505
    %3889 = vmatpush1.msra.mxu0 %v504
    %3890 = vmatprep.subr.mxu0 %v509
    %3891 = vmatpush1.msra.mxu0 %v508
    %3892 = vmatprep.subr.mxu0 %v513
    %3893 = vmatpush1.msra.mxu0 %v512
    %3894 = vmatprep.subr.mxu0 %v517
    %3895 = vmatpush1.msra.mxu0 %v516
    %3896 = vmatprep.subr.mxu0 %v521
    %3897 = vmatpush1.msra.mxu0 %v520
    %3898 = vmatprep.subr.mxu0 %v525
    %3899 = vmatpush1.msra.mxu0 %v524
    %3900 = vmatprep.subr.mxu0 %v529
    %3901 = vmatpush1.msra.mxu0 %v528
    %3902 = vmatprep.subr.mxu0 %v533
    %3903 = vmatpush1.msra.mxu0 %v532
    %3904 = vmatprep.subr.mxu0 %v537
    %3905 = vmatpush1.msra.mxu0 %v536
    %3906 = vmatprep.subr.mxu0 %v541
    %3907 = vmatpush1.msra.mxu0 %v540
    %3908 = vmatprep.subr.mxu0 %v545
    %3909 = vmatpush1.msra.mxu0 %v544
    %3910 = vmatprep.subr.mxu0 %v549
    %3911 = vmatpush1.msra.mxu0 %v548
    %3912 = vmatprep.subr.mxu0 0.0
    %3913 = vmatpush1.msra.mxu0 0.0
    %3914 = vmatprep.subr.mxu0 0.0
    %3915 = vmatpush1.msra.mxu0 0.0
    %3916 = vmatprep.subr.mxu0 0.0
    %3917 = vmatpush1.msra.mxu0 0.0
    %3918 = vmatprep.subr.mxu0 0.0
    %3919 = vmatpush1.msra.mxu0 0.0
    %3920 = vmatprep.subr.mxu0 0.0
    %3921 = vmatpush1.msra.mxu0 0.0
    %3922 = vmatprep.subr.mxu0 0.0
    %3923 = vmatpush1.msra.mxu0 0.0
    %3924 = vmatprep.subr.mxu0 0.0
    %3925 = vmatpush1.msra.mxu0 0.0
    %3926 = vmatprep.subr.mxu0 0.0
    %3927 = vmatpush1.msra.mxu0 0.0
    %3928 = vmatprep.subr.mxu0 0.0
    %3929 = vmatpush1.msra.mxu0 0.0
    %3930 = vmatprep.subr.mxu0 0.0
    %3931 = vmatpush1.msra.mxu0 0.0
    %3932 = vmatprep.subr.mxu0 0.0
    %3933 = vmatpush1.msra.mxu0 0.0
    %3934 = vmatprep.subr.mxu0 0.0
    %3935 = vmatpush1.msra.mxu0 0.0
    %3936 = vmatprep.subr.mxu0 0.0
    %3937 = vmatpush1.msra.mxu0 0.0
    %3938 = vmatprep.subr.mxu0 0.0
    %3939 = vmatpush1.msra.mxu0 0.0
    %3940 = vmatprep.subr.mxu0 0.0
    %3941 = vmatpush1.msra.mxu0 0.0
    %3942 = vmatprep.subr.mxu0 0.0
    %3943 = vmatpush1.msra.mxu0 0.0
    %3944 = vmatprep.mubr.f32.mxu0 0.0
    %3945 = vmatmul.mubr.f32.gmra.mrb[0].mxu0 %v3666
    %v3946 = vpop.f32.mrb[0].mxu0
    %v3947 = vadd.f32 %v3805, %v3946
    %v3948 = vpop.f32.mrb[0].mxu0
    %v3949 = vadd.f32 %v3807, %v3948
    %3950 = vdwg.mxu0
    %v3951 = vadd.f32 %v3876, %v619
    %v3952 = vadd.f32 %v3878, %v623
    %v3953 = vadd.f32 %v3947, %v627
    %v3954 = vadd.f32 %v3949, %v631
    %v3955 = vmul.f32 %v3951, 0.5
    %v3956 = vtanh.pop %v3955
    %v3957 = vmul.f32 %v3956, 0.5
    %v3958 = vadd.f32 %v3957, 0.5
    %v3959 = vmul.f32 %v3952, 0.5
    %v3960 = vtanh.pop %v3959
    %v3961 = vmul.f32 %v3960, 0.5
    %v3962 = vadd.f32 %v3961, 0.5
    %v3963 = vtanh.pop %v3953
    %v3964 = vmul.f32 %v3954, 0.5
    %v3965 = vtanh.pop %v3964
    %v3966 = vmul.f32 %v3965, 0.5
    %v3967 = vadd.f32 %v3966, 0.5
    %v3968 = vmul.f32 %v3962, %v3493
    %v3969 = vmul.f32 %v3958, %v3963
    %v3970 = vadd.f32 %v3968, %v3969
    %v3971 = vtanh.pop %v3970
    %v3972 = vmul.f32 %v3967, %v3971
    %v3973 = vmax.f32 %v3972, 0.0
    %3974 = vst [vmem:[#allocation3 + $0x30] sm:$0xff] %v3973
    %v3975 = vld [vmem:[#allocation2 + $0xe0] sm:$0xff]
    %v3976 = vld [vmem:[#allocation2 + $0xe8] sm:$0xff]
    %v3977 = vld [vmem:[#allocation2 + $0xf0] sm:$0xff]
    %v3978 = vld [vmem:[#allocation2 + $0xf8] sm:$0xff]
    %3979 = vmatprep.subr.mxu0 %v423
    %3980 = vmatpush1.msra.mxu0 %v422
    %3981 = vmatprep.subr.mxu0 %v427
    %3982 = vmatpush1.msra.mxu0 %v426
    %3983 = vmatprep.subr.mxu0 %v431
    %3984 = vmatpush1.msra.mxu0 %v430
    %3985 = vmatprep.subr.mxu0 %v435
    %3986 = vmatpush1.msra.mxu0 %v434
    %3987 = vmatprep.subr.mxu0 %v439
    %3988 = vmatpush1.msra.mxu0 %v438
    %3989 = vmatprep.subr.mxu0 %v443
    %3990 = vmatpush1.msra.mxu0 %v442
    %3991 = vmatprep.subr.mxu0 %v447
    %3992 = vmatpush1.msra.mxu0 %v446
    %3993 = vmatprep.subr.mxu0 %v451
    %3994 = vmatpush1.msra.mxu0 %v450
    %3995 = vmatprep.subr.mxu0 %v455
    %3996 = vmatpush1.msra.mxu0 %v454
    %3997 = vmatprep.subr.mxu0 %v459
    %3998 = vmatpush1.msra.mxu0 %v458
    %3999 = vmatprep.subr.mxu0 %v463
    %4000 = vmatpush1.msra.mxu0 %v462
    %4001 = vmatprep.subr.mxu0 %v467
    %4002 = vmatpush1.msra.mxu0 %v466
    %4003 = vmatprep.subr.mxu0 %v471
    %4004 = vmatpush1.msra.mxu0 %v470
    %4005 = vmatprep.subr.mxu0 %v475
    %4006 = vmatpush1.msra.mxu0 %v474
    %4007 = vmatprep.subr.mxu0 %v479
    %4008 = vmatpush1.msra.mxu0 %v478
    %4009 = vmatprep.subr.mxu0 %v483
    %4010 = vmatpush1.msra.mxu0 %v482
    %4011 = vmatprep.subr.mxu0 0.0
    %4012 = vmatpush1.msra.mxu0 0.0
    %4013 = vmatprep.subr.mxu0 0.0
    %4014 = vmatpush1.msra.mxu0 0.0
    %4015 = vmatprep.subr.mxu0 0.0
    %4016 = vmatpush1.msra.mxu0 0.0
    %4017 = vmatprep.subr.mxu0 0.0
    %4018 = vmatpush1.msra.mxu0 0.0
    %4019 = vmatprep.subr.mxu0 0.0
    %4020 = vmatpush1.msra.mxu0 0.0
    %4021 = vmatprep.subr.mxu0 0.0
    %4022 = vmatpush1.msra.mxu0 0.0
    %4023 = vmatprep.subr.mxu0 0.0
    %4024 = vmatpush1.msra.mxu0 0.0
    %4025 = vmatprep.subr.mxu0 0.0
    %4026 = vmatpush1.msra.mxu0 0.0
    %4027 = vmatprep.subr.mxu0 0.0
    %4028 = vmatpush1.msra.mxu0 0.0
    %4029 = vmatprep.subr.mxu0 0.0
    %4030 = vmatpush1.msra.mxu0 0.0
    %4031 = vmatprep.subr.mxu0 0.0
    %4032 = vmatpush1.msra.mxu0 0.0
    %4033 = vmatprep.subr.mxu0 0.0
    %4034 = vmatpush1.msra.mxu0 0.0
    %4035 = vmatprep.subr.mxu0 0.0
    %4036 = vmatpush1.msra.mxu0 0.0
    %4037 = vmatprep.subr.mxu0 0.0
    %4038 = vmatpush1.msra.mxu0 0.0
    %4039 = vmatprep.subr.mxu0 0.0
    %4040 = vmatpush1.msra.mxu0 0.0
    %4041 = vmatprep.subr.mxu0 0.0
    %4042 = vmatpush1.msra.mxu0 0.0
    %4043 = vmatprep.mubr.f32.mxu0 0.0
    %4044 = vmatmul.mubr.f32.gmra.mrb[0].mxu0 %v3665
    %v4045 = vpop.f32.mrb[0].mxu0
    %v4046 = vadd.f32 0.0, %v4045
    %v4047 = vpop.f32.mrb[0].mxu0
    %v4048 = vadd.f32 0.0, %v4047
    %4049 = vdwg.mxu0
    %4050 = vmatprep.subr.mxu0 %v425
    %4051 = vmatpush1.msra.mxu0 %v424
    %4052 = vmatprep.subr.mxu0 %v429
    %4053 = vmatpush1.msra.mxu0 %v428
    %4054 = vmatprep.subr.mxu0 %v433
    %4055 = vmatpush1.msra.mxu0 %v432
    %4056 = vmatprep.subr.mxu0 %v437
    %4057 = vmatpush1.msra.mxu0 %v436
    %4058 = vmatprep.subr.mxu0 %v441
    %4059 = vmatpush1.msra.mxu0 %v440
    %4060 = vmatprep.subr.mxu0 %v445
    %4061 = vmatpush1.msra.mxu0 %v444
    %4062 = vmatprep.subr.mxu0 %v449
    %4063 = vmatpush1.msra.mxu0 %v448
    %4064 = vmatprep.subr.mxu0 %v453
    %4065 = vmatpush1.msra.mxu0 %v452
    %4066 = vmatprep.subr.mxu0 %v457
    %4067 = vmatpush1.msra.mxu0 %v456
    %4068 = vmatprep.subr.mxu0 %v461
    %4069 = vmatpush1.msra.mxu0 %v460
    %4070 = vmatprep.subr.mxu0 %v465
    %4071 = vmatpush1.msra.mxu0 %v464
    %4072 = vmatprep.subr.mxu0 %v469
    %4073 = vmatpush1.msra.mxu0 %v468
    %4074 = vmatprep.subr.mxu0 %v473
    %4075 = vmatpush1.msra.mxu0 %v472
    %4076 = vmatprep.subr.mxu0 %v477
    %4077 = vmatpush1.msra.mxu0 %v476
    %4078 = vmatprep.subr.mxu0 %v481
    %4079 = vmatpush1.msra.mxu0 %v480
    %4080 = vmatprep.subr.mxu0 %v485
    %4081 = vmatpush1.msra.mxu0 %v484
    %4082 = vmatprep.subr.mxu0 0.0
    %4083 = vmatpush1.msra.mxu0 0.0
    %4084 = vmatprep.subr.mxu0 0.0
    %4085 = vmatpush1.msra.mxu0 0.0
    %4086 = vmatprep.subr.mxu0 0.0
    %4087 = vmatpush1.msra.mxu0 0.0
    %4088 = vmatprep.subr.mxu0 0.0
    %4089 = vmatpush1.msra.mxu0 0.0
    %4090 = vmatprep.subr.mxu0 0.0
    %4091 = vmatpush1.msra.mxu0 0.0
    %4092 = vmatprep.subr.mxu0 0.0
    %4093 = vmatpush1.msra.mxu0 0.0
    %4094 = vmatprep.subr.mxu0 0.0
    %4095 = vmatpush1.msra.mxu0 0.0
    %4096 = vmatprep.subr.mxu0 0.0
    %4097 = vmatpush1.msra.mxu0 0.0
    %4098 = vmatprep.subr.mxu0 0.0
    %4099 = vmatpush1.msra.mxu0 0.0
    %4100 = vmatprep.subr.mxu0 0.0
    %4101 = vmatpush1.msra.mxu0 0.0
    %4102 = vmatprep.subr.mxu0 0.0
    %4103 = vmatpush1.msra.mxu0 0.0
    %4104 = vmatprep.subr.mxu0 0.0
    %4105 = vmatpush1.msra.mxu0 0.0
    %4106 = vmatprep.subr.mxu0 0.0
    %4107 = vmatpush1.msra.mxu0 0.0
    %4108 = vmatprep.subr.mxu0 0.0
    %4109 = vmatpush1.msra.mxu0 0.0
    %4110 = vmatprep.subr.mxu0 0.0
    %4111 = vmatpush1.msra.mxu0 0.0
    %4112 = vmatprep.subr.mxu0 0.0
    %4113 = vmatpush1.msra.mxu0 0.0
    %4114 = vmatprep.mubr.f32.mxu0 0.0
    %4115 = vmatmul.mubr.f32.gmra.mrb[0].mxu0 %v3665
    %v4116 = vpop.f32.mrb[0].mxu0
    %v4117 = vadd.f32 0.0, %v4116
    %v4118 = vpop.f32.mrb[0].mxu0
    %v4119 = vadd.f32 0.0, %v4118
    %4120 = vdwg.mxu0
    %v4121 = vadd.f32 %v3975, %v4046
    %v4122 = vadd.f32 %v3976, %v4048
    %v4123 = vadd.f32 %v3977, %v4117
    %v4124 = vadd.f32 %v3978, %v4119
    %v4125 = vmul.f32 %v4121, 0.5
    %v4126 = vtanh.pop %v4125
    %v4127 = vmul.f32 %v4126, 0.5
    %v4128 = vadd.f32 %v4127, 0.5
    %v4129 = vmul.f32 %v4122, 0.5
    %v4130 = vtanh.pop %v4129
    %v4131 = vmul.f32 %v4130, 0.5
    %v4132 = vadd.f32 %v4131, 0.5
    %v4133 = vtanh.pop %v4123
    %v4134 = vmul.f32 %v4124, 0.5
    %v4135 = vtanh.pop %v4134
    %v4136 = vmul.f32 %v4135, 0.5
    %v4137 = vadd.f32 %v4136, 0.5
    %v4138 = vmul.f32 %v4132, %v3663
    %v4139 = vmul.f32 %v4128, %v4133
    %v4140 = vadd.f32 %v4138, %v4139
    %v4141 = vtanh.pop %v4140
    %v4142 = vmul.f32 %v4137, %v4141
    %v4143 = vmax.f32 %v4142, 0.0
    %4144 = vmatprep.subr.mxu0 %v551
    %4145 = vmatpush1.msra.mxu0 %v550
    %4146 = vmatprep.subr.mxu0 %v555
    %4147 = vmatpush1.msra.mxu0 %v554
    %4148 = vmatprep.subr.mxu0 %v559
    %4149 = vmatpush1.msra.mxu0 %v558
    %4150 = vmatprep.subr.mxu0 %v563
    %4151 = vmatpush1.msra.mxu0 %v562
    %4152 = vmatprep.subr.mxu0 %v567
    %4153 = vmatpush1.msra.mxu0 %v566
    %4154 = vmatprep.subr.mxu0 %v571
    %4155 = vmatpush1.msra.mxu0 %v570
    %4156 = vmatprep.subr.mxu0 %v575
    %4157 = vmatpush1.msra.mxu0 %v574
    %4158 = vmatprep.subr.mxu0 %v579
    %4159 = vmatpush1.msra.mxu0 %v578
    %4160 = vmatprep.subr.mxu0 %v583
    %4161 = vmatpush1.msra.mxu0 %v582
    %4162 = vmatprep.subr.mxu0 %v587
    %4163 = vmatpush1.msra.mxu0 %v586
    %4164 = vmatprep.subr.mxu0 %v591
    %4165 = vmatpush1.msra.mxu0 %v590
    %4166 = vmatprep.subr.mxu0 %v595
    %4167 = vmatpush1.msra.mxu0 %v594
    %4168 = vmatprep.subr.mxu0 %v599
    %4169 = vmatpush1.msra.mxu0 %v598
    %4170 = vmatprep.subr.mxu0 %v603
    %4171 = vmatpush1.msra.mxu0 %v602
    %4172 = vmatprep.subr.mxu0 %v607
    %4173 = vmatpush1.msra.mxu0 %v606
    %4174 = vmatprep.subr.mxu0 %v611
    %4175 = vmatpush1.msra.mxu0 %v610
    %4176 = vmatprep.subr.mxu0 0.0
    %4177 = vmatpush1.msra.mxu0 0.0
    %4178 = vmatprep.subr.mxu0 0.0
    %4179 = vmatpush1.msra.mxu0 0.0
    %4180 = vmatprep.subr.mxu0 0.0
    %4181 = vmatpush1.msra.mxu0 0.0
    %4182 = vmatprep.subr.mxu0 0.0
    %4183 = vmatpush1.msra.mxu0 0.0
    %4184 = vmatprep.subr.mxu0 0.0
    %4185 = vmatpush1.msra.mxu0 0.0
    %4186 = vmatprep.subr.mxu0 0.0
    %4187 = vmatpush1.msra.mxu0 0.0
    %4188 = vmatprep.subr.mxu0 0.0
    %4189 = vmatpush1.msra.mxu0 0.0
    %4190 = vmatprep.subr.mxu0 0.0
    %4191 = vmatpush1.msra.mxu0 0.0
    %4192 = vmatprep.subr.mxu0 0.0
    %4193 = vmatpush1.msra.mxu0 0.0
    %4194 = vmatprep.subr.mxu0 0.0
    %4195 = vmatpush1.msra.mxu0 0.0
    %4196 = vmatprep.subr.mxu0 0.0
    %4197 = vmatpush1.msra.mxu0 0.0
    %4198 = vmatprep.subr.mxu0 0.0
    %4199 = vmatpush1.msra.mxu0 0.0
    %4200 = vmatprep.subr.mxu0 0.0
    %4201 = vmatpush1.msra.mxu0 0.0
    %4202 = vmatprep.subr.mxu0 0.0
    %4203 = vmatpush1.msra.mxu0 0.0
    %4204 = vmatprep.subr.mxu0 0.0
    %4205 = vmatpush1.msra.mxu0 0.0
    %4206 = vmatprep.subr.mxu0 0.0
    %4207 = vmatpush1.msra.mxu0 0.0
    %4208 = vmatprep.mubr.f32.mxu0 0.0
    %4209 = vmatmul.mubr.f32.gmra.mrb[0].mxu0 %v3972
    %v4210 = vpop.f32.mrb[0].mxu0
    %v4211 = vadd.f32 0.0, %v4210
    %v4212 = vpop.f32.mrb[0].mxu0
    %v4213 = vadd.f32 0.0, %v4212
    %4214 = vdwg.mxu0
    %4215 = vmatprep.subr.mxu0 %v553
    %4216 = vmatpush1.msra.mxu0 %v552
    %4217 = vmatprep.subr.mxu0 %v557
    %4218 = vmatpush1.msra.mxu0 %v556
    %4219 = vmatprep.subr.mxu0 %v561
    %4220 = vmatpush1.msra.mxu0 %v560
    %4221 = vmatprep.subr.mxu0 %v565
    %4222 = vmatpush1.msra.mxu0 %v564
    %4223 = vmatprep.subr.mxu0 %v569
    %4224 = vmatpush1.msra.mxu0 %v568
    %4225 = vmatprep.subr.mxu0 %v573
    %4226 = vmatpush1.msra.mxu0 %v572
    %4227 = vmatprep.subr.mxu0 %v577
    %4228 = vmatpush1.msra.mxu0 %v576
    %4229 = vmatprep.subr.mxu0 %v581
    %4230 = vmatpush1.msra.mxu0 %v580
    %4231 = vmatprep.subr.mxu0 %v585
    %4232 = vmatpush1.msra.mxu0 %v584
    %4233 = vmatprep.subr.mxu0 %v589
    %4234 = vmatpush1.msra.mxu0 %v588
    %4235 = vmatprep.subr.mxu0 %v593
    %4236 = vmatpush1.msra.mxu0 %v592
    %4237 = vmatprep.subr.mxu0 %v597
    %4238 = vmatpush1.msra.mxu0 %v596
    %4239 = vmatprep.subr.mxu0 %v601
    %4240 = vmatpush1.msra.mxu0 %v600
    %4241 = vmatprep.subr.mxu0 %v605
    %4242 = vmatpush1.msra.mxu0 %v604
    %4243 = vmatprep.subr.mxu0 %v609
    %4244 = vmatpush1.msra.mxu0 %v608
    %4245 = vmatprep.subr.mxu0 %v613
    %4246 = vmatpush1.msra.mxu0 %v612
    %4247 = vmatprep.subr.mxu0 0.0
    %4248 = vmatpush1.msra.mxu0 0.0
    %4249 = vmatprep.subr.mxu0 0.0
    %4250 = vmatpush1.msra.mxu0 0.0
    %4251 = vmatprep.subr.mxu0 0.0
    %4252 = vmatpush1.msra.mxu0 0.0
    %4253 = vmatprep.subr.mxu0 0.0
    %4254 = vmatpush1.msra.mxu0 0.0
    %4255 = vmatprep.subr.mxu0 0.0
    %4256 = vmatpush1.msra.mxu0 0.0
    %4257 = vmatprep.subr.mxu0 0.0
    %4258 = vmatpush1.msra.mxu0 0.0
    %4259 = vmatprep.subr.mxu0 0.0
    %4260 = vmatpush1.msra.mxu0 0.0
    %4261 = vmatprep.subr.mxu0 0.0
    %4262 = vmatpush1.msra.mxu0 0.0
    %4263 = vmatprep.subr.mxu0 0.0
    %4264 = vmatpush1.msra.mxu0 0.0
    %4265 = vmatprep.subr.mxu0 0.0
    %4266 = vmatpush1.msra.mxu0 0.0
    %4267 = vmatprep.subr.mxu0 0.0
    %4268 = vmatpush1.msra.mxu0 0.0
    %4269 = vmatprep.subr.mxu0 0.0
    %4270 = vmatpush1.msra.mxu0 0.0
    %4271 = vmatprep.subr.mxu0 0.0
    %4272 = vmatpush1.msra.mxu0 0.0
    %4273 = vmatprep.subr.mxu0 0.0
    %4274 = vmatpush1.msra.mxu0 0.0
    %4275 = vmatprep.subr.mxu0 0.0
    %4276 = vmatpush1.msra.mxu0 0.0
    %4277 = vmatprep.subr.mxu0 0.0
    %4278 = vmatpush1.msra.mxu0 0.0
    %4279 = vmatprep.mubr.f32.mxu0 0.0
    %4280 = vmatmul.mubr.f32.gmra.mrb[0].mxu0 %v3972
    %v4281 = vpop.f32.mrb[0].mxu0
    %v4282 = vadd.f32 0.0, %v4281
    %v4283 = vpop.f32.mrb[0].mxu0
    %v4284 = vadd.f32 0.0, %v4283
    %4285 = vdwg.mxu0
    %4286 = vmatprep.subr.mxu0 %v487
    %4287 = vmatpush1.msra.mxu0 %v486
    %4288 = vmatprep.subr.mxu0 %v491
    %4289 = vmatpush1.msra.mxu0 %v490
    %4290 = vmatprep.subr.mxu0 %v495
    %4291 = vmatpush1.msra.mxu0 %v494
    %4292 = vmatprep.subr.mxu0 %v499
    %4293 = vmatpush1.msra.mxu0 %v498
    %4294 = vmatprep.subr.mxu0 %v503
    %4295 = vmatpush1.msra.mxu0 %v502
    %4296 = vmatprep.subr.mxu0 %v507
    %4297 = vmatpush1.msra.mxu0 %v506
    %4298 = vmatprep.subr.mxu0 %v511
    %4299 = vmatpush1.msra.mxu0 %v510
    %4300 = vmatprep.subr.mxu0 %v515
    %4301 = vmatpush1.msra.mxu0 %v514
    %4302 = vmatprep.subr.mxu0 %v519
    %4303 = vmatpush1.msra.mxu0 %v518
    %4304 = vmatprep.subr.mxu0 %v523
    %4305 = vmatpush1.msra.mxu0 %v522
    %4306 = vmatprep.subr.mxu0 %v527
    %4307 = vmatpush1.msra.mxu0 %v526
    %4308 = vmatprep.subr.mxu0 %v531
    %4309 = vmatpush1.msra.mxu0 %v530
    %4310 = vmatprep.subr.mxu0 %v535
    %4311 = vmatpush1.msra.mxu0 %v534
    %4312 = vmatprep.subr.mxu0 %v539
    %4313 = vmatpush1.msra.mxu0 %v538
    %4314 = vmatprep.subr.mxu0 %v543
    %4315 = vmatpush1.msra.mxu0 %v542
    %4316 = vmatprep.subr.mxu0 %v547
    %4317 = vmatpush1.msra.mxu0 %v546
    %4318 = vmatprep.subr.mxu0 0.0
    %4319 = vmatpush1.msra.mxu0 0.0
    %4320 = vmatprep.subr.mxu0 0.0
    %4321 = vmatpush1.msra.mxu0 0.0
    %4322 = vmatprep.subr.mxu0 0.0
    %4323 = vmatpush1.msra.mxu0 0.0
    %4324 = vmatprep.subr.mxu0 0.0
    %4325 = vmatpush1.msra.mxu0 0.0
    %4326 = vmatprep.subr.mxu0 0.0
    %4327 = vmatpush1.msra.mxu0 0.0
    %4328 = vmatprep.subr.mxu0 0.0
    %4329 = vmatpush1.msra.mxu0 0.0
    %4330 = vmatprep.subr.mxu0 0.0
    %4331 = vmatpush1.msra.mxu0 0.0
    %4332 = vmatprep.subr.mxu0 0.0
    %4333 = vmatpush1.msra.mxu0 0.0
    %4334 = vmatprep.subr.mxu0 0.0
    %4335 = vmatpush1.msra.mxu0 0.0
    %4336 = vmatprep.subr.mxu0 0.0
    %4337 = vmatpush1.msra.mxu0 0.0
    %4338 = vmatprep.subr.mxu0 0.0
    %4339 = vmatpush1.msra.mxu0 0.0
    %4340 = vmatprep.subr.mxu0 0.0
    %4341 = vmatpush1.msra.mxu0 0.0
    %4342 = vmatprep.subr.mxu0 0.0
    %4343 = vmatpush1.msra.mxu0 0.0
    %4344 = vmatprep.subr.mxu0 0.0
    %4345 = vmatpush1.msra.mxu0 0.0
    %4346 = vmatprep.subr.mxu0 0.0
    %4347 = vmatpush1.msra.mxu0 0.0
    %4348 = vmatprep.subr.mxu0 0.0
    %4349 = vmatpush1.msra.mxu0 0.0
    %4350 = vmatprep.mubr.f32.mxu0 0.0
    %4351 = vmatmul.mubr.f32.gmra.mrb[0].mxu0 %v4143
    %v4352 = vpop.f32.mrb[0].mxu0
    %v4353 = vadd.f32 %v4211, %v4352
    %v4354 = vpop.f32.mrb[0].mxu0
    %v4355 = vadd.f32 %v4213, %v4354
    %4356 = vdwg.mxu0
    %4357 = vmatprep.subr.mxu0 %v489
    %4358 = vmatpush1.msra.mxu0 %v488
    %4359 = vmatprep.subr.mxu0 %v493
    %4360 = vmatpush1.msra.mxu0 %v492
    %4361 = vmatprep.subr.mxu0 %v497
    %4362 = vmatpush1.msra.mxu0 %v496
    %4363 = vmatprep.subr.mxu0 %v501
    %4364 = vmatpush1.msra.mxu0 %v500
    %4365 = vmatprep.subr.mxu0 %v505
    %4366 = vmatpush1.msra.mxu0 %v504
    %4367 = vmatprep.subr.mxu0 %v509
    %4368 = vmatpush1.msra.mxu0 %v508
    %4369 = vmatprep.subr.mxu0 %v513
    %4370 = vmatpush1.msra.mxu0 %v512
    %4371 = vmatprep.subr.mxu0 %v517
    %4372 = vmatpush1.msra.mxu0 %v516
    %4373 = vmatprep.subr.mxu0 %v521
    %4374 = vmatpush1.msra.mxu0 %v520
    %4375 = vmatprep.subr.mxu0 %v525
    %4376 = vmatpush1.msra.mxu0 %v524
    %4377 = vmatprep.subr.mxu0 %v529
    %4378 = vmatpush1.msra.mxu0 %v528
    %4379 = vmatprep.subr.mxu0 %v533
    %4380 = vmatpush1.msra.mxu0 %v532
    %4381 = vmatprep.subr.mxu0 %v537
    %4382 = vmatpush1.msra.mxu0 %v536
    %4383 = vmatprep.subr.mxu0 %v541
    %4384 = vmatpush1.msra.mxu0 %v540
    %4385 = vmatprep.subr.mxu0 %v545
    %4386 = vmatpush1.msra.mxu0 %v544
    %4387 = vmatprep.subr.mxu0 %v549
    %4388 = vmatpush1.msra.mxu0 %v548
    %4389 = vmatprep.subr.mxu0 0.0
    %4390 = vmatpush1.msra.mxu0 0.0
    %4391 = vmatprep.subr.mxu0 0.0
    %4392 = vmatpush1.msra.mxu0 0.0
    %4393 = vmatprep.subr.mxu0 0.0
    %4394 = vmatpush1.msra.mxu0 0.0
    %4395 = vmatprep.subr.mxu0 0.0
    %4396 = vmatpush1.msra.mxu0 0.0
    %4397 = vmatprep.subr.mxu0 0.0
    %4398 = vmatpush1.msra.mxu0 0.0
    %4399 = vmatprep.subr.mxu0 0.0
    %4400 = vmatpush1.msra.mxu0 0.0
    %4401 = vmatprep.subr.mxu0 0.0
    %4402 = vmatpush1.msra.mxu0 0.0
    %4403 = vmatprep.subr.mxu0 0.0
    %4404 = vmatpush1.msra.mxu0 0.0
    %4405 = vmatprep.subr.mxu0 0.0
    %4406 = vmatpush1.msra.mxu0 0.0
    %4407 = vmatprep.subr.mxu0 0.0
    %4408 = vmatpush1.msra.mxu0 0.0
    %4409 = vmatprep.subr.mxu0 0.0
    %4410 = vmatpush1.msra.mxu0 0.0
    %4411 = vmatprep.subr.mxu0 0.0
    %4412 = vmatpush1.msra.mxu0 0.0
    %4413 = vmatprep.subr.mxu0 0.0
    %4414 = vmatpush1.msra.mxu0 0.0
    %4415 = vmatprep.subr.mxu0 0.0
    %4416 = vmatpush1.msra.mxu0 0.0
    %4417 = vmatprep.subr.mxu0 0.0
    %4418 = vmatpush1.msra.mxu0 0.0
    %4419 = vmatprep.subr.mxu0 0.0
    %4420 = vmatpush1.msra.mxu0 0.0
    %4421 = vmatprep.mubr.f32.mxu0 0.0
    %4422 = vmatmul.mubr.f32.gmra.mrb[0].mxu0 %v4143
    %v4423 = vpop.f32.mrb[0].mxu0
    %v4424 = vadd.f32 %v4282, %v4423
    %v4425 = vpop.f32.mrb[0].mxu0
    %v4426 = vadd.f32 %v4284, %v4425
    %4427 = vdwg.mxu0
    %v4428 = vadd.f32 %v4353, %v619
    %v4429 = vadd.f32 %v4355, %v623
    %v4430 = vadd.f32 %v4424, %v627
    %v4431 = vadd.f32 %v4426, %v631
    %v4432 = vmul.f32 %v4428, 0.5
    %v4433 = vtanh.pop %v4432
    %v4434 = vmul.f32 %v4433, 0.5
    %v4435 = vadd.f32 %v4434, 0.5
    %v4436 = vmul.f32 %v4429, 0.5
    %v4437 = vtanh.pop %v4436
    %v4438 = vmul.f32 %v4437, 0.5
    %v4439 = vadd.f32 %v4438, 0.5
    %v4440 = vtanh.pop %v4430
    %v4441 = vmul.f32 %v4431, 0.5
    %v4442 = vtanh.pop %v4441
    %v4443 = vmul.f32 %v4442, 0.5
    %v4444 = vadd.f32 %v4443, 0.5
    %v4445 = vmul.f32 %v4439, %v3970
    %v4446 = vmul.f32 %v4435, %v4440
    %v4447 = vadd.f32 %v4445, %v4446
    %v4448 = vtanh.pop %v4447
    %v4449 = vmul.f32 %v4444, %v4448
    %v4450 = vmax.f32 %v4449, 0.0
    %4451 = vst [vmem:[#allocation3 + $0x38] sm:$0xff] %v4450
    %v4452 = vld [vmem:[#allocation3] sm:$0xff]
    %v4453 = vld [vmem:[#allocation3 + $0x8] sm:$0xff]
    %v4454 = vld [vmem:[#allocation3 + $0x10] sm:$0xff]
    %v4455 = vld [vmem:[#allocation3 + $0x18] sm:$0xff]
    %v4456 = vld [vmem:[#allocation3 + $0x20] sm:$0xff]
    %v4457 = vld [vmem:[#allocation3 + $0x28] sm:$0xff]
    %v4458 = vld [vmem:[#allocation3 + $0x30] sm:$0xff]
    %v4459 = vld [vmem:[#allocation3 + $0x38] sm:$0xff]
    %v4460 = vld [vmem:[#allocation9] sm:$0xff]
    %v4461 = vld [vmem:[#allocation9 + $0x8] sm:$0xff]
    %v4462 = vld [vmem:[#allocation9 + $0x10] sm:$0xff]
    %v4463 = vld [vmem:[#allocation9 + $0x18] sm:$0xff]
    %v4464 = vld [vmem:[#allocation9 + $0x20] sm:$0xff]
    %v4465 = vld [vmem:[#allocation9 + $0x28] sm:$0xff]
    %v4466 = vld [vmem:[#allocation9 + $0x30] sm:$0xff]
    %v4467 = vld [vmem:[#allocation9 + $0x38] sm:$0xff]
    %v4468 = vld [vmem:[#allocation9 + $0x40] sm:$0xff]
    %v4469 = vld [vmem:[#allocation9 + $0x48] sm:$0xff]
    %v4470 = vld [vmem:[#allocation9 + $0x50] sm:$0xff]
    %v4471 = vld [vmem:[#allocation9 + $0x58] sm:$0xff]
    %v4472 = vld [vmem:[#allocation9 + $0x60] sm:$0xff]
    %v4473 = vld [vmem:[#allocation9 + $0x68] sm:$0xff]
    %v4474 = vld [vmem:[#allocation9 + $0x70] sm:$0xff]
    %v4475 = vld [vmem:[#allocation9 + $0x78] sm:$0xff]
    %v4476 = vld [vmem:[#allocation9 + $0x80] sm:$0xff]
    %v4477 = vld [vmem:[#allocation9 + $0x88] sm:$0xff]
    %v4478 = vld [vmem:[#allocation9 + $0x90] sm:$0xff]
    %v4479 = vld [vmem:[#allocation9 + $0x98] sm:$0xff]
    %v4480 = vld [vmem:[#allocation9 + $0xa0] sm:$0xff]
    %v4481 = vld [vmem:[#allocation9 + $0xa8] sm:$0xff]
    %v4482 = vld [vmem:[#allocation9 + $0xb0] sm:$0xff]
    %v4483 = vld [vmem:[#allocation9 + $0xb8] sm:$0xff]
    %v4484 = vld [vmem:[#allocation9 + $0xc0] sm:$0xff]
    %v4485 = vld [vmem:[#allocation9 + $0xc8] sm:$0xff]
    %v4486 = vld [vmem:[#allocation9 + $0xd0] sm:$0xff]
    %v4487 = vld [vmem:[#allocation9 + $0xd8] sm:$0xff]
    %v4488 = vld [vmem:[#allocation9 + $0xe0] sm:$0xff]
    %v4489 = vld [vmem:[#allocation9 + $0xe8] sm:$0xff]
    %v4490 = vld [vmem:[#allocation9 + $0xf0] sm:$0xff]
    %v4491 = vld [vmem:[#allocation9 + $0xf8] sm:$0xff]
    %v4492 = vld [vmem:[#allocation9 + $0x100] sm:$0xff]
    %v4493 = vld [vmem:[#allocation9 + $0x108] sm:$0xff]
    %v4494 = vld [vmem:[#allocation9 + $0x110] sm:$0xff]
    %v4495 = vld [vmem:[#allocation9 + $0x118] sm:$0xff]
    %v4496 = vld [vmem:[#allocation9 + $0x120] sm:$0xff]
    %v4497 = vld [vmem:[#allocation9 + $0x128] sm:$0xff]
    %v4498 = vld [vmem:[#allocation9 + $0x130] sm:$0xff]
    %v4499 = vld [vmem:[#allocation9 + $0x138] sm:$0xff]
    %v4500 = vld [vmem:[#allocation9 + $0x140] sm:$0xff]
    %v4501 = vld [vmem:[#allocation9 + $0x148] sm:$0xff]
    %v4502 = vld [vmem:[#allocation9 + $0x150] sm:$0xff]
    %v4503 = vld [vmem:[#allocation9 + $0x158] sm:$0xff]
    %v4504 = vld [vmem:[#allocation9 + $0x160] sm:$0xff]
    %v4505 = vld [vmem:[#allocation9 + $0x168] sm:$0xff]
    %v4506 = vld [vmem:[#allocation9 + $0x170] sm:$0xff]
    %v4507 = vld [vmem:[#allocation9 + $0x178] sm:$0xff]
    %v4508 = vld [vmem:[#allocation9 + $0x180] sm:$0xff]
    %v4509 = vld [vmem:[#allocation9 + $0x188] sm:$0xff]
    %v4510 = vld [vmem:[#allocation9 + $0x190] sm:$0xff]
    %v4511 = vld [vmem:[#allocation9 + $0x198] sm:$0xff]
    %v4512 = vld [vmem:[#allocation9 + $0x1a0] sm:$0xff]
    %v4513 = vld [vmem:[#allocation9 + $0x1a8] sm:$0xff]
    %v4514 = vld [vmem:[#allocation9 + $0x1b0] sm:$0xff]
    %v4515 = vld [vmem:[#allocation9 + $0x1b8] sm:$0xff]
    %v4516 = vld [vmem:[#allocation9 + $0x1c0] sm:$0xff]
    %v4517 = vld [vmem:[#allocation9 + $0x1c8] sm:$0xff]
    %v4518 = vld [vmem:[#allocation9 + $0x1d0] sm:$0xff]
    %v4519 = vld [vmem:[#allocation9 + $0x1d8] sm:$0xff]
    %v4520 = vld [vmem:[#allocation9 + $0x1e0] sm:$0xff]
    %v4521 = vld [vmem:[#allocation9 + $0x1e8] sm:$0xff]
    %v4522 = vld [vmem:[#allocation9 + $0x1f0] sm:$0xff]
    %v4523 = vld [vmem:[#allocation9 + $0x1f8] sm:$0xff]
    %v4524 = vld [vmem:[#allocation9 + $0x200] sm:$0xff]
    %v4525 = vld [vmem:[#allocation9 + $0x208] sm:$0xff]
    %v4526 = vld [vmem:[#allocation9 + $0x210] sm:$0xff]
    %v4527 = vld [vmem:[#allocation9 + $0x218] sm:$0xff]
    %v4528 = vld [vmem:[#allocation9 + $0x220] sm:$0xff]
    %v4529 = vld [vmem:[#allocation9 + $0x228] sm:$0xff]
    %v4530 = vld [vmem:[#allocation9 + $0x230] sm:$0xff]
    %v4531 = vld [vmem:[#allocation9 + $0x238] sm:$0xff]
    %v4532 = vld [vmem:[#allocation9 + $0x240] sm:$0xff]
    %v4533 = vld [vmem:[#allocation9 + $0x248] sm:$0xff]
    %v4534 = vld [vmem:[#allocation9 + $0x250] sm:$0xff]
    %v4535 = vld [vmem:[#allocation9 + $0x258] sm:$0xff]
    %v4536 = vld [vmem:[#allocation9 + $0x260] sm:$0xff]
    %v4537 = vld [vmem:[#allocation9 + $0x268] sm:$0xff]
    %v4538 = vld [vmem:[#allocation9 + $0x270] sm:$0xff]
    %v4539 = vld [vmem:[#allocation9 + $0x278] sm:$0xff]
    %v4540 = vld [vmem:[#allocation9 + $0x280] sm:$0xff]
    %v4541 = vld [vmem:[#allocation9 + $0x288] sm:$0xff]
    %v4542 = vld [vmem:[#allocation9 + $0x290] sm:$0xff]
    %v4543 = vld [vmem:[#allocation9 + $0x298] sm:$0xff]
    %v4544 = vld [vmem:[#allocation9 + $0x2a0] sm:$0xff]
    %v4545 = vld [vmem:[#allocation9 + $0x2a8] sm:$0xff]
    %v4546 = vld [vmem:[#allocation9 + $0x2b0] sm:$0xff]
    %v4547 = vld [vmem:[#allocation9 + $0x2b8] sm:$0xff]
    %v4548 = vld [vmem:[#allocation9 + $0x2c0] sm:$0xff]
    %v4549 = vld [vmem:[#allocation9 + $0x2c8] sm:$0xff]
    %v4550 = vld [vmem:[#allocation9 + $0x2d0] sm:$0xff]
    %v4551 = vld [vmem:[#allocation9 + $0x2d8] sm:$0xff]
    %v4552 = vld [vmem:[#allocation9 + $0x2e0] sm:$0xff]
    %v4553 = vld [vmem:[#allocation9 + $0x2e8] sm:$0xff]
    %v4554 = vld [vmem:[#allocation9 + $0x2f0] sm:$0xff]
    %v4555 = vld [vmem:[#allocation9 + $0x2f8] sm:$0xff]
    %v4556 = vld [vmem:[#allocation9 + $0x300] sm:$0xff]
    %v4557 = vld [vmem:[#allocation9 + $0x308] sm:$0xff]
    %v4558 = vld [vmem:[#allocation9 + $0x310] sm:$0xff]
    %v4559 = vld [vmem:[#allocation9 + $0x318] sm:$0xff]
    %v4560 = vld [vmem:[#allocation9 + $0x320] sm:$0xff]
    %v4561 = vld [vmem:[#allocation9 + $0x328] sm:$0xff]
    %v4562 = vld [vmem:[#allocation9 + $0x330] sm:$0xff]
    %v4563 = vld [vmem:[#allocation9 + $0x338] sm:$0xff]
    %v4564 = vld [vmem:[#allocation9 + $0x340] sm:$0xff]
    %v4565 = vld [vmem:[#allocation9 + $0x348] sm:$0xff]
    %v4566 = vld [vmem:[#allocation9 + $0x350] sm:$0xff]
    %v4567 = vld [vmem:[#allocation9 + $0x358] sm:$0xff]
    %v4568 = vld [vmem:[#allocation9 + $0x360] sm:$0xff]
    %v4569 = vld [vmem:[#allocation9 + $0x368] sm:$0xff]
    %v4570 = vld [vmem:[#allocation9 + $0x370] sm:$0xff]
    %v4571 = vld [vmem:[#allocation9 + $0x378] sm:$0xff]
    %v4572 = vld [vmem:[#allocation9 + $0x380] sm:$0xff]
    %v4573 = vld [vmem:[#allocation9 + $0x388] sm:$0xff]
    %v4574 = vld [vmem:[#allocation9 + $0x390] sm:$0xff]
    %v4575 = vld [vmem:[#allocation9 + $0x398] sm:$0xff]
    %v4576 = vld [vmem:[#allocation9 + $0x3a0] sm:$0xff]
    %v4577 = vld [vmem:[#allocation9 + $0x3a8] sm:$0xff]
    %v4578 = vld [vmem:[#allocation9 + $0x3b0] sm:$0xff]
    %v4579 = vld [vmem:[#allocation9 + $0x3b8] sm:$0xff]
    %v4580 = vld [vmem:[#allocation9 + $0x3c0] sm:$0xff]
    %v4581 = vld [vmem:[#allocation9 + $0x3c8] sm:$0xff]
    %v4582 = vld [vmem:[#allocation9 + $0x3d0] sm:$0xff]
    %v4583 = vld [vmem:[#allocation9 + $0x3d8] sm:$0xff]
    %v4584 = vld [vmem:[#allocation9 + $0x3e0] sm:$0xff]
    %v4585 = vld [vmem:[#allocation9 + $0x3e8] sm:$0xff]
    %v4586 = vld [vmem:[#allocation9 + $0x3f0] sm:$0xff]
    %v4587 = vld [vmem:[#allocation9 + $0x3f8] sm:$0xff]
    %v4588 = vld [vmem:[%s8] sm:$0x1]
    %v4590 = vlaneseq
    %v4591 = vshrl.u32 %v4590, 7
    %v4592 = vsub.s32 0, %v4591
    %v4593 = vrot.slane %v4588, %v4592
    %4595 = vmatprep.subr.mxu0 0.0
    %4596 = vmatpush1.msra.mxu0 %v4460
    %4597 = vmatprep.subr.mxu0 0.0
    %4598 = vmatpush1.msra.mxu0 %v4461
    %4599 = vmatprep.subr.mxu0 0.0
    %4600 = vmatpush1.msra.mxu0 %v4462
    %4601 = vmatprep.subr.mxu0 0.0
    %4602 = vmatpush1.msra.mxu0 %v4463
    %4603 = vmatprep.subr.mxu0 0.0
    %4604 = vmatpush1.msra.mxu0 %v4464
    %4605 = vmatprep.subr.mxu0 0.0
    %4606 = vmatpush1.msra.mxu0 %v4465
    %4607 = vmatprep.subr.mxu0 0.0
    %4608 = vmatpush1.msra.mxu0 %v4466
    %4609 = vmatprep.subr.mxu0 0.0
    %4610 = vmatpush1.msra.mxu0 %v4467
    %4611 = vmatprep.subr.mxu0 0.0
    %4612 = vmatpush1.msra.mxu0 %v4468
    %4613 = vmatprep.subr.mxu0 0.0
    %4614 = vmatpush1.msra.mxu0 %v4469
    %4615 = vmatprep.subr.mxu0 0.0
    %4616 = vmatpush1.msra.mxu0 %v4470
    %4617 = vmatprep.subr.mxu0 0.0
    %4618 = vmatpush1.msra.mxu0 %v4471
    %4619 = vmatprep.subr.mxu0 0.0
    %4620 = vmatpush1.msra.mxu0 %v4472
    %4621 = vmatprep.subr.mxu0 0.0
    %4622 = vmatpush1.msra.mxu0 %v4473
    %4623 = vmatprep.subr.mxu0 0.0
    %4624 = vmatpush1.msra.mxu0 %v4474
    %4625 = vmatprep.subr.mxu0 0.0
    %4626 = vmatpush1.msra.mxu0 %v4475
    %4627 = vmatprep.subr.mxu0 0.0
    %4628 = vmatpush1.msra.mxu0 %v4476
    %4629 = vmatprep.subr.mxu0 0.0
    %4630 = vmatpush1.msra.mxu0 %v4477
    %4631 = vmatprep.subr.mxu0 0.0
    %4632 = vmatpush1.msra.mxu0 %v4478
    %4633 = vmatprep.subr.mxu0 0.0
    %4634 = vmatpush1.msra.mxu0 %v4479
    %4635 = vmatprep.subr.mxu0 0.0
    %4636 = vmatpush1.msra.mxu0 %v4480
    %4637 = vmatprep.subr.mxu0 0.0
    %4638 = vmatpush1.msra.mxu0 %v4481
    %4639 = vmatprep.subr.mxu0 0.0
    %4640 = vmatpush1.msra.mxu0 %v4482
    %4641 = vmatprep.subr.mxu0 0.0
    %4642 = vmatpush1.msra.mxu0 %v4483
    %4643 = vmatprep.subr.mxu0 0.0
    %4644 = vmatpush1.msra.mxu0 %v4484
    %4645 = vmatprep.subr.mxu0 0.0
    %4646 = vmatpush1.msra.mxu0 %v4485
    %4647 = vmatprep.subr.mxu0 0.0
    %4648 = vmatpush1.msra.mxu0 %v4486
    %4649 = vmatprep.subr.mxu0 0.0
    %4650 = vmatpush1.msra.mxu0 %v4487
    %4651 = vmatprep.subr.mxu0 0.0
    %4652 = vmatpush1.msra.mxu0 %v4488
    %4653 = vmatprep.subr.mxu0 0.0
    %4654 = vmatpush1.msra.mxu0 %v4489
    %4655 = vmatprep.subr.mxu0 0.0
    %4656 = vmatpush1.msra.mxu0 %v4490
    %4657 = vmatprep.subr.mxu0 0.0
    %4658 = vmatpush1.msra.mxu0 %v4491
    %4659 = vmatprep.mubr.f32.mxu0 %v4453
    %4660 = vmatmul.mubr.f32.gmra.mrb[0].mxu0 %v4452
    %v4661 = vpop.f32.mrb[0].mxu0
    %v4662 = vadd.f32 %v4593, %v4661
    %v4663 = vpop.f32.mrb[0].mxu0
    %4664 = vdwg.mxu0
    %4665 = vmatprep.subr.mxu0 0.0
    %4666 = vmatpush1.msra.mxu0 %v4492
    %4667 = vmatprep.subr.mxu0 0.0
    %4668 = vmatpush1.msra.mxu0 %v4493
    %4669 = vmatprep.subr.mxu0 0.0
    %4670 = vmatpush1.msra.mxu0 %v4494
    %4671 = vmatprep.subr.mxu0 0.0
    %4672 = vmatpush1.msra.mxu0 %v4495
    %4673 = vmatprep.subr.mxu0 0.0
    %4674 = vmatpush1.msra.mxu0 %v4496
    %4675 = vmatprep.subr.mxu0 0.0
    %4676 = vmatpush1.msra.mxu0 %v4497
    %4677 = vmatprep.subr.mxu0 0.0
    %4678 = vmatpush1.msra.mxu0 %v4498
    %4679 = vmatprep.subr.mxu0 0.0
    %4680 = vmatpush1.msra.mxu0 %v4499
    %4681 = vmatprep.subr.mxu0 0.0
    %4682 = vmatpush1.msra.mxu0 %v4500
    %4683 = vmatprep.subr.mxu0 0.0
    %4684 = vmatpush1.msra.mxu0 %v4501
    %4685 = vmatprep.subr.mxu0 0.0
    %4686 = vmatpush1.msra.mxu0 %v4502
    %4687 = vmatprep.subr.mxu0 0.0
    %4688 = vmatpush1.msra.mxu0 %v4503
    %4689 = vmatprep.subr.mxu0 0.0
    %4690 = vmatpush1.msra.mxu0 %v4504
    %4691 = vmatprep.subr.mxu0 0.0
    %4692 = vmatpush1.msra.mxu0 %v4505
    %4693 = vmatprep.subr.mxu0 0.0
    %4694 = vmatpush1.msra.mxu0 %v4506
    %4695 = vmatprep.subr.mxu0 0.0
    %4696 = vmatpush1.msra.mxu0 %v4507
    %4697 = vmatprep.subr.mxu0 0.0
    %4698 = vmatpush1.msra.mxu0 %v4508
    %4699 = vmatprep.subr.mxu0 0.0
    %4700 = vmatpush1.msra.mxu0 %v4509
    %4701 = vmatprep.subr.mxu0 0.0
    %4702 = vmatpush1.msra.mxu0 %v4510
    %4703 = vmatprep.subr.mxu0 0.0
    %4704 = vmatpush1.msra.mxu0 %v4511
    %4705 = vmatprep.subr.mxu0 0.0
    %4706 = vmatpush1.msra.mxu0 %v4512
    %4707 = vmatprep.subr.mxu0 0.0
    %4708 = vmatpush1.msra.mxu0 %v4513
    %4709 = vmatprep.subr.mxu0 0.0
    %4710 = vmatpush1.msra.mxu0 %v4514
    %4711 = vmatprep.subr.mxu0 0.0
    %4712 = vmatpush1.msra.mxu0 %v4515
    %4713 = vmatprep.subr.mxu0 0.0
    %4714 = vmatpush1.msra.mxu0 %v4516
    %4715 = vmatprep.subr.mxu0 0.0
    %4716 = vmatpush1.msra.mxu0 %v4517
    %4717 = vmatprep.subr.mxu0 0.0
    %4718 = vmatpush1.msra.mxu0 %v4518
    %4719 = vmatprep.subr.mxu0 0.0
    %4720 = vmatpush1.msra.mxu0 %v4519
    %4721 = vmatprep.subr.mxu0 0.0
    %4722 = vmatpush1.msra.mxu0 %v4520
    %4723 = vmatprep.subr.mxu0 0.0
    %4724 = vmatpush1.msra.mxu0 %v4521
    %4725 = vmatprep.subr.mxu0 0.0
    %4726 = vmatpush1.msra.mxu0 %v4522
    %4727 = vmatprep.subr.mxu0 0.0
    %4728 = vmatpush1.msra.mxu0 %v4523
    %4729 = vmatprep.mubr.f32.mxu0 %v4455
    %4730 = vmatmul.mubr.f32.gmra.mrb[0].mxu0 %v4454
    %v4731 = vpop.f32.mrb[0].mxu0
    %v4732 = vadd.f32 %v4662, %v4731
    %v4733 = vpop.f32.mrb[0].mxu0
    %4734 = vdwg.mxu0
    %4735 = vmatprep.subr.mxu0 0.0
    %4736 = vmatpush1.msra.mxu0 %v4524
    %4737 = vmatprep.subr.mxu0 0.0
    %4738 = vmatpush1.msra.mxu0 %v4525
    %4739 = vmatprep.subr.mxu0 0.0
    %4740 = vmatpush1.msra.mxu0 %v4526
    %4741 = vmatprep.subr.mxu0 0.0
    %4742 = vmatpush1.msra.mxu0 %v4527
    %4743 = vmatprep.subr.mxu0 0.0
    %4744 = vmatpush1.msra.mxu0 %v4528
    %4745 = vmatprep.subr.mxu0 0.0
    %4746 = vmatpush1.msra.mxu0 %v4529
    %4747 = vmatprep.subr.mxu0 0.0
    %4748 = vmatpush1.msra.mxu0 %v4530
    %4749 = vmatprep.subr.mxu0 0.0
    %4750 = vmatpush1.msra.mxu0 %v4531
    %4751 = vmatprep.subr.mxu0 0.0
    %4752 = vmatpush1.msra.mxu0 %v4532
    %4753 = vmatprep.subr.mxu0 0.0
    %4754 = vmatpush1.msra.mxu0 %v4533
    %4755 = vmatprep.subr.mxu0 0.0
    %4756 = vmatpush1.msra.mxu0 %v4534
    %4757 = vmatprep.subr.mxu0 0.0
    %4758 = vmatpush1.msra.mxu0 %v4535
    %4759 = vmatprep.subr.mxu0 0.0
    %4760 = vmatpush1.msra.mxu0 %v4536
    %4761 = vmatprep.subr.mxu0 0.0
    %4762 = vmatpush1.msra.mxu0 %v4537
    %4763 = vmatprep.subr.mxu0 0.0
    %4764 = vmatpush1.msra.mxu0 %v4538
    %4765 = vmatprep.subr.mxu0 0.0
    %4766 = vmatpush1.msra.mxu0 %v4539
    %4767 = vmatprep.subr.mxu0 0.0
    %4768 = vmatpush1.msra.mxu0 %v4540
    %4769 = vmatprep.subr.mxu0 0.0
    %4770 = vmatpush1.msra.mxu0 %v4541
    %4771 = vmatprep.subr.mxu0 0.0
    %4772 = vmatpush1.msra.mxu0 %v4542
    %4773 = vmatprep.subr.mxu0 0.0
    %4774 = vmatpush1.msra.mxu0 %v4543
    %4775 = vmatprep.subr.mxu0 0.0
    %4776 = vmatpush1.msra.mxu0 %v4544
    %4777 = vmatprep.subr.mxu0 0.0
    %4778 = vmatpush1.msra.mxu0 %v4545
    %4779 = vmatprep.subr.mxu0 0.0
    %4780 = vmatpush1.msra.mxu0 %v4546
    %4781 = vmatprep.subr.mxu0 0.0
    %4782 = vmatpush1.msra.mxu0 %v4547
    %4783 = vmatprep.subr.mxu0 0.0
    %4784 = vmatpush1.msra.mxu0 %v4548
    %4785 = vmatprep.subr.mxu0 0.0
    %4786 = vmatpush1.msra.mxu0 %v4549
    %4787 = vmatprep.subr.mxu0 0.0
    %4788 = vmatpush1.msra.mxu0 %v4550
    %4789 = vmatprep.subr.mxu0 0.0
    %4790 = vmatpush1.msra.mxu0 %v4551
    %4791 = vmatprep.subr.mxu0 0.0
    %4792 = vmatpush1.msra.mxu0 %v4552
    %4793 = vmatprep.subr.mxu0 0.0
    %4794 = vmatpush1.msra.mxu0 %v4553
    %4795 = vmatprep.subr.mxu0 0.0
    %4796 = vmatpush1.msra.mxu0 %v4554
    %4797 = vmatprep.subr.mxu0 0.0
    %4798 = vmatpush1.msra.mxu0 %v4555
    %4799 = vmatprep.mubr.f32.mxu0 %v4457
    %4800 = vmatmul.mubr.f32.gmra.mrb[0].mxu0 %v4456
    %v4801 = vpop.f32.mrb[0].mxu0
    %v4802 = vadd.f32 %v4732, %v4801
    %v4803 = vpop.f32.mrb[0].mxu0
    %4804 = vdwg.mxu0
    %4805 = vmatprep.subr.mxu0 0.0
    %4806 = vmatpush1.msra.mxu0 %v4556
    %4807 = vmatprep.subr.mxu0 0.0
    %4808 = vmatpush1.msra.mxu0 %v4557
    %4809 = vmatprep.subr.mxu0 0.0
    %4810 = vmatpush1.msra.mxu0 %v4558
    %4811 = vmatprep.subr.mxu0 0.0
    %4812 = vmatpush1.msra.mxu0 %v4559
    %4813 = vmatprep.subr.mxu0 0.0
    %4814 = vmatpush1.msra.mxu0 %v4560
    %4815 = vmatprep.subr.mxu0 0.0
    %4816 = vmatpush1.msra.mxu0 %v4561
    %4817 = vmatprep.subr.mxu0 0.0
    %4818 = vmatpush1.msra.mxu0 %v4562
    %4819 = vmatprep.subr.mxu0 0.0
    %4820 = vmatpush1.msra.mxu0 %v4563
    %4821 = vmatprep.subr.mxu0 0.0
    %4822 = vmatpush1.msra.mxu0 %v4564
    %4823 = vmatprep.subr.mxu0 0.0
    %4824 = vmatpush1.msra.mxu0 %v4565
    %4825 = vmatprep.subr.mxu0 0.0
    %4826 = vmatpush1.msra.mxu0 %v4566
    %4827 = vmatprep.subr.mxu0 0.0
    %4828 = vmatpush1.msra.mxu0 %v4567
    %4829 = vmatprep.subr.mxu0 0.0
    %4830 = vmatpush1.msra.mxu0 %v4568
    %4831 = vmatprep.subr.mxu0 0.0
    %4832 = vmatpush1.msra.mxu0 %v4569
    %4833 = vmatprep.subr.mxu0 0.0
    %4834 = vmatpush1.msra.mxu0 %v4570
    %4835 = vmatprep.subr.mxu0 0.0
    %4836 = vmatpush1.msra.mxu0 %v4571
    %4837 = vmatprep.subr.mxu0 0.0
    %4838 = vmatpush1.msra.mxu0 %v4572
    %4839 = vmatprep.subr.mxu0 0.0
    %4840 = vmatpush1.msra.mxu0 %v4573
    %4841 = vmatprep.subr.mxu0 0.0
    %4842 = vmatpush1.msra.mxu0 %v4574
    %4843 = vmatprep.subr.mxu0 0.0
    %4844 = vmatpush1.msra.mxu0 %v4575
    %4845 = vmatprep.subr.mxu0 0.0
    %4846 = vmatpush1.msra.mxu0 %v4576
    %4847 = vmatprep.subr.mxu0 0.0
    %4848 = vmatpush1.msra.mxu0 %v4577
    %4849 = vmatprep.subr.mxu0 0.0
    %4850 = vmatpush1.msra.mxu0 %v4578
    %4851 = vmatprep.subr.mxu0 0.0
    %4852 = vmatpush1.msra.mxu0 %v4579
    %4853 = vmatprep.subr.mxu0 0.0
    %4854 = vmatpush1.msra.mxu0 %v4580
    %4855 = vmatprep.subr.mxu0 0.0
    %4856 = vmatpush1.msra.mxu0 %v4581
    %4857 = vmatprep.subr.mxu0 0.0
    %4858 = vmatpush1.msra.mxu0 %v4582
    %4859 = vmatprep.subr.mxu0 0.0
    %4860 = vmatpush1.msra.mxu0 %v4583
    %4861 = vmatprep.subr.mxu0 0.0
    %4862 = vmatpush1.msra.mxu0 %v4584
    %4863 = vmatprep.subr.mxu0 0.0
    %4864 = vmatpush1.msra.mxu0 %v4585
    %4865 = vmatprep.subr.mxu0 0.0
    %4866 = vmatpush1.msra.mxu0 %v4586
    %4867 = vmatprep.subr.mxu0 0.0
    %4868 = vmatpush1.msra.mxu0 %v4587
    %4869 = vmatprep.mubr.f32.mxu0 %v4459
    %4870 = vmatmul.mubr.f32.gmra.mrb[0].mxu0 %v4458
    %v4871 = vpop.f32.mrb[0].mxu0
    %v4872 = vadd.f32 %v4802, %v4871
    %v4873 = vpop.f32.mrb[0].mxu0
    %4874 = vdwg.mxu0
    %v4875 = vmax.f32 %v4872, 0.0
    %v4876 = vld [vmem:[%s9] sm:$0xff]
    %v4877 = vld [vmem:[%s9 + $0x8] sm:$0xff]
    %v4878 = vld [vmem:[%s9 + $0x10] sm:$0xff]
    %v4879 = vld [vmem:[%s9 + $0x18] sm:$0xff]
    %v4880 = vld [vmem:[%s9 + $0x20] sm:$0xff]
    %v4881 = vld [vmem:[%s9 + $0x28] sm:$0xff]
    %v4882 = vld [vmem:[%s9 + $0x30] sm:$0xff]
    %v4883 = vld [vmem:[%s9 + $0x38] sm:$0xff]
    %v4884 = vld [vmem:[%s9 + $0x40] sm:$0xff]
    %v4885 = vld [vmem:[%s9 + $0x48] sm:$0xff]
    %v4886 = vld [vmem:[%s9 + $0x50] sm:$0xff]
    %v4887 = vld [vmem:[%s9 + $0x58] sm:$0xff]
    %v4888 = vld [vmem:[%s9 + $0x60] sm:$0xff]
    %v4889 = vld [vmem:[%s9 + $0x68] sm:$0xff]
    %v4890 = vld [vmem:[%s9 + $0x70] sm:$0xff]
    %v4891 = vld [vmem:[%s9 + $0x78] sm:$0xff]
    %v4892 = vld [vmem:[%s10] sm:$0x1]
    %v4894 = vlaneseq
    %v4895 = vshrl.u32 %v4894, 7
    %v4896 = vsub.s32 0, %v4895
    %v4897 = vrot.slane %v4892, %v4896
    %4899 = vmatprep.subr.mxu0 0.0
    %4900 = vmatpush1.msra.mxu0 %v4876
    %4901 = vmatprep.subr.mxu0 0.0
    %4902 = vmatpush1.msra.mxu0 %v4877
    %4903 = vmatprep.subr.mxu0 0.0
    %4904 = vmatpush1.msra.mxu0 %v4878
    %4905 = vmatprep.subr.mxu0 0.0
    %4906 = vmatpush1.msra.mxu0 %v4879
    %4907 = vmatprep.subr.mxu0 0.0
    %4908 = vmatpush1.msra.mxu0 %v4880
    %4909 = vmatprep.subr.mxu0 0.0
    %4910 = vmatpush1.msra.mxu0 %v4881
    %4911 = vmatprep.subr.mxu0 0.0
    %4912 = vmatpush1.msra.mxu0 %v4882
    %4913 = vmatprep.subr.mxu0 0.0
    %4914 = vmatpush1.msra.mxu0 %v4883
    %4915 = vmatprep.subr.mxu0 0.0
    %4916 = vmatpush1.msra.mxu0 %v4884
    %4917 = vmatprep.subr.mxu0 0.0
    %4918 = vmatpush1.msra.mxu0 %v4885
    %4919 = vmatprep.subr.mxu0 0.0
    %4920 = vmatpush1.msra.mxu0 %v4886
    %4921 = vmatprep.subr.mxu0 0.0
    %4922 = vmatpush1.msra.mxu0 %v4887
    %4923 = vmatprep.subr.mxu0 0.0
    %4924 = vmatpush1.msra.mxu0 %v4888
    %4925 = vmatprep.subr.mxu0 0.0
    %4926 = vmatpush1.msra.mxu0 %v4889
    %4927 = vmatprep.subr.mxu0 0.0
    %4928 = vmatpush1.msra.mxu0 %v4890
    %4929 = vmatprep.subr.mxu0 0.0
    %4930 = vmatpush1.msra.mxu0 %v4891
    %4931 = vmatprep.subr.mxu0 0.0
    %4932 = vmatpush1.msra.mxu0 0.0
    %4933 = vmatprep.subr.mxu0 0.0
    %4934 = vmatpush1.msra.mxu0 0.0
    %4935 = vmatprep.subr.mxu0 0.0
    %4936 = vmatpush1.msra.mxu0 0.0
    %4937 = vmatprep.subr.mxu0 0.0
    %4938 = vmatpush1.msra.mxu0 0.0
    %4939 = vmatprep.subr.mxu0 0.0
    %4940 = vmatpush1.msra.mxu0 0.0
    %4941 = vmatprep.subr.mxu0 0.0
    %4942 = vmatpush1.msra.mxu0 0.0
    %4943 = vmatprep.subr.mxu0 0.0
    %4944 = vmatpush1.msra.mxu0 0.0
    %4945 = vmatprep.subr.mxu0 0.0
    %4946 = vmatpush1.msra.mxu0 0.0
    %4947 = vmatprep.subr.mxu0 0.0
    %4948 = vmatpush1.msra.mxu0 0.0
    %4949 = vmatprep.subr.mxu0 0.0
    %4950 = vmatpush1.msra.mxu0 0.0
    %4951 = vmatprep.subr.mxu0 0.0
    %4952 = vmatpush1.msra.mxu0 0.0
    %4953 = vmatprep.subr.mxu0 0.0
    %4954 = vmatpush1.msra.mxu0 0.0
    %4955 = vmatprep.subr.mxu0 0.0
    %4956 = vmatpush1.msra.mxu0 0.0
    %4957 = vmatprep.subr.mxu0 0.0
    %4958 = vmatpush1.msra.mxu0 0.0
    %4959 = vmatprep.subr.mxu0 0.0
    %4960 = vmatpush1.msra.mxu0 0.0
    %4961 = vmatprep.subr.mxu0 0.0
    %4962 = vmatpush1.msra.mxu0 0.0
    %4963 = vmatprep.mubr.f32.mxu0 0.0
    %4964 = vmatmul.mubr.f32.gmra.mrb[0].mxu0 %v4875
    %v4965 = vpop.f32.mrb[0].mxu0
    %v4966 = vadd.f32 %v4897, %v4965
    %v4967 = vpop.f32.mrb[0].mxu0
    %4968 = vdwg.mxu0
    %4969 = vst [vmem:[%s11] sm:$0xff] %v4966
    // Predicated region
    $region62: #{rnn_forward.1} parent=1 // pred_check
      _
    $region63: #{rnn_forward.1} parent=1 // pred_check_branch
      %4971 = sbr.rel (0) target = $region65
    $region64: #{rnn_forward.1} parent=1 // pred_region
      _
    $region65: #{rnn_forward.1} parent=1 // pred_fallthru
      _
    // Predicated region
    $region66: #{rnn_forward.1} parent=1 // pred_check
      _
    $region67: #{rnn_forward.1} parent=1 // pred_check_branch
      %4973 = sbr.rel (0) target = $region69
    $region68: #{rnn_forward.1} parent=1 // pred_region
      _
    $region69: #{rnn_forward.1} parent=1 // pred_fallthru
      _
    %4974 = vsyncpa [#allocation5], 1
    %4975 = vsyncpa [#allocation7], 1
    %4976 = vsyncpa [#allocation10], 1

</llo_original>
